<compile_context>
chip_gen: v7x
topology: tpu7x:2x2x1
jax: 0.10.0
libtpu: 0.0.40
codegen_flags: <defaults>
</compile_context>

<pallas_src>
import functools
import math

import jax
import jax.numpy as jnp
from jax import lax
from jax.experimental import pallas as pl
from jax.experimental.pallas import tpu as pltpu

F32 = jnp.float32
BF16 = jnp.bfloat16


# ----------------------------------------------------------------------------
# numerics helpers (safe to lower inside Mosaic)
# ----------------------------------------------------------------------------
def _sigmoid(v):
    return 1.0 / (1.0 + jnp.exp(-v))


def _softplus(v):
    return jnp.maximum(v, 0.0) + jnp.log(1.0 + jnp.exp(-jnp.abs(v)))


def _as_bf16(w):
    return w if w.dtype == BF16 else w.astype(BF16)


# ----------------------------------------------------------------------------
# tiled linear:  out = x @ w + b, bf16 MXU operands, f32 accumulation.
# Accumulation goes straight into the resident f32 output block (no scratch).
# K is never padded: tk is a 128-multiple divisor of K, or K itself.
# ----------------------------------------------------------------------------
def _pick_tk(K, max_tk):
    if K <= max_tk:
        return K
    for cand in range(max_tk, 127, -128):
        if K % cand == 0:
            return cand
    return K  # fallback: single K block


def _linear_onepass_kernel(x_ref, w_ref, b_ref, o_ref):
    o_ref[...] = (jnp.dot(x_ref[...], w_ref[...],
                          preferred_element_type=jnp.float32) + b_ref[...])


def _linear_acc_kernel(x_ref, w_ref, b_ref, o_ref):
    @pl.when(pl.program_id(1) == 0)
    def _():
        o_ref[...] = jnp.zeros_like(o_ref)

    o_ref[...] += jnp.dot(x_ref[...], w_ref[...],
                          preferred_element_type=jnp.float32)

    @pl.when(pl.program_id(1) == pl.num_programs(1) - 1)
    def _():
        o_ref[...] = o_ref[...] + b_ref[...]


def linear(x, w, b=None, max_tm=256, max_tk=512):
    lead = x.shape[:-1]
    K = x.shape[-1]
    N = w.shape[-1]
    x2 = x.reshape(-1, K).astype(BF16)
    M = x2.shape[0]
    wb = _as_bf16(w)
    bias = jnp.zeros((1, N), F32) if b is None else b.reshape(1, N).astype(F32)

    tm = M if M <= max_tm else max_tm
    tk = _pick_tk(K, max_tk)
    n_m = pl.cdiv(M, tm)
    n_k = K // tk

    if n_k == 1:
        out = pl.pallas_call(
            _linear_onepass_kernel,
            out_shape=jax.ShapeDtypeStruct((M, N), F32),
            grid=(n_m,),
            in_specs=[
                pl.BlockSpec((tm, K), lambda i: (i, 0)),
                pl.BlockSpec((K, N), lambda i: (0, 0)),
                pl.BlockSpec((1, N), lambda i: (0, 0)),
            ],
            out_specs=pl.BlockSpec((tm, N), lambda i: (i, 0)),
            compiler_params=pltpu.CompilerParams(
                dimension_semantics=("parallel",)),
        )(x2, wb, bias)
    else:
        out = pl.pallas_call(
            _linear_acc_kernel,
            out_shape=jax.ShapeDtypeStruct((M, N), F32),
            grid=(n_m, n_k),
            in_specs=[
                pl.BlockSpec((tm, tk), lambda i, k: (i, k)),
                pl.BlockSpec((tk, N), lambda i, k: (k, 0)),
                pl.BlockSpec((1, N), lambda i, k: (0, 0)),
            ],
            out_specs=pl.BlockSpec((tm, N), lambda i, k: (i, 0)),
            compiler_params=pltpu.CompilerParams(
                dimension_semantics=("parallel", "arbitrary")),
        )(x2, wb, bias)
    return out.reshape(lead + (N,))


# ----------------------------------------------------------------------------
# fused RMSNorm + linear (no bias)  -- Mamba (norm -> in_proj)
# ----------------------------------------------------------------------------
def _rmsnorm_linear_kernel(x_ref, g_ref, w_ref, o_ref, *, eps):
    x = x_ref[...]
    ms = jnp.mean(x * x, axis=-1, keepdims=True)
    xn = (x * lax.rsqrt(ms + eps) * g_ref[...]).astype(BF16)
    o_ref[...] = jnp.dot(xn, w_ref[...],
                         preferred_element_type=jnp.float32).astype(o_ref.dtype)


def rmsnorm_linear(x, g, w, out_dtype=F32):
    lead = x.shape[:-1]
    K = x.shape[-1]
    N = w.shape[-1]
    x2 = x.reshape(-1, K).astype(F32)
    M = x2.shape[0]
    tm = M if M <= 512 else 256
    out = pl.pallas_call(
        functools.partial(_rmsnorm_linear_kernel, eps=1e-5),
        out_shape=jax.ShapeDtypeStruct((M, N), out_dtype),
        grid=(pl.cdiv(M, tm),),
        in_specs=[
            pl.BlockSpec((tm, K), lambda i: (i, 0)),
            pl.BlockSpec((1, K), lambda i: (0, 0)),
            pl.BlockSpec((K, N), lambda i: (0, 0)),
        ],
        out_specs=pl.BlockSpec((tm, N), lambda i: (i, 0)),
        compiler_params=pltpu.CompilerParams(dimension_semantics=("parallel",)),
    )(x2, g.reshape(1, K).astype(F32), _as_bf16(w))
    return out.reshape(lead + (N,))


# ----------------------------------------------------------------------------
# fused LayerNorm + linear (+ bias)  -- FeedForward first layer, to_logits
# ----------------------------------------------------------------------------
def _layernorm_linear_kernel(x_ref, g_ref, beta_ref, w_ref, b_ref, o_ref, *, eps):
    x = x_ref[...]
    mu = jnp.mean(x, axis=-1, keepdims=True)
    var = jnp.mean((x - mu) * (x - mu), axis=-1, keepdims=True)
    xn = ((x - mu) * lax.rsqrt(var + eps) * g_ref[...] + beta_ref[...]).astype(BF16)
    o_ref[...] = (jnp.dot(xn, w_ref[...], preferred_element_type=jnp.float32)
                  + b_ref[...]).astype(o_ref.dtype)


def layernorm_linear(x, g, beta, w, b):
    lead = x.shape[:-1]
    K = x.shape[-1]
    N = w.shape[-1]
    x2 = x.reshape(-1, K).astype(F32)
    M = x2.shape[0]
    tm = M if M <= 512 else 256
    out = pl.pallas_call(
        functools.partial(_layernorm_linear_kernel, eps=1e-5),
        out_shape=jax.ShapeDtypeStruct((M, N), F32),
        grid=(pl.cdiv(M, tm),),
        in_specs=[
            pl.BlockSpec((tm, K), lambda i: (i, 0)),
            pl.BlockSpec((1, K), lambda i: (0, 0)),
            pl.BlockSpec((1, K), lambda i: (0, 0)),
            pl.BlockSpec((K, N), lambda i: (0, 0)),
            pl.BlockSpec((1, N), lambda i: (0, 0)),
        ],
        out_specs=pl.BlockSpec((tm, N), lambda i: (i, 0)),
        compiler_params=pltpu.CompilerParams(dimension_semantics=("parallel",)),
    )(x2, g.reshape(1, K).astype(F32), beta.reshape(1, K).astype(F32),
      _as_bf16(w), b.reshape(1, N).astype(F32))
    return out.reshape(lead + (N,))


# ----------------------------------------------------------------------------
# fused Mamba inner kernel (one grid step per batch element):
#   causal depthwise conv1d + SiLU  ->  x_proj + dt_proj + softplus
#   ->  selective scan (fully unrolled)  ->  D-skip + silu(z) gating
# ----------------------------------------------------------------------------
def _mamba_inner_kernel(xz_ref, convw_ref, convb_ref, drw_ref, bcwT_ref,
                        dtw_ref, dtb_ref, a_ref, dskip_ref, y_ref, xp_ref,
                        *, d_inner, d_state, dt_rank, d_conv, seq_len):
    xz = xz_ref[...]                              # (L, 2*d_inner), bf16
    xi = xz[:, :d_inner].astype(F32)
    z = xz[:, d_inner:].astype(F32)

    # --- causal depthwise conv + SiLU; left zero-pad lives in a VMEM scratch ---
    xp_ref[0:d_conv - 1, :] = jnp.zeros((d_conv - 1, d_inner), F32)
    xp_ref[d_conv - 1:d_conv - 1 + seq_len, :] = xi
    acc = convb_ref[...] + jnp.zeros((seq_len, d_inner), F32)
    for k in range(d_conv):                       # static, d_conv is small
        acc = acc + convw_ref[k:k + 1, :] * xp_ref[k:k + seq_len, :]
    xc = acc * _sigmoid(acc)                      # (L, d_inner)
    xcb = xc.astype(BF16)

    # --- delta = softplus(dt_proj(x_proj_dr(xc))) ---
    dr = jnp.dot(xcb, drw_ref[...], preferred_element_type=jnp.float32)    # (L, dt_rank)
    delta = _softplus(jnp.dot(dr, dtw_ref[...],
                              preferred_element_type=jnp.float32) + dtb_ref[...])
    dx = delta * xc                               # (L, d_inner)

    # --- B / C projections produced directly in (d_state, L) layout (no
    #     value transposes, no trailing-1 lane dims) ---
    bct = lax.dot_general(bcwT_ref[...], xcb, (((1,), (1,)), ((), ())),
                          preferred_element_type=jnp.float32)              # (2*d_state, L)
    bt = bct[:d_state, :]
    ct = bct[d_state:, :]

    # --- selective scan, fully unrolled (seq_len is a static shape); y is
    #     built as one dense (L, d_inner) value -> a single dense store ---
    a = a_ref[...]                                # (d_state, d_inner) = -exp(A_log)^T
    h = jnp.zeros((d_state, d_inner), F32)
    rows = []
    for t in range(seq_len):
        da_t = jnp.exp(delta[t:t + 1, :] * a)                       # EUP
        h = da_t * h + bt[:, t:t + 1] * dx[t:t + 1, :]              # VPU
        rows.append(jnp.sum(ct[:, t:t + 1] * h, axis=0, keepdims=True))
    y = jnp.concatenate(rows, axis=0)             # (L, d_inner)

    # --- D skip + silu(z) gating epilogue, one dense store ---
    y_ref[...] = ((y + dskip_ref[...] * xc) * (z * _sigmoid(z))).astype(y_ref.dtype)


def mamba_inner(xz, conv_w, conv_b, x_dr_w, x_bc_wT, dt_w, dt_b, A_T, D):
    Bsz, L, two_di = xz.shape
    d_inner = two_di // 2
    d_state = A_T.shape[0]
    dt_rank = dt_w.shape[0]
    d_conv = conv_w.shape[0]
    kern = functools.partial(_mamba_inner_kernel, d_inner=d_inner,
                             d_state=d_state, dt_rank=dt_rank,
                             d_conv=d_conv, seq_len=L)
    return pl.pallas_call(
        kern,
        out_shape=jax.ShapeDtypeStruct((Bsz, L, d_inner), BF16),
        grid=(Bsz,),
        in_specs=[
            pl.BlockSpec((None, L, two_di), lambda i: (i, 0, 0)),
            pl.BlockSpec((d_conv, d_inner), lambda i: (0, 0)),
            pl.BlockSpec((1, d_inner), lambda i: (0, 0)),
            pl.BlockSpec((d_inner, dt_rank), lambda i: (0, 0)),
            pl.BlockSpec((2 * d_state, d_inner), lambda i: (0, 0)),
            pl.BlockSpec((dt_rank, d_inner), lambda i: (0, 0)),
            pl.BlockSpec((1, d_inner), lambda i: (0, 0)),
            pl.BlockSpec((d_state, d_inner), lambda i: (0, 0)),
            pl.BlockSpec((1, d_inner), lambda i: (0, 0)),
        ],
        out_specs=pl.BlockSpec((None, L, d_inner), lambda i: (i, 0, 0)),
        scratch_shapes=[pltpu.VMEM((L + d_conv - 1, d_inner), F32)],
        compiler_params=pltpu.CompilerParams(dimension_semantics=("parallel",)),
    )(xz, conv_w.astype(F32), conv_b.reshape(1, d_inner).astype(F32),
      _as_bf16(x_dr_w), _as_bf16(x_bc_wT), dt_w.astype(F32),
      dt_b.reshape(1, d_inner).astype(F32), A_T.astype(F32),
      D.reshape(1, d_inner).astype(F32))


# ----------------------------------------------------------------------------
# Mamba residual block (RMSNorm -> MambaBlock); returns mixer output only
# ----------------------------------------------------------------------------
def mamba_block(x, p):
    # TODO(synk): conv weight assumed in (d_conv, d_inner) layout; a torch
    # depthwise Conv1d checkpoint stores (d_inner, 1, d_conv) -> transpose at load.
    xz = rmsnorm_linear(x, p["norm_w"], p["in_proj_w"], out_dtype=BF16)
    y = mamba_inner(xz, p["conv_w"], p["conv_b"], p["x_dr_w"], p["x_bc_wT"],
                    p["dt_proj_w"], p["dt_proj_b"], p["A_T"], p["D"])
    return linear(y, p["out_proj_w"])


# ----------------------------------------------------------------------------
# cross-attention (Lq == 1): scores via 0/1 segment-sum matmul + VPU broadcast
# multiplies and sublane reductions (no per-head K=8 MXU dots, exact softmax).
# ----------------------------------------------------------------------------
def _cross_attn_kernel(q_ref, kv_ref, segsum_ref, segexp_ref, o_ref, *, dim, scale):
    q = q_ref[...]                                # (1, dim)
    kv = kv_ref[...]                              # (Lc, 2*dim)
    k = kv[:, :dim]
    v = kv[:, dim:]
    s = jnp.dot(k * q, segsum_ref[...],
                preferred_element_type=jnp.float32) * scale          # (Lc, heads)
    m = jnp.max(s, axis=0, keepdims=True)
    p = jnp.exp(s - m)
    p = p / jnp.sum(p, axis=0, keepdims=True)                        # exact softmax
    pe = jnp.dot(p, segexp_ref[...],
                 preferred_element_type=jnp.float32)                 # (Lc, dim)
    o_ref[...] = jnp.sum(pe * v, axis=0, keepdims=True)


def cross_attention(x, ctx, p, *, heads):
    # TODO(synk): SD-style CrossAttention splits d_embed into heads (dh = dim//heads);
    # the module's unused dim_head=16 arg is ignored here, matching that reference.
    b, lq, dim = x.shape
    assert lq == 1  # query is the mean-pooled token
    lc = ctx.shape[1]
    dh = dim // heads
    q = linear(x, p["q_w"], p["q_b"])              # (b, 1, dim)
    kv = linear(ctx, p["kv_w"], p["kv_b"])         # (b, Lc, 2*dim), fused k/v proj

    o = pl.pallas_call(
        functools.partial(_cross_attn_kernel, dim=dim, scale=1.0 / math.sqrt(dh)),
        out_shape=jax.ShapeDtypeStruct((b, 1, dim), F32),
        grid=(b,),
        in_specs=[
            pl.BlockSpec((None, 1, dim), lambda i: (i, 0, 0)),
            pl.BlockSpec((None, lc, 2 * dim), lambda i: (i, 0, 0)),
            pl.BlockSpec((dim, heads), lambda i: (0, 0)),
            pl.BlockSpec((heads, dim), lambda i: (0, 0)),
        ],
        out_specs=pl.BlockSpec((None, 1, dim), lambda i: (i, 0, 0)),
        compiler_params=pltpu.CompilerParams(dimension_semantics=("parallel",)),
    )(q, kv, p["seg_sum"], p["seg_exp"])
    return linear(o, p["out_w"], p["out_b"])


# ----------------------------------------------------------------------------
# FeedForward (LayerNorm -> Linear -> GEGLU -> Linear), dropout = eval no-op
# ----------------------------------------------------------------------------
def feed_forward(x, p):
    h = layernorm_linear(x, p["ln_g"], p["ln_b"], p["w1"], p["b1"])
    a, g = jnp.split(h, 2, axis=-1)
    # TODO(synk): exact-erf GELU gate kept in glue (erf not fused into Mosaic).
    h = a * jax.nn.gelu(g, approximate=False)
    return linear(h, p["w2"], p["b2"])


# ----------------------------------------------------------------------------
# full Cross_mamba_both forward
# ----------------------------------------------------------------------------
def cross_mamba_both_forward(params, x_categ, x_numer, feature_img, image_condition, *, heads):
    dim = params["cls_token"].shape[-1]

    # image_condition rearrange: 'b c h w d -> (b c) (h w) d' then transpose(1, 2)
    def rearrange_cond(t):
        bb, cc, hh, ww, dd = t.shape
        t = t.reshape(bb * cc, hh * ww, dd)
        return jnp.swapaxes(t, 1, 2)                                # (b*c, d, h*w)

    mri, pet = image_condition
    whole_condition = jnp.concatenate([rearrange_cond(mri), rearrange_cond(pet)], axis=1)

    # TODO(synk): categorical embedding gather kept in host JAX (jnp.take).
    x_cat = x_categ + params["categories_offset"][None, :]
    x_cat = jnp.take(params["categorical_embeds"], x_cat, axis=0)           # (b, n_cat, dim)
    x_num = x_numer[:, :, None] * params["num_w"][None] + params["num_b"][None]

    b = x_categ.shape[0]
    cls_tokens = jnp.broadcast_to(params["cls_token"], (b, 1, dim))
    x = jnp.concatenate([cls_tokens, x_cat, x_num, feature_img], axis=1).astype(F32)

    # Mamba (residual blocks)
    for lp in params["mamba_layers"]:
        x = mamba_block(x, lp) + x

    x = jnp.mean(x, axis=1, keepdims=True)                                  # (b, 1, dim)
    x = cross_attention(x, whole_condition, params["cross"], heads=heads) + x
    x = feed_forward(x, params["ff"]) + x
    x = x[:, 0, :]                                                          # squeeze(1)
    logits = layernorm_linear(x, params["logits_ln_g"], params["logits_ln_b"],
                              params["logits_w"], params["logits_b"])
    return logits


# ----------------------------------------------------------------------------
# deterministic parameter init (synthetic, not a checkpoint).  Matmul weights
# are pre-cast to bf16, the k/v projection is pre-fused, and A = -exp(A_log)^T
# is precomputed so the per-forward glue does no weight work.
# ----------------------------------------------------------------------------
def init_params(key, *, categories, num_continuous, dim, depth, heads, dim_out,
                num_special_tokens, d_cross, cross_ff_multi):
    d_inner = 2 * dim
    d_state = 16
    d_conv = 4
    dt_rank = math.ceil(dim / 16)
    total_tokens = sum(categories) + num_special_tokens

    keys = iter(jax.random.split(key, 128))

    def nrm(shape, scale):
        return jax.random.normal(next(keys), shape, F32) * scale

    offsets = jnp.cumsum(jnp.asarray((num_special_tokens,) + tuple(categories), jnp.int32))[:-1]

    mamba_layers = []
    for _ in range(depth):
        x_proj_w = nrm((d_inner, dt_rank + 2 * d_state), d_inner ** -0.5)
        A_log = jnp.log(jnp.tile(jnp.arange(1, d_state + 1, dtype=F32)[None, :],
                                 (d_inner, 1)))
        mamba_layers.append(dict(
            norm_w=jnp.ones((dim,), F32),
            in_proj_w=nrm((dim, 2 * d_inner), dim ** -0.5).astype(BF16),
            conv_w=nrm((d_conv, d_inner), d_conv ** -0.5),
            conv_b=nrm((d_inner,), 0.02),
            x_dr_w=x_proj_w[:, :dt_rank].astype(BF16),
            x_bc_wT=jnp.transpose(x_proj_w[:, dt_rank:]).astype(BF16),  # (2*d_state, d_inner)
            dt_proj_w=nrm((dt_rank, d_inner), dt_rank ** -0.5),
            dt_proj_b=nrm((d_inner,), 0.02),
            A_T=-(jnp.exp(A_log).T),                                    # (d_state, d_inner)
            D=jnp.ones((d_inner,), F32),
            out_proj_w=nrm((d_inner, dim), d_inner ** -0.5).astype(BF16),
        ))

    dh = dim // heads
    seg_exp = jnp.repeat(jnp.eye(heads, dtype=F32), dh, axis=1)             # (heads, dim)
    k_w = nrm((d_cross, dim), d_cross ** -0.5)
    v_w = nrm((d_cross, dim), d_cross ** -0.5)
    k_b = nrm((dim,), 0.02)
    v_b = nrm((dim,), 0.02)

    params = dict(
        categories_offset=offsets,
        categorical_embeds=nrm((total_tokens, dim), 1.0),
        num_w=nrm((num_continuous, dim), 1.0),
        num_b=nrm((num_continuous, dim), 1.0),
        cls_token=nrm((1, 1, dim), 1.0),
        mamba_layers=mamba_layers,
        cross=dict(
            q_w=nrm((dim, dim), dim ** -0.5).astype(BF16), q_b=nrm((dim,), 0.02),
            kv_w=jnp.concatenate([k_w, v_w], axis=1).astype(BF16),         # fused k/v
            kv_b=jnp.concatenate([k_b, v_b], axis=0),
            out_w=nrm((dim, dim), dim ** -0.5).astype(BF16), out_b=nrm((dim,), 0.02),
            seg_sum=seg_exp.T,                                              # (dim, heads)
            seg_exp=seg_exp,                                                # (heads, dim)
        ),
        ff=dict(
            ln_g=jnp.ones((dim,), F32), ln_b=jnp.zeros((dim,), F32),
            w1=nrm((dim, dim * cross_ff_multi * 2), dim ** -0.5).astype(BF16),
            b1=nrm((dim * cross_ff_multi * 2,), 0.02),
            w2=nrm((dim * cross_ff_multi, dim), (dim * cross_ff_multi) ** -0.5).astype(BF16),
            b2=nrm((dim,), 0.02),
        ),
        logits_ln_g=jnp.ones((dim,), F32),
        logits_ln_b=jnp.zeros((dim,), F32),
        logits_w=nrm((dim, dim_out), dim ** -0.5).astype(BF16),
        logits_b=nrm((dim_out,), 0.02),
    )
    return params


# ----------------------------------------------------------------------------
if __name__ == "__main__":
    key = jax.random.PRNGKey(0)

    categories = (3, 5)
    num_continuous = 3
    dim = 32
    depth = 2
    heads = 4
    dim_out = 1
    num_special_tokens = 2
    cross_ff_multi = 2

    B = 2
    H = W = 16        # small stand-in for the 160x160 of the torch module (d_cross = H*W)
    D_IMG = 4         # depth slices of the 3-D condition volumes
    N_IMG_TOKENS = 4  # length of feature_img token sequence
    d_cross = H * W

    pkey, dkey = jax.random.split(key)
    params = init_params(
        pkey, categories=categories, num_continuous=num_continuous, dim=dim,
        depth=depth, heads=heads, dim_out=dim_out,
        num_special_tokens=num_special_tokens, d_cross=d_cross,
        cross_ff_multi=cross_ff_multi)

    dks = jax.random.split(dkey, 8)
    cols = [jax.random.randint(dks[i], (B, 1), 0, c, dtype=jnp.int32)
            for i, c in enumerate(categories)]
    x_categ = jnp.concatenate(cols, axis=1)                                 # (B, n_categ)
    x_numer = jax.random.normal(dks[3], (B, num_continuous), F32)           # (B, n_cont)
    feature_img = jax.random.normal(dks[4], (B, N_IMG_TOKENS, dim), F32)    # (B, n_img, dim)
    mri = jax.random.normal(dks[5], (B, 1, H, W, D_IMG), F32)               # (b, c, h, w, d)
    pet = jax.random.normal(dks[6], (B, 1, H, W, D_IMG), F32)

    fwd = jax.jit(functools.partial(cross_mamba_both_forward, heads=heads))
    logits = fwd(params, x_categ, x_numer, feature_img, (mri, pet))
    jax.block_until_ready(logits)

    assert logits.shape == (B, dim_out), logits.shape
    assert bool(jnp.all(jnp.isfinite(logits)))
    print("KERNEL_OK")
</pallas_src>

<mosaic_0001>
module attributes {stable_mosaic.version = 11 : i64} {
  func.func @_rmsnorm_linear_kernel(%arg0: i32, %arg1: memref<20x32xf32, #tpu.memory_space<vmem>>, %arg2: memref<1x32xf32, #tpu.memory_space<vmem>>, %arg3: memref<32x128xbf16, #tpu.memory_space<vmem>>, %arg4: memref<20x128xbf16, #tpu.memory_space<vmem>>) attributes {dimension_semantics = [#tpu.dimension_semantics<parallel>], iteration_bounds = array<i64: 1>, scalar_prefetch = 0 : i64, scratch_operands = 0 : i64, tpu.core_type = #tpu.core_type<tc>, window_params = [{transform_indices = @transform_0, window_bounds = array<i64: 20, 32>}, {pipeline_mode = #tpu.pipeline_mode<synchronous>, transform_indices = @transform_1, window_bounds = array<i64: 1, 32>}, {pipeline_mode = #tpu.pipeline_mode<synchronous>, transform_indices = @transform_2, window_bounds = array<i64: 32, 128>}, {transform_indices = @transform_3, window_bounds = array<i64: 20, 128>}]} {
    %c0 = arith.constant 0 : index
    %c0_0 = arith.constant 0 : index
    %0 = vector.load %arg1[%c0, %c0_0] : memref<20x32xf32, #tpu.memory_space<vmem>>, vector<20x32xf32>
    %1 = arith.mulf %0, %0 : vector<20x32xf32>
    %cst = arith.constant dense<0.000000e+00> : vector<20xf32>
    %2 = vector.multi_reduction <add>, %1, %cst [1] : vector<20x32xf32> to vector<20xf32>
    %3 = vector.shape_cast %2 : vector<20xf32> to vector<20x1xf32>
    %cst_1 = arith.constant 3.200000e+01 : f32
    %4 = vector.broadcast %cst_1 : f32 to vector<20x1xf32>
    %5 = arith.divf %3, %4 : vector<20x1xf32>
    %cst_2 = arith.constant 9.99999974E-6 : f32
    %6 = vector.broadcast %cst_2 : f32 to vector<20x1xf32>
    %7 = arith.addf %5, %6 : vector<20x1xf32>
    %8 = math.rsqrt %7 : vector<20x1xf32>
    %9 = vector.broadcast %8 : vector<20x1xf32> to vector<20x32xf32>
    %10 = arith.mulf %0, %9 : vector<20x32xf32>
    %c0_3 = arith.constant 0 : index
    %c0_4 = arith.constant 0 : index
    %11 = vector.load %arg2[%c0_3, %c0_4] : memref<1x32xf32, #tpu.memory_space<vmem>>, vector<1x32xf32>
    %12 = vector.broadcast %11 : vector<1x32xf32> to vector<20x32xf32>
    %13 = arith.mulf %10, %12 : vector<20x32xf32>
    %14 = arith.truncf %13 : vector<20x32xf32> to vector<20x32xbf16>
    %c0_5 = arith.constant 0 : index
    %c0_6 = arith.constant 0 : index
    %15 = vector.load %arg3[%c0_5, %c0_6] : memref<32x128xbf16, #tpu.memory_space<vmem>>, vector<32x128xbf16>
    %cst_7 = arith.constant dense<0.000000e+00> : vector<20x128xf32>
    %16 = tpu.matmul %14, %15, %cst_7 {dimension_numbers = #tpu.dot_dimension_numbers<[1], [0], [0], [1], [0, 0, 1, 1], [], []>} : vector<20x32xbf16>, vector<32x128xbf16>, vector<20x128xf32> -> vector<20x128xf32>
    %17 = arith.truncf %16 : vector<20x128xf32> to vector<20x128xbf16>
    %c0_8 = arith.constant 0 : index
    %c0_9 = arith.constant 0 : index
    %18 = vector.load %arg4[%c0_8, %c0_9] : memref<20x128xbf16, #tpu.memory_space<vmem>>, vector<20x128xbf16>
    tpu.vector_store %arg4[%c0_8, %c0_9], %17 {strides = array<i32>} : memref<20x128xbf16, #tpu.memory_space<vmem>>, vector<20x128xbf16>,
    return
  }
  func.func @transform_0(%arg0: i32) -> (i32, i32) {
    %c0_i32 = arith.constant 0 : i32
    %c0_i32_0 = arith.constant 0 : i32
    return %arg0, %c0_i32 : i32, i32
  }
  func.func @transform_1(%arg0: i32) -> (i32, i32) {
    %c0_i32 = arith.constant 0 : i32
    %c0_i32_0 = arith.constant 0 : i32
    %c0_i32_1 = arith.constant 0 : i32
    return %c0_i32, %c0_i32_0 : i32, i32
  }
  func.func @transform_2(%arg0: i32) -> (i32, i32) {
    %c0_i32 = arith.constant 0 : i32
    %c0_i32_0 = arith.constant 0 : i32
    %c0_i32_1 = arith.constant 0 : i32
    return %c0_i32, %c0_i32_0 : i32, i32
  }
  func.func @transform_3(%arg0: i32) -> (i32, i32) {
    %c0_i32 = arith.constant 0 : i32
    %c0_i32_0 = arith.constant 0 : i32
    return %arg0, %c0_i32 : i32, i32
  }
}

module attributes {stable_mosaic.version = 11 : i64} {
  func.func @_mamba_inner_kernel(%arg0: i32, %arg1: memref<1x10x128xbf16, #tpu.memory_space<vmem>>, %arg2: memref<4x64xf32, #tpu.memory_space<vmem>>, %arg3: memref<1x64xf32, #tpu.memory_space<vmem>>, %arg4: memref<64x2xbf16, #tpu.memory_space<vmem>>, %arg5: memref<32x64xbf16, #tpu.memory_space<vmem>>, %arg6: memref<2x64xf32, #tpu.memory_space<vmem>>, %arg7: memref<1x64xf32, #tpu.memory_space<vmem>>, %arg8: memref<16x64xf32, #tpu.memory_space<vmem>>, %arg9: memref<1x64xf32, #tpu.memory_space<vmem>>, %arg10: memref<1x10x64xbf16, #tpu.memory_space<vmem>>, %arg11: memref<13x64xf32, #tpu.memory_space<vmem>>) attributes {dimension_semantics = [#tpu.dimension_semantics<parallel>], iteration_bounds = array<i64: 2>, scalar_prefetch = 0 : i64, scratch_operands = 1 : i64, tpu.core_type = #tpu.core_type<tc>, window_params = [{transform_indices = @transform_0, window_bounds = array<i64: 1, 10, 128>}, {pipeline_mode = #tpu.pipeline_mode<synchronous>, transform_indices = @transform_1, window_bounds = array<i64: 4, 64>}, {pipeline_mode = #tpu.pipeline_mode<synchronous>, transform_indices = @transform_2, window_bounds = array<i64: 1, 64>}, {pipeline_mode = #tpu.pipeline_mode<synchronous>, transform_indices = @transform_3, window_bounds = array<i64: 64, 2>}, {pipeline_mode = #tpu.pipeline_mode<synchronous>, transform_indices = @transform_4, window_bounds = array<i64: 32, 64>}, {pipeline_mode = #tpu.pipeline_mode<synchronous>, transform_indices = @transform_5, window_bounds = array<i64: 2, 64>}, {pipeline_mode = #tpu.pipeline_mode<synchronous>, transform_indices = @transform_6, window_bounds = array<i64: 1, 64>}, {pipeline_mode = #tpu.pipeline_mode<synchronous>, transform_indices = @transform_7, window_bounds = array<i64: 16, 64>}, {pipeline_mode = #tpu.pipeline_mode<synchronous>, transform_indices = @transform_8, window_bounds = array<i64: 1, 64>}, {transform_indices = @transform_9, window_bounds = array<i64: 1, 10, 64>}]} {
    %c0 = arith.constant 0 : index
    %c0_0 = arith.constant 0 : index
    %c0_1 = arith.constant 0 : index
    %0 = vector.load %arg1[%c0, %c0_0, %c0_1] : memref<1x10x128xbf16, #tpu.memory_space<vmem>>, vector<1x10x128xbf16>
    %1 = vector.shape_cast %0 : vector<1x10x128xbf16> to vector<10x128xbf16>
    %2 = vector.extract_strided_slice %1 {offsets = [0, 0], sizes = [10, 64], strides = [1, 1]} : vector<10x128xbf16> to vector<10x64xbf16>
    %3 = arith.extf %2 : vector<10x64xbf16> to vector<10x64xf32>
    %4 = vector.extract_strided_slice %1 {offsets = [0, 64], sizes = [10, 64], strides = [1, 1]} : vector<10x128xbf16> to vector<10x64xbf16>
    %5 = arith.extf %4 : vector<10x64xbf16> to vector<10x64xf32>
    %cst = arith.constant 0.000000e+00 : f32
    %6 = vector.broadcast %cst : f32 to vector<3x64xf32>
    %c0_2 = arith.constant 0 : index
    %c0_3 = arith.constant 0 : index
    %7 = vector.load %arg11[%c0_2, %c0_3] : memref<13x64xf32, #tpu.memory_space<vmem>>, vector<3x64xf32>
    tpu.vector_store %arg11[%c0_2, %c0_3], %6 {strides = array<i32>} : memref<13x64xf32, #tpu.memory_space<vmem>>, vector<3x64xf32>,
    %c3 = arith.constant 3 : index
    %c0_4 = arith.constant 0 : index
    %8 = vector.load %arg11[%c3, %c0_4] : memref<13x64xf32, #tpu.memory_space<vmem>>, vector<10x64xf32>
    tpu.vector_store %arg11[%c3, %c0_4], %3 {strides = array<i32>} : memref<13x64xf32, #tpu.memory_space<vmem>>, vector<10x64xf32>,
    %c0_5 = arith.constant 0 : index
    %c0_6 = arith.constant 0 : index
    %9 = vector.load %arg3[%c0_5, %c0_6] : memref<1x64xf32, #tpu.memory_space<vmem>>, vector<1x64xf32>
    %cst_7 = arith.constant 0.000000e+00 : f32
    %10 = vector.broadcast %cst_7 : f32 to vector<10x64xf32>
    %11 = vector.broadcast %9 : vector<1x64xf32> to vector<10x64xf32>
    %12 = arith.addf %11, %10 : vector<10x64xf32>
    %c0_8 = arith.constant 0 : index
    %c0_9 = arith.constant 0 : index
    %13 = vector.load %arg2[%c0_8, %c0_9] : memref<4x64xf32, #tpu.memory_space<vmem>>, vector<1x64xf32>
    %c0_10 = arith.constant 0 : index
    %c0_11 = arith.constant 0 : index
    %14 = vector.load %arg11[%c0_10, %c0_11] : memref<13x64xf32, #tpu.memory_space<vmem>>, vector<10x64xf32>
    %15 = vector.broadcast %13 : vector<1x64xf32> to vector<10x64xf32>
    %16 = arith.mulf %15, %14 : vector<10x64xf32>
    %17 = arith.addf %12, %16 : vector<10x64xf32>
    %c1 = arith.constant 1 : index
    %c0_12 = arith.constant 0 : index
    %18 = vector.load %arg2[%c1, %c0_12] : memref<4x64xf32, #tpu.memory_space<vmem>>, vector<1x64xf32>
    %c1_13 = arith.constant 1 : index
    %c0_14 = arith.constant 0 : index
    %19 = vector.load %arg11[%c1_13, %c0_14] : memref<13x64xf32, #tpu.memory_space<vmem>>, vector<10x64xf32>
    %20 = vector.broadcast %18 : vector<1x64xf32> to vector<10x64xf32>
    %21 = arith.mulf %20, %19 : vector<10x64xf32>
    %22 = arith.addf %17, %21 : vector<10x64xf32>
    %c2 = arith.constant 2 : index
    %c0_15 = arith.constant 0 : index
    %23 = vector.load %arg2[%c2, %c0_15] : memref<4x64xf32, #tpu.memory_space<vmem>>, vector<1x64xf32>
    %c2_16 = arith.constant 2 : index
    %c0_17 = arith.constant 0 : index
    %24 = vector.load %arg11[%c2_16, %c0_17] : memref<13x64xf32, #tpu.memory_space<vmem>>, vector<10x64xf32>
    %25 = vector.broadcast %23 : vector<1x64xf32> to vector<10x64xf32>
    %26 = arith.mulf %25, %24 : vector<10x64xf32>
    %27 = arith.addf %22, %26 : vector<10x64xf32>
    %c3_18 = arith.constant 3 : index
    %c0_19 = arith.constant 0 : index
    %28 = vector.load %arg2[%c3_18, %c0_19] : memref<4x64xf32, #tpu.memory_space<vmem>>, vector<1x64xf32>
    %c3_20 = arith.constant 3 : index
    %c0_21 = arith.constant 0 : index
    %29 = vector.load %arg11[%c3_20, %c0_21] : memref<13x64xf32, #tpu.memory_space<vmem>>, vector<10x64xf32>
    %30 = vector.broadcast %28 : vector<1x64xf32> to vector<10x64xf32>
    %31 = arith.mulf %30, %29 : vector<10x64xf32>
    %32 = arith.addf %27, %31 : vector<10x64xf32>
    %cst_22 = arith.constant 0.000000e+00 : f32
    %33 = vector.broadcast %cst_22 : f32 to vector<10x64xf32>
    %34 = arith.subf %33, %32 : vector<10x64xf32>
    %35 = math.exp %34 : vector<10x64xf32>
    %cst_23 = arith.constant 1.000000e+00 : f32
    %36 = vector.broadcast %cst_23 : f32 to vector<10x64xf32>
    %37 = arith.addf %36, %35 : vector<10x64xf32>
    %cst_24 = arith.constant 1.000000e+00 : f32
    %38 = vector.broadcast %cst_24 : f32 to vector<10x64xf32>
    %39 = arith.divf %38, %37 : vector<10x64xf32>
    %40 = arith.mulf %32, %39 : vector<10x64xf32>
    %41 = arith.truncf %40 : vector<10x64xf32> to vector<10x64xbf16>
    %c0_25 = arith.constant 0 : index
    %c0_26 = arith.constant 0 : index
    %42 = vector.load %arg4[%c0_25, %c0_26] : memref<64x2xbf16, #tpu.memory_space<vmem>>, vector<64x2xbf16>
    %cst_27 = arith.constant dense<0.000000e+00> : vector<10x2xf32>
    %43 = tpu.matmul %41, %42, %cst_27 {dimension_numbers = #tpu.dot_dimension_numbers<[1], [0], [0], [1], [0, 0, 1, 1], [], []>} : vector<10x64xbf16>, vector<64x2xbf16>, vector<10x2xf32> -> vector<10x2xf32>
    %c0_28 = arith.constant 0 : index
    %c0_29 = arith.constant 0 : index
    %44 = vector.load %arg6[%c0_28, %c0_29] : memref<2x64xf32, #tpu.memory_space<vmem>>, vector<2x64xf32>
    %cst_30 = arith.constant dense<0.000000e+00> : vector<10x64xf32>
    %45 = tpu.matmul %43, %44, %cst_30 {dimension_numbers = #tpu.dot_dimension_numbers<[1], [0], [0], [1], [0, 0, 1, 1], [], []>} : vector<10x2xf32>, vector<2x64xf32>, vector<10x64xf32> -> vector<10x64xf32>
    %c0_31 = arith.constant 0 : index
    %c0_32 = arith.constant 0 : index
    %46 = vector.load %arg7[%c0_31, %c0_32] : memref<1x64xf32, #tpu.memory_space<vmem>>, vector<1x64xf32>
    %47 = vector.broadcast %46 : vector<1x64xf32> to vector<10x64xf32>
    %48 = arith.addf %45, %47 : vector<10x64xf32>
    %cst_33 = arith.constant 0.000000e+00 : f32
    %49 = vector.broadcast %cst_33 : f32 to vector<10x64xf32>
    %50 = arith.maximumf %48, %49 : vector<10x64xf32>
    %51 = math.absf %48 : vector<10x64xf32>
    %cst_34 = arith.constant 0.000000e+00 : f32
    %52 = vector.broadcast %cst_34 : f32 to vector<10x64xf32>
    %53 = arith.subf %52, %51 : vector<10x64xf32>
    %54 = math.exp %53 : vector<10x64xf32>
    %cst_35 = arith.constant 1.000000e+00 : f32
    %55 = vector.broadcast %cst_35 : f32 to vector<10x64xf32>
    %56 = arith.addf %55, %54 : vector<10x64xf32>
    %57 = math.log %56 : vector<10x64xf32>
    %58 = arith.addf %50, %57 : vector<10x64xf32>
    %59 = arith.mulf %58, %40 : vector<10x64xf32>
    %c0_36 = arith.constant 0 : index
    %c0_37 = arith.constant 0 : index
    %60 = vector.load %arg5[%c0_36, %c0_37] : memref<32x64xbf16, #tpu.memory_space<vmem>>, vector<32x64xbf16>
    %cst_38 = arith.constant dense<0.000000e+00> : vector<32x10xf32>
    %61 = tpu.matmul %60, %41, %cst_38 {dimension_numbers = #tpu.dot_dimension_numbers<[1], [1], [0], [0], [0, 0, 1, 0], [], []>} : vector<32x64xbf16>, vector<10x64xbf16>, vector<32x10xf32> -> vector<32x10xf32>
    %62 = vector.extract_strided_slice %61 {offsets = [0, 0], sizes = [16, 10], strides = [1, 1]} : vector<32x10xf32> to vector<16x10xf32>
    %63 = vector.extract_strided_slice %61 {offsets = [16, 0], sizes = [16, 10], strides = [1, 1]} : vector<32x10xf32> to vector<16x10xf32>
    %c0_39 = arith.constant 0 : index
    %c0_40 = arith.constant 0 : index
    %64 = vector.load %arg8[%c0_39, %c0_40] : memref<16x64xf32, #tpu.memory_space<vmem>>, vector<16x64xf32>
    %cst_41 = arith.constant 0.000000e+00 : f32
    %65 = vector.broadcast %cst_41 : f32 to vector<16x64xf32>
    %66 = vector.extract_strided_slice %58 {offsets = [0, 0], sizes = [1, 64], strides = [1, 1]} : vector<10x64xf32> to vector<1x64xf32>
    %67 = vector.broadcast %66 : vector<1x64xf32> to vector<16x64xf32>
    %68 = arith.mulf %67, %64 : vector<16x64xf32>
    %69 = math.exp %68 : vector<16x64xf32>
    %70 = arith.mulf %69, %65 : vector<16x64xf32>
    %71 = vector.extract_strided_slice %62 {offsets = [0, 0], sizes = [16, 1], strides = [1, 1]} : vector<16x10xf32> to vector<16x1xf32>
    %72 = vector.extract_strided_slice %59 {offsets = [0, 0], sizes = [1, 64], strides = [1, 1]} : vector<10x64xf32> to vector<1x64xf32>
    %73 = vector.broadcast %71 : vector<16x1xf32> to vector<16x64xf32>
    %74 = vector.broadcast %72 : vector<1x64xf32> to vector<16x64xf32>
    %75 = arith.mulf %73, %74 : vector<16x64xf32>
    %76 = arith.addf %70, %75 : vector<16x64xf32>
    %77 = vector.extract_strided_slice %63 {offsets = [0, 0], sizes = [16, 1], strides = [1, 1]} : vector<16x10xf32> to vector<16x1xf32>
    %78 = vector.broadcast %77 : vector<16x1xf32> to vector<16x64xf32>
    %79 = arith.mulf %78, %76 : vector<16x64xf32>
    %cst_42 = arith.constant dense<0.000000e+00> : vector<64xf32>
    %80 = vector.multi_reduction <add>, %79, %cst_42 [0] : vector<16x64xf32> to vector<64xf32>
    %81 = vector.shape_cast %80 : vector<64xf32> to vector<1x64xf32>
    %82 = vector.extract_strided_slice %58 {offsets = [1, 0], sizes = [1, 64], strides = [1, 1]} : vector<10x64xf32> to vector<1x64xf32>
    %83 = vector.broadcast %82 : vector<1x64xf32> to vector<16x64xf32>
    %84 = arith.mulf %83, %64 : vector<16x64xf32>
    %85 = math.exp %84 : vector<16x64xf32>
    %86 = arith.mulf %85, %76 : vector<16x64xf32>
    %87 = vector.extract_strided_slice %62 {offsets = [0, 1], sizes = [16, 1], strides = [1, 1]} : vector<16x10xf32> to vector<16x1xf32>
    %88 = vector.extract_strided_slice %59 {offsets = [1, 0], sizes = [1, 64], strides = [1, 1]} : vector<10x64xf32> to vector<1x64xf32>
    %89 = vector.broadcast %87 : vector<16x1xf32> to vector<16x64xf32>
    %90 = vector.broadcast %88 : vector<1x64xf32> to vector<16x64xf32>
    %91 = arith.mulf %89, %90 : vector<16x64xf32>
    %92 = arith.addf %86, %91 : vector<16x64xf32>
    %93 = vector.extract_strided_slice %63 {offsets = [0, 1], sizes = [16, 1], strides = [1, 1]} : vector<16x10xf32> to vector<16x1xf32>
    %94 = vector.broadcast %93 : vector<16x1xf32> to vector<16x64xf32>
    %95 = arith.mulf %94, %92 : vector<16x64xf32>
    %cst_43 = arith.constant dense<0.000000e+00> : vector<64xf32>
    %96 = vector.multi_reduction <add>, %95, %cst_43 [0] : vector<16x64xf32> to vector<64xf32>
    %97 = vector.shape_cast %96 : vector<64xf32> to vector<1x64xf32>
    %98 = vector.extract_strided_slice %58 {offsets = [2, 0], sizes = [1, 64], strides = [1, 1]} : vector<10x64xf32> to vector<1x64xf32>
    %99 = vector.broadcast %98 : vector<1x64xf32> to vector<16x64xf32>
    %100 = arith.mulf %99, %64 : vector<16x64xf32>
    %101 = math.exp %100 : vector<16x64xf32>
    %102 = arith.mulf %101, %92 : vector<16x64xf32>
    %103 = vector.extract_strided_slice %62 {offsets = [0, 2], sizes = [16, 1], strides = [1, 1]} : vector<16x10xf32> to vector<16x1xf32>
    %104 = vector.extract_strided_slice %59 {offsets = [2, 0], sizes = [1, 64], strides = [1, 1]} : vector<10x64xf32> to vector<1x64xf32>
    %105 = vector.broadcast %103 : vector<16x1xf32> to vector<16x64xf32>
    %106 = vector.broadcast %104 : vector<1x64xf32> to vector<16x64xf32>
    %107 = arith.mulf %105, %106 : vector<16x64xf32>
    %108 = arith.addf %102, %107 : vector<16x64xf32>
    %109 = vector.extract_strided_slice %63 {offsets = [0, 2], sizes = [16, 1], strides = [1, 1]} : vector<16x10xf32> to vector<16x1xf32>
    %110 = vector.broadcast %109 : vector<16x1xf32> to vector<16x64xf32>
    %111 = arith.mulf %110, %108 : vector<16x64xf32>
    %cst_44 = arith.constant dense<0.000000e+00> : vector<64xf32>
    %112 = vector.multi_reduction <add>, %111, %cst_44 [0] : vector<16x64xf32> to vector<64xf32>
    %113 = vector.shape_cast %112 : vector<64xf32> to vector<1x64xf32>
    %114 = vector.extract_strided_slice %58 {offsets = [3, 0], sizes = [1, 64], strides = [1, 1]} : vector<10x64xf32> to vector<1x64xf32>
    %115 = vector.broadcast %114 : vector<1x64xf32> to vector<16x64xf32>
    %116 = arith.mulf %115, %64 : vector<16x64xf32>
    %117 = math.exp %116 : vector<16x64xf32>
    %118 = arith.mulf %117, %108 : vector<16x64xf32>
    %119 = vector.extract_strided_slice %62 {offsets = [0, 3], sizes = [16, 1], strides = [1, 1]} : vector<16x10xf32> to vector<16x1xf32>
    %120 = vector.extract_strided_slice %59 {offsets = [3, 0], sizes = [1, 64], strides = [1, 1]} : vector<10x64xf32> to vector<1x64xf32>
    %121 = vector.broadcast %119 : vector<16x1xf32> to vector<16x64xf32>
    %122 = vector.broadcast %120 : vector<1x64xf32> to vector<16x64xf32>
    %123 = arith.mulf %121, %122 : vector<16x64xf32>
    %124 = arith.addf %118, %123 : vector<16x64xf32>
    %125 = vector.extract_strided_slice %63 {offsets = [0, 3], sizes = [16, 1], strides = [1, 1]} : vector<16x10xf32> to vector<16x1xf32>
    %126 = vector.broadcast %125 : vector<16x1xf32> to vector<16x64xf32>
    %127 = arith.mulf %126, %124 : vector<16x64xf32>
    %cst_45 = arith.constant dense<0.000000e+00> : vector<64xf32>
    %128 = vector.multi_reduction <add>, %127, %cst_45 [0] : vector<16x64xf32> to vector<64xf32>
    %129 = vector.shape_cast %128 : vector<64xf32> to vector<1x64xf32>
    %130 = vector.extract_strided_slice %58 {offsets = [4, 0], sizes = [1, 64], strides = [1, 1]} : vector<10x64xf32> to vector<1x64xf32>
    %131 = vector.broadcast %130 : vector<1x64xf32> to vector<16x64xf32>
    %132 = arith.mulf %131, %64 : vector<16x64xf32>
    %133 = math.exp %132 : vector<16x64xf32>
    %134 = arith.mulf %133, %124 : vector<16x64xf32>
    %135 = vector.extract_strided_slice %62 {offsets = [0, 4], sizes = [16, 1], strides = [1, 1]} : vector<16x10xf32> to vector<16x1xf32>
    %136 = vector.extract_strided_slice %59 {offsets = [4, 0], sizes = [1, 64], strides = [1, 1]} : vector<10x64xf32> to vector<1x64xf32>
    %137 = vector.broadcast %135 : vector<16x1xf32> to vector<16x64xf32>
    %138 = vector.broadcast %136 : vector<1x64xf32> to vector<16x64xf32>
    %139 = arith.mulf %137, %138 : vector<16x64xf32>
    %140 = arith.addf %134, %139 : vector<16x64xf32>
    %141 = vector.extract_strided_slice %63 {offsets = [0, 4], sizes = [16, 1], strides = [1, 1]} : vector<16x10xf32> to vector<16x1xf32>
    %142 = vector.broadcast %141 : vector<16x1xf32> to vector<16x64xf32>
    %143 = arith.mulf %142, %140 : vector<16x64xf32>
    %cst_46 = arith.constant dense<0.000000e+00> : vector<64xf32>
    %144 = vector.multi_reduction <add>, %143, %cst_46 [0] : vector<16x64xf32> to vector<64xf32>
    %145 = vector.shape_cast %144 : vector<64xf32> to vector<1x64xf32>
    %146 = vector.extract_strided_slice %58 {offsets = [5, 0], sizes = [1, 64], strides = [1, 1]} : vector<10x64xf32> to vector<1x64xf32>
    %147 = vector.broadcast %146 : vector<1x64xf32> to vector<16x64xf32>
    %148 = arith.mulf %147, %64 : vector<16x64xf32>
    %149 = math.exp %148 : vector<16x64xf32>
    %150 = arith.mulf %149, %140 : vector<16x64xf32>
    %151 = vector.extract_strided_slice %62 {offsets = [0, 5], sizes = [16, 1], strides = [1, 1]} : vector<16x10xf32> to vector<16x1xf32>
    %152 = vector.extract_strided_slice %59 {offsets = [5, 0], sizes = [1, 64], strides = [1, 1]} : vector<10x64xf32> to vector<1x64xf32>
    %153 = vector.broadcast %151 : vector<16x1xf32> to vector<16x64xf32>
    %154 = vector.broadcast %152 : vector<1x64xf32> to vector<16x64xf32>
    %155 = arith.mulf %153, %154 : vector<16x64xf32>
    %156 = arith.addf %150, %155 : vector<16x64xf32>
    %157 = vector.extract_strided_slice %63 {offsets = [0, 5], sizes = [16, 1], strides = [1, 1]} : vector<16x10xf32> to vector<16x1xf32>
    %158 = vector.broadcast %157 : vector<16x1xf32> to vector<16x64xf32>
    %159 = arith.mulf %158, %156 : vector<16x64xf32>
    %cst_47 = arith.constant dense<0.000000e+00> : vector<64xf32>
    %160 = vector.multi_reduction <add>, %159, %cst_47 [0] : vector<16x64xf32> to vector<64xf32>
    %161 = vector.shape_cast %160 : vector<64xf32> to vector<1x64xf32>
    %162 = vector.extract_strided_slice %58 {offsets = [6, 0], sizes = [1, 64], strides = [1, 1]} : vector<10x64xf32> to vector<1x64xf32>
    %163 = vector.broadcast %162 : vector<1x64xf32> to vector<16x64xf32>
    %164 = arith.mulf %163, %64 : vector<16x64xf32>
    %165 = math.exp %164 : vector<16x64xf32>
    %166 = arith.mulf %165, %156 : vector<16x64xf32>
    %167 = vector.extract_strided_slice %62 {offsets = [0, 6], sizes = [16, 1], strides = [1, 1]} : vector<16x10xf32> to vector<16x1xf32>
    %168 = vector.extract_strided_slice %59 {offsets = [6, 0], sizes = [1, 64], strides = [1, 1]} : vector<10x64xf32> to vector<1x64xf32>
    %169 = vector.broadcast %167 : vector<16x1xf32> to vector<16x64xf32>
    %170 = vector.broadcast %168 : vector<1x64xf32> to vector<16x64xf32>
    %171 = arith.mulf %169, %170 : vector<16x64xf32>
    %172 = arith.addf %166, %171 : vector<16x64xf32>
    %173 = vector.extract_strided_slice %63 {offsets = [0, 6], sizes = [16, 1], strides = [1, 1]} : vector<16x10xf32> to vector<16x1xf32>
    %174 = vector.broadcast %173 : vector<16x1xf32> to vector<16x64xf32>
    %175 = arith.mulf %174, %172 : vector<16x64xf32>
    %cst_48 = arith.constant dense<0.000000e+00> : vector<64xf32>
    %176 = vector.multi_reduction <add>, %175, %cst_48 [0] : vector<16x64xf32> to vector<64xf32>
    %177 = vector.shape_cast %176 : vector<64xf32> to vector<1x64xf32>
    %178 = vector.extract_strided_slice %58 {offsets = [7, 0], sizes = [1, 64], strides = [1, 1]} : vector<10x64xf32> to vector<1x64xf32>
    %179 = vector.broadcast %178 : vector<1x64xf32> to vector<16x64xf32>
    %180 = arith.mulf %179, %64 : vector<16x64xf32>
    %181 = math.exp %180 : vector<16x64xf32>
    %182 = arith.mulf %181, %172 : vector<16x64xf32>
    %183 = vector.extract_strided_slice %62 {offsets = [0, 7], sizes = [16, 1], strides = [1, 1]} : vector<16x10xf32> to vector<16x1xf32>
    %184 = vector.extract_strided_slice %59 {offsets = [7, 0], sizes = [1, 64], strides = [1, 1]} : vector<10x64xf32> to vector<1x64xf32>
    %185 = vector.broadcast %183 : vector<16x1xf32> to vector<16x64xf32>
    %186 = vector.broadcast %184 : vector<1x64xf32> to vector<16x64xf32>
    %187 = arith.mulf %185, %186 : vector<16x64xf32>
    %188 = arith.addf %182, %187 : vector<16x64xf32>
    %189 = vector.extract_strided_slice %63 {offsets = [0, 7], sizes = [16, 1], strides = [1, 1]} : vector<16x10xf32> to vector<16x1xf32>
    %190 = vector.broadcast %189 : vector<16x1xf32> to vector<16x64xf32>
    %191 = arith.mulf %190, %188 : vector<16x64xf32>
    %cst_49 = arith.constant dense<0.000000e+00> : vector<64xf32>
    %192 = vector.multi_reduction <add>, %191, %cst_49 [0] : vector<16x64xf32> to vector<64xf32>
    %193 = vector.shape_cast %192 : vector<64xf32> to vector<1x64xf32>
    %194 = vector.extract_strided_slice %58 {offsets = [8, 0], sizes = [1, 64], strides = [1, 1]} : vector<10x64xf32> to vector<1x64xf32>
    %195 = vector.broadcast %194 : vector<1x64xf32> to vector<16x64xf32>
    %196 = arith.mulf %195, %64 : vector<16x64xf32>
    %197 = math.exp %196 : vector<16x64xf32>
    %198 = arith.mulf %197, %188 : vector<16x64xf32>
    %199 = vector.extract_strided_slice %62 {offsets = [0, 8], sizes = [16, 1], strides = [1, 1]} : vector<16x10xf32> to vector<16x1xf32>
    %200 = vector.extract_strided_slice %59 {offsets = [8, 0], sizes = [1, 64], strides = [1, 1]} : vector<10x64xf32> to vector<1x64xf32>
    %201 = vector.broadcast %199 : vector<16x1xf32> to vector<16x64xf32>
    %202 = vector.broadcast %200 : vector<1x64xf32> to vector<16x64xf32>
    %203 = arith.mulf %201, %202 : vector<16x64xf32>
    %204 = arith.addf %198, %203 : vector<16x64xf32>
    %205 = vector.extract_strided_slice %63 {offsets = [0, 8], sizes = [16, 1], strides = [1, 1]} : vector<16x10xf32> to vector<16x1xf32>
    %206 = vector.broadcast %205 : vector<16x1xf32> to vector<16x64xf32>
    %207 = arith.mulf %206, %204 : vector<16x64xf32>
    %cst_50 = arith.constant dense<0.000000e+00> : vector<64xf32>
    %208 = vector.multi_reduction <add>, %207, %cst_50 [0] : vector<16x64xf32> to vector<64xf32>
    %209 = vector.shape_cast %208 : vector<64xf32> to vector<1x64xf32>
    %210 = vector.extract_strided_slice %58 {offsets = [9, 0], sizes = [1, 64], strides = [1, 1]} : vector<10x64xf32> to vector<1x64xf32>
    %211 = vector.broadcast %210 : vector<1x64xf32> to vector<16x64xf32>
    %212 = arith.mulf %211, %64 : vector<16x64xf32>
    %213 = math.exp %212 : vector<16x64xf32>
    %214 = arith.mulf %213, %204 : vector<16x64xf32>
    %215 = vector.extract_strided_slice %62 {offsets = [0, 9], sizes = [16, 1], strides = [1, 1]} : vector<16x10xf32> to vector<16x1xf32>
    %216 = vector.extract_strided_slice %59 {offsets = [9, 0], sizes = [1, 64], strides = [1, 1]} : vector<10x64xf32> to vector<1x64xf32>
    %217 = vector.broadcast %215 : vector<16x1xf32> to vector<16x64xf32>
    %218 = vector.broadcast %216 : vector<1x64xf32> to vector<16x64xf32>
    %219 = arith.mulf %217, %218 : vector<16x64xf32>
    %220 = arith.addf %214, %219 : vector<16x64xf32>
    %221 = vector.extract_strided_slice %63 {offsets = [0, 9], sizes = [16, 1], strides = [1, 1]} : vector<16x10xf32> to vector<16x1xf32>
    %222 = vector.broadcast %221 : vector<16x1xf32> to vector<16x64xf32>
    %223 = arith.mulf %222, %220 : vector<16x64xf32>
    %cst_51 = arith.constant dense<0.000000e+00> : vector<64xf32>
    %224 = vector.multi_reduction <add>, %223, %cst_51 [0] : vector<16x64xf32> to vector<64xf32>
    %225 = vector.shape_cast %224 : vector<64xf32> to vector<1x64xf32>
    %226 = tpu.concatenate %81, %97, %113, %129, %145, %161, %177, %193, %209, %225 in 0 : vector<1x64xf32>, vector<1x64xf32>, vector<1x64xf32>, vector<1x64xf32>, vector<1x64xf32>, vector<1x64xf32>, vector<1x64xf32>, vector<1x64xf32>, vector<1x64xf32>, vector<1x64xf32> -> vector<10x64xf32>
    %c0_52 = arith.constant 0 : index
    %c0_53 = arith.constant 0 : index
    %227 = vector.load %arg9[%c0_52, %c0_53] : memref<1x64xf32, #tpu.memory_space<vmem>>, vector<1x64xf32>
    %228 = vector.broadcast %227 : vector<1x64xf32> to vector<10x64xf32>
    %229 = arith.mulf %228, %40 : vector<10x64xf32>
    %230 = arith.addf %226, %229 : vector<10x64xf32>
    %cst_54 = arith.constant 0.000000e+00 : f32
    %231 = vector.broadcast %cst_54 : f32 to vector<10x64xf32>
    %232 = arith.subf %231, %5 : vector<10x64xf32>
    %233 = math.exp %232 : vector<10x64xf32>
    %cst_55 = arith.constant 1.000000e+00 : f32
    %234 = vector.broadcast %cst_55 : f32 to vector<10x64xf32>
    %235 = arith.addf %234, %233 : vector<10x64xf32>
    %cst_56 = arith.constant 1.000000e+00 : f32
    %236 = vector.broadcast %cst_56 : f32 to vector<10x64xf32>
    %237 = arith.divf %236, %235 : vector<10x64xf32>
    %238 = arith.mulf %5, %237 : vector<10x64xf32>
    %239 = arith.mulf %230, %238 : vector<10x64xf32>
    %240 = arith.truncf %239 : vector<10x64xf32> to vector<10x64xbf16>
    %c0_57 = arith.constant 0 : index
    %c0_58 = arith.constant 0 : index
    %c0_59 = arith.constant 0 : index
    %241 = vector.load %arg10[%c0_57, %c0_58, %c0_59] : memref<1x10x64xbf16, #tpu.memory_space<vmem>>, vector<1x10x64xbf16>
    %242 = vector.shape_cast %241 : vector<1x10x64xbf16> to vector<10x64xbf16>
    %243 = vector.shape_cast %240 : vector<10x64xbf16> to vector<1x10x64xbf16>
    tpu.vector_store %arg10[%c0_57, %c0_58, %c0_59], %243 {strides = array<i32>} : memref<1x10x64xbf16, #tpu.memory_space<vmem>>, vector<1x10x64xbf16>,
    return
  }
  func.func @transform_0(%arg0: i32) -> (i32, i32, i32) {
    %c0_i32 = arith.constant 0 : i32
    %c0_i32_0 = arith.constant 0 : i32
    %c0_i32_1 = arith.constant 0 : i32
    return %arg0, %c0_i32, %c0_i32_0 : i32, i32, i32
  }
  func.func @transform_1(%arg0: i32) -> (i32, i32) {
    %c0_i32 = arith.constant 0 : i32
    %c0_i32_0 = arith.constant 0 : i32
    %c0_i32_1 = arith.constant 0 : i32
    return %c0_i32, %c0_i32_0 : i32, i32
  }
  func.func @transform_2(%arg0: i32) -> (i32, i32) {
    %c0_i32 = arith.constant 0 : i32
    %c0_i32_0 = arith.constant 0 : i32
    %c0_i32_1 = arith.constant 0 : i32
    return %c0_i32, %c0_i32_0 : i32, i32
  }
  func.func @transform_3(%arg0: i32) -> (i32, i32) {
    %c0_i32 = arith.constant 0 : i32
    %c0_i32_0 = arith.constant 0 : i32
    %c0_i32_1 = arith.constant 0 : i32
    return %c0_i32, %c0_i32_0 : i32, i32
  }
  func.func @transform_4(%arg0: i32) -> (i32, i32) {
    %c0_i32 = arith.constant 0 : i32
    %c0_i32_0 = arith.constant 0 : i32
    %c0_i32_1 = arith.constant 0 : i32
    return %c0_i32, %c0_i32_0 : i32, i32
  }
  func.func @transform_5(%arg0: i32) -> (i32, i32) {
    %c0_i32 = arith.constant 0 : i32
    %c0_i32_0 = arith.constant 0 : i32
    %c0_i32_1 = arith.constant 0 : i32
    return %c0_i32, %c0_i32_0 : i32, i32
  }
  func.func @transform_6(%arg0: i32) -> (i32, i32) {
    %c0_i32 = arith.constant 0 : i32
    %c0_i32_0 = arith.constant 0 : i32
    %c0_i32_1 = arith.constant 0 : i32
    return %c0_i32, %c0_i32_0 : i32, i32
  }
  func.func @transform_7(%arg0: i32) -> (i32, i32) {
    %c0_i32 = arith.constant 0 : i32
    %c0_i32_0 = arith.constant 0 : i32
    %c0_i32_1 = arith.constant 0 : i32
    return %c0_i32, %c0_i32_0 : i32, i32
  }
  func.func @transform_8(%arg0: i32) -> (i32, i32) {
    %c0_i32 = arith.constant 0 : i32
    %c0_i32_0 = arith.constant 0 : i32
    %c0_i32_1 = arith.constant 0 : i32
    return %c0_i32, %c0_i32_0 : i32, i32
  }
  func.func @transform_9(%arg0: i32) -> (i32, i32, i32) {
    %c0_i32 = arith.constant 0 : i32
    %c0_i32_0 = arith.constant 0 : i32
    %c0_i32_1 = arith.constant 0 : i32
    return %arg0, %c0_i32, %c0_i32_0 : i32, i32, i32
  }
}

module attributes {stable_mosaic.version = 11 : i64} {
  func.func @_linear_onepass_kernel(%arg0: i32, %arg1: memref<20x64xbf16, #tpu.memory_space<vmem>>, %arg2: memref<64x32xbf16, #tpu.memory_space<vmem>>, %arg3: memref<1x32xf32, #tpu.memory_space<vmem>>, %arg4: memref<20x32xf32, #tpu.memory_space<vmem>>) attributes {dimension_semantics = [#tpu.dimension_semantics<parallel>], iteration_bounds = array<i64: 1>, scalar_prefetch = 0 : i64, scratch_operands = 0 : i64, tpu.core_type = #tpu.core_type<tc>, window_params = [{transform_indices = @transform_0, window_bounds = array<i64: 20, 64>}, {pipeline_mode = #tpu.pipeline_mode<synchronous>, transform_indices = @transform_1, window_bounds = array<i64: 64, 32>}, {pipeline_mode = #tpu.pipeline_mode<synchronous>, transform_indices = @transform_2, window_bounds = array<i64: 1, 32>}, {transform_indices = @transform_3, window_bounds = array<i64: 20, 32>}]} {
    %c0 = arith.constant 0 : index
    %c0_0 = arith.constant 0 : index
    %0 = vector.load %arg1[%c0, %c0_0] : memref<20x64xbf16, #tpu.memory_space<vmem>>, vector<20x64xbf16>
    %c0_1 = arith.constant 0 : index
    %c0_2 = arith.constant 0 : index
    %1 = vector.load %arg2[%c0_1, %c0_2] : memref<64x32xbf16, #tpu.memory_space<vmem>>, vector<64x32xbf16>
    %cst = arith.constant dense<0.000000e+00> : vector<20x32xf32>
    %2 = tpu.matmul %0, %1, %cst {dimension_numbers = #tpu.dot_dimension_numbers<[1], [0], [0], [1], [0, 0, 1, 1], [], []>} : vector<20x64xbf16>, vector<64x32xbf16>, vector<20x32xf32> -> vector<20x32xf32>
    %c0_3 = arith.constant 0 : index
    %c0_4 = arith.constant 0 : index
    %3 = vector.load %arg3[%c0_3, %c0_4] : memref<1x32xf32, #tpu.memory_space<vmem>>, vector<1x32xf32>
    %4 = vector.broadcast %3 : vector<1x32xf32> to vector<20x32xf32>
    %5 = arith.addf %2, %4 : vector<20x32xf32>
    %c0_5 = arith.constant 0 : index
    %c0_6 = arith.constant 0 : index
    %6 = vector.load %arg4[%c0_5, %c0_6] : memref<20x32xf32, #tpu.memory_space<vmem>>, vector<20x32xf32>
    tpu.vector_store %arg4[%c0_5, %c0_6], %5 {strides = array<i32>} : memref<20x32xf32, #tpu.memory_space<vmem>>, vector<20x32xf32>,
    return
  }
  func.func @transform_0(%arg0: i32) -> (i32, i32) {
    %c0_i32 = arith.constant 0 : i32
    %c0_i32_0 = arith.constant 0 : i32
    return %arg0, %c0_i32 : i32, i32
  }
  func.func @transform_1(%arg0: i32) -> (i32, i32) {
    %c0_i32 = arith.constant 0 : i32
    %c0_i32_0 = arith.constant 0 : i32
    %c0_i32_1 = arith.constant 0 : i32
    return %c0_i32, %c0_i32_0 : i32, i32
  }
  func.func @transform_2(%arg0: i32) -> (i32, i32) {
    %c0_i32 = arith.constant 0 : i32
    %c0_i32_0 = arith.constant 0 : i32
    %c0_i32_1 = arith.constant 0 : i32
    return %c0_i32, %c0_i32_0 : i32, i32
  }
  func.func @transform_3(%arg0: i32) -> (i32, i32) {
    %c0_i32 = arith.constant 0 : i32
    %c0_i32_0 = arith.constant 0 : i32
    return %arg0, %c0_i32 : i32, i32
  }
}

module attributes {stable_mosaic.version = 11 : i64} {
  func.func @_linear_onepass_kernel(%arg0: i32, %arg1: memref<2x32xbf16, #tpu.memory_space<vmem>>, %arg2: memref<32x32xbf16, #tpu.memory_space<vmem>>, %arg3: memref<1x32xf32, #tpu.memory_space<vmem>>, %arg4: memref<2x32xf32, #tpu.memory_space<vmem>>) attributes {dimension_semantics = [#tpu.dimension_semantics<parallel>], iteration_bounds = array<i64: 1>, scalar_prefetch = 0 : i64, scratch_operands = 0 : i64, tpu.core_type = #tpu.core_type<tc>, window_params = [{transform_indices = @transform_0, window_bounds = array<i64: 2, 32>}, {pipeline_mode = #tpu.pipeline_mode<synchronous>, transform_indices = @transform_1, window_bounds = array<i64: 32, 32>}, {pipeline_mode = #tpu.pipeline_mode<synchronous>, transform_indices = @transform_2, window_bounds = array<i64: 1, 32>}, {transform_indices = @transform_3, window_bounds = array<i64: 2, 32>}]} {
    %c0 = arith.constant 0 : index
    %c0_0 = arith.constant 0 : index
    %0 = vector.load %arg1[%c0, %c0_0] : memref<2x32xbf16, #tpu.memory_space<vmem>>, vector<2x32xbf16>
    %c0_1 = arith.constant 0 : index
    %c0_2 = arith.constant 0 : index
    %1 = vector.load %arg2[%c0_1, %c0_2] : memref<32x32xbf16, #tpu.memory_space<vmem>>, vector<32x32xbf16>
    %cst = arith.constant dense<0.000000e+00> : vector<2x32xf32>
    %2 = tpu.matmul %0, %1, %cst {dimension_numbers = #tpu.dot_dimension_numbers<[1], [0], [0], [1], [0, 0, 1, 1], [], []>} : vector<2x32xbf16>, vector<32x32xbf16>, vector<2x32xf32> -> vector<2x32xf32>
    %c0_3 = arith.constant 0 : index
    %c0_4 = arith.constant 0 : index
    %3 = vector.load %arg3[%c0_3, %c0_4] : memref<1x32xf32, #tpu.memory_space<vmem>>, vector<1x32xf32>
    %4 = vector.broadcast %3 : vector<1x32xf32> to vector<2x32xf32>
    %5 = arith.addf %2, %4 : vector<2x32xf32>
    %c0_5 = arith.constant 0 : index
    %c0_6 = arith.constant 0 : index
    %6 = vector.load %arg4[%c0_5, %c0_6] : memref<2x32xf32, #tpu.memory_space<vmem>>, vector<2x32xf32>
    tpu.vector_store %arg4[%c0_5, %c0_6], %5 {strides = array<i32>} : memref<2x32xf32, #tpu.memory_space<vmem>>, vector<2x32xf32>,
    return
  }
  func.func @transform_0(%arg0: i32) -> (i32, i32) {
    %c0_i32 = arith.constant 0 : i32
    %c0_i32_0 = arith.constant 0 : i32
    return %arg0, %c0_i32 : i32, i32
  }
  func.func @transform_1(%arg0: i32) -> (i32, i32) {
    %c0_i32 = arith.constant 0 : i32
    %c0_i32_0 = arith.constant 0 : i32
    %c0_i32_1 = arith.constant 0 : i32
    return %c0_i32, %c0_i32_0 : i32, i32
  }
  func.func @transform_2(%arg0: i32) -> (i32, i32) {
    %c0_i32 = arith.constant 0 : i32
    %c0_i32_0 = arith.constant 0 : i32
    %c0_i32_1 = arith.constant 0 : i32
    return %c0_i32, %c0_i32_0 : i32, i32
  }
  func.func @transform_3(%arg0: i32) -> (i32, i32) {
    %c0_i32 = arith.constant 0 : i32
    %c0_i32_0 = arith.constant 0 : i32
    return %arg0, %c0_i32 : i32, i32
  }
}

module attributes {stable_mosaic.version = 11 : i64} {
  func.func @_cross_attn_kernel(%arg0: i32, %arg1: memref<1x1x32xf32, #tpu.memory_space<vmem>>, %arg2: memref<1x8x64xf32, #tpu.memory_space<vmem>>, %arg3: memref<32x4xf32, #tpu.memory_space<vmem>>, %arg4: memref<4x32xf32, #tpu.memory_space<vmem>>, %arg5: memref<1x1x32xf32, #tpu.memory_space<vmem>>) attributes {dimension_semantics = [#tpu.dimension_semantics<parallel>], iteration_bounds = array<i64: 2>, scalar_prefetch = 0 : i64, scratch_operands = 0 : i64, tpu.core_type = #tpu.core_type<tc>, window_params = [{transform_indices = @transform_0, window_bounds = array<i64: 1, 1, 32>}, {transform_indices = @transform_1, window_bounds = array<i64: 1, 8, 64>}, {pipeline_mode = #tpu.pipeline_mode<synchronous>, transform_indices = @transform_2, window_bounds = array<i64: 32, 4>}, {pipeline_mode = #tpu.pipeline_mode<synchronous>, transform_indices = @transform_3, window_bounds = array<i64: 4, 32>}, {transform_indices = @transform_4, window_bounds = array<i64: 1, 1, 32>}]} {
    %c0 = arith.constant 0 : index
    %c0_0 = arith.constant 0 : index
    %c0_1 = arith.constant 0 : index
    %0 = vector.load %arg1[%c0, %c0_0, %c0_1] : memref<1x1x32xf32, #tpu.memory_space<vmem>>, vector<1x1x32xf32>
    %1 = vector.shape_cast %0 : vector<1x1x32xf32> to vector<1x32xf32>
    %c0_2 = arith.constant 0 : index
    %c0_3 = arith.constant 0 : index
    %c0_4 = arith.constant 0 : index
    %2 = vector.load %arg2[%c0_2, %c0_3, %c0_4] : memref<1x8x64xf32, #tpu.memory_space<vmem>>, vector<1x8x64xf32>
    %3 = vector.shape_cast %2 : vector<1x8x64xf32> to vector<8x64xf32>
    %4 = vector.extract_strided_slice %3 {offsets = [0, 0], sizes = [8, 32], strides = [1, 1]} : vector<8x64xf32> to vector<8x32xf32>
    %5 = vector.extract_strided_slice %3 {offsets = [0, 32], sizes = [8, 32], strides = [1, 1]} : vector<8x64xf32> to vector<8x32xf32>
    %6 = vector.broadcast %1 : vector<1x32xf32> to vector<8x32xf32>
    %7 = arith.mulf %4, %6 : vector<8x32xf32>
    %c0_5 = arith.constant 0 : index
    %c0_6 = arith.constant 0 : index
    %8 = vector.load %arg3[%c0_5, %c0_6] : memref<32x4xf32, #tpu.memory_space<vmem>>, vector<32x4xf32>
    %cst = arith.constant dense<0.000000e+00> : vector<8x4xf32>
    %9 = tpu.matmul %7, %8, %cst {dimension_numbers = #tpu.dot_dimension_numbers<[1], [0], [0], [1], [0, 0, 1, 1], [], []>} : vector<8x32xf32>, vector<32x4xf32>, vector<8x4xf32> -> vector<8x4xf32>
    %cst_7 = arith.constant 0.353553385 : f32
    %10 = vector.broadcast %cst_7 : f32 to vector<8x4xf32>
    %11 = arith.mulf %9, %10 : vector<8x4xf32>
    %cst_8 = arith.constant dense<0xFF800000> : vector<4xf32>
    %12 = vector.multi_reduction <maximumf>, %11, %cst_8 [0] : vector<8x4xf32> to vector<4xf32>
    %13 = vector.shape_cast %12 : vector<4xf32> to vector<1x4xf32>
    %14 = vector.broadcast %13 : vector<1x4xf32> to vector<8x4xf32>
    %15 = arith.subf %11, %14 : vector<8x4xf32>
    %16 = math.exp %15 : vector<8x4xf32>
    %cst_9 = arith.constant dense<0.000000e+00> : vector<4xf32>
    %17 = vector.multi_reduction <add>, %16, %cst_9 [0] : vector<8x4xf32> to vector<4xf32>
    %18 = vector.shape_cast %17 : vector<4xf32> to vector<1x4xf32>
    %19 = vector.broadcast %18 : vector<1x4xf32> to vector<8x4xf32>
    %20 = arith.divf %16, %19 : vector<8x4xf32>
    %c0_10 = arith.constant 0 : index
    %c0_11 = arith.constant 0 : index
    %21 = vector.load %arg4[%c0_10, %c0_11] : memref<4x32xf32, #tpu.memory_space<vmem>>, vector<4x32xf32>
    %cst_12 = arith.constant dense<0.000000e+00> : vector<8x32xf32>
    %22 = tpu.matmul %20, %21, %cst_12 {dimension_numbers = #tpu.dot_dimension_numbers<[1], [0], [0], [1], [0, 0, 1, 1], [], []>} : vector<8x4xf32>, vector<4x32xf32>, vector<8x32xf32> -> vector<8x32xf32>
    %23 = arith.mulf %22, %5 : vector<8x32xf32>
    %cst_13 = arith.constant dense<0.000000e+00> : vector<32xf32>
    %24 = vector.multi_reduction <add>, %23, %cst_13 [0] : vector<8x32xf32> to vector<32xf32>
    %25 = vector.shape_cast %24 : vector<32xf32> to vector<1x32xf32>
    %c0_14 = arith.constant 0 : index
    %c0_15 = arith.constant 0 : index
    %c0_16 = arith.constant 0 : index
    %26 = vector.load %arg5[%c0_14, %c0_15, %c0_16] : memref<1x1x32xf32, #tpu.memory_space<vmem>>, vector<1x1x32xf32>
    %27 = vector.shape_cast %26 : vector<1x1x32xf32> to vector<1x32xf32>
    %28 = vector.shape_cast %25 : vector<1x32xf32> to vector<1x1x32xf32>
    tpu.vector_store %arg5[%c0_14, %c0_15, %c0_16], %28 {strides = array<i32>} : memref<1x1x32xf32, #tpu.memory_space<vmem>>, vector<1x1x32xf32>,
    return
  }
  func.func @transform_0(%arg0: i32) -> (i32, i32, i32) {
    %c0_i32 = arith.constant 0 : i32
    %c0_i32_0 = arith.constant 0 : i32
    %c0_i32_1 = arith.constant 0 : i32
    return %arg0, %c0_i32, %c0_i32_0 : i32, i32, i32
  }
  func.func @transform_1(%arg0: i32) -> (i32, i32, i32) {
    %c0_i32 = arith.constant 0 : i32
    %c0_i32_0 = arith.constant 0 : i32
    %c0_i32_1 = arith.constant 0 : i32
    return %arg0, %c0_i32, %c0_i32_0 : i32, i32, i32
  }
  func.func @transform_2(%arg0: i32) -> (i32, i32) {
    %c0_i32 = arith.constant 0 : i32
    %c0_i32_0 = arith.constant 0 : i32
    %c0_i32_1 = arith.constant 0 : i32
    return %c0_i32, %c0_i32_0 : i32, i32
  }
  func.func @transform_3(%arg0: i32) -> (i32, i32) {
    %c0_i32 = arith.constant 0 : i32
    %c0_i32_0 = arith.constant 0 : i32
    %c0_i32_1 = arith.constant 0 : i32
    return %c0_i32, %c0_i32_0 : i32, i32
  }
  func.func @transform_4(%arg0: i32) -> (i32, i32, i32) {
    %c0_i32 = arith.constant 0 : i32
    %c0_i32_0 = arith.constant 0 : i32
    %c0_i32_1 = arith.constant 0 : i32
    return %arg0, %c0_i32, %c0_i32_0 : i32, i32, i32
  }
}

module attributes {stable_mosaic.version = 11 : i64} {
  func.func @_linear_onepass_kernel(%arg0: i32, %arg1: memref<16x256xbf16, #tpu.memory_space<vmem>>, %arg2: memref<256x64xbf16, #tpu.memory_space<vmem>>, %arg3: memref<1x64xf32, #tpu.memory_space<vmem>>, %arg4: memref<16x64xf32, #tpu.memory_space<vmem>>) attributes {dimension_semantics = [#tpu.dimension_semantics<parallel>], iteration_bounds = array<i64: 1>, scalar_prefetch = 0 : i64, scratch_operands = 0 : i64, tpu.core_type = #tpu.core_type<tc>, window_params = [{transform_indices = @transform_0, window_bounds = array<i64: 16, 256>}, {pipeline_mode = #tpu.pipeline_mode<synchronous>, transform_indices = @transform_1, window_bounds = array<i64: 256, 64>}, {pipeline_mode = #tpu.pipeline_mode<synchronous>, transform_indices = @transform_2, window_bounds = array<i64: 1, 64>}, {transform_indices = @transform_3, window_bounds = array<i64: 16, 64>}]} {
    %c0 = arith.constant 0 : index
    %c0_0 = arith.constant 0 : index
    %0 = vector.load %arg1[%c0, %c0_0] : memref<16x256xbf16, #tpu.memory_space<vmem>>, vector<16x256xbf16>
    %c0_1 = arith.constant 0 : index
    %c0_2 = arith.constant 0 : index
    %1 = vector.load %arg2[%c0_1, %c0_2] : memref<256x64xbf16, #tpu.memory_space<vmem>>, vector<256x64xbf16>
    %cst = arith.constant dense<0.000000e+00> : vector<16x64xf32>
    %2 = tpu.matmul %0, %1, %cst {dimension_numbers = #tpu.dot_dimension_numbers<[1], [0], [0], [1], [0, 0, 1, 1], [], []>} : vector<16x256xbf16>, vector<256x64xbf16>, vector<16x64xf32> -> vector<16x64xf32>
    %c0_3 = arith.constant 0 : index
    %c0_4 = arith.constant 0 : index
    %3 = vector.load %arg3[%c0_3, %c0_4] : memref<1x64xf32, #tpu.memory_space<vmem>>, vector<1x64xf32>
    %4 = vector.broadcast %3 : vector<1x64xf32> to vector<16x64xf32>
    %5 = arith.addf %2, %4 : vector<16x64xf32>
    %c0_5 = arith.constant 0 : index
    %c0_6 = arith.constant 0 : index
    %6 = vector.load %arg4[%c0_5, %c0_6] : memref<16x64xf32, #tpu.memory_space<vmem>>, vector<16x64xf32>
    tpu.vector_store %arg4[%c0_5, %c0_6], %5 {strides = array<i32>} : memref<16x64xf32, #tpu.memory_space<vmem>>, vector<16x64xf32>,
    return
  }
  func.func @transform_0(%arg0: i32) -> (i32, i32) {
    %c0_i32 = arith.constant 0 : i32
    %c0_i32_0 = arith.constant 0 : i32
    return %arg0, %c0_i32 : i32, i32
  }
  func.func @transform_1(%arg0: i32) -> (i32, i32) {
    %c0_i32 = arith.constant 0 : i32
    %c0_i32_0 = arith.constant 0 : i32
    %c0_i32_1 = arith.constant 0 : i32
    return %c0_i32, %c0_i32_0 : i32, i32
  }
  func.func @transform_2(%arg0: i32) -> (i32, i32) {
    %c0_i32 = arith.constant 0 : i32
    %c0_i32_0 = arith.constant 0 : i32
    %c0_i32_1 = arith.constant 0 : i32
    return %c0_i32, %c0_i32_0 : i32, i32
  }
  func.func @transform_3(%arg0: i32) -> (i32, i32) {
    %c0_i32 = arith.constant 0 : i32
    %c0_i32_0 = arith.constant 0 : i32
    return %arg0, %c0_i32 : i32, i32
  }
}

module attributes {stable_mosaic.version = 11 : i64} {
  func.func @_layernorm_linear_kernel(%arg0: i32, %arg1: memref<2x32xf32, #tpu.memory_space<vmem>>, %arg2: memref<1x32xf32, #tpu.memory_space<vmem>>, %arg3: memref<1x32xf32, #tpu.memory_space<vmem>>, %arg4: memref<32x128xbf16, #tpu.memory_space<vmem>>, %arg5: memref<1x128xf32, #tpu.memory_space<vmem>>, %arg6: memref<2x128xf32, #tpu.memory_space<vmem>>) attributes {dimension_semantics = [#tpu.dimension_semantics<parallel>], iteration_bounds = array<i64: 1>, scalar_prefetch = 0 : i64, scratch_operands = 0 : i64, tpu.core_type = #tpu.core_type<tc>, window_params = [{transform_indices = @transform_0, window_bounds = array<i64: 2, 32>}, {pipeline_mode = #tpu.pipeline_mode<synchronous>, transform_indices = @transform_1, window_bounds = array<i64: 1, 32>}, {pipeline_mode = #tpu.pipeline_mode<synchronous>, transform_indices = @transform_2, window_bounds = array<i64: 1, 32>}, {pipeline_mode = #tpu.pipeline_mode<synchronous>, transform_indices = @transform_3, window_bounds = array<i64: 32, 128>}, {pipeline_mode = #tpu.pipeline_mode<synchronous>, transform_indices = @transform_4, window_bounds = array<i64: 1, 128>}, {transform_indices = @transform_5, window_bounds = array<i64: 2, 128>}]} {
    %c0 = arith.constant 0 : index
    %c0_0 = arith.constant 0 : index
    %0 = vector.load %arg1[%c0, %c0_0] : memref<2x32xf32, #tpu.memory_space<vmem>>, vector<2x32xf32>
    %cst = arith.constant dense<0.000000e+00> : vector<2xf32>
    %1 = vector.multi_reduction <add>, %0, %cst [1] : vector<2x32xf32> to vector<2xf32>
    %2 = vector.shape_cast %1 : vector<2xf32> to vector<2x1xf32>
    %cst_1 = arith.constant 3.200000e+01 : f32
    %3 = vector.broadcast %cst_1 : f32 to vector<2x1xf32>
    %4 = arith.divf %2, %3 : vector<2x1xf32>
    %5 = vector.broadcast %4 : vector<2x1xf32> to vector<2x32xf32>
    %6 = arith.subf %0, %5 : vector<2x32xf32>
    %7 = vector.broadcast %4 : vector<2x1xf32> to vector<2x32xf32>
    %8 = arith.subf %0, %7 : vector<2x32xf32>
    %9 = arith.mulf %6, %8 : vector<2x32xf32>
    %cst_2 = arith.constant dense<0.000000e+00> : vector<2xf32>
    %10 = vector.multi_reduction <add>, %9, %cst_2 [1] : vector<2x32xf32> to vector<2xf32>
    %11 = vector.shape_cast %10 : vector<2xf32> to vector<2x1xf32>
    %cst_3 = arith.constant 3.200000e+01 : f32
    %12 = vector.broadcast %cst_3 : f32 to vector<2x1xf32>
    %13 = arith.divf %11, %12 : vector<2x1xf32>
    %14 = vector.broadcast %4 : vector<2x1xf32> to vector<2x32xf32>
    %15 = arith.subf %0, %14 : vector<2x32xf32>
    %cst_4 = arith.constant 9.99999974E-6 : f32
    %16 = vector.broadcast %cst_4 : f32 to vector<2x1xf32>
    %17 = arith.addf %13, %16 : vector<2x1xf32>
    %18 = math.rsqrt %17 : vector<2x1xf32>
    %19 = vector.broadcast %18 : vector<2x1xf32> to vector<2x32xf32>
    %20 = arith.mulf %15, %19 : vector<2x32xf32>
    %c0_5 = arith.constant 0 : index
    %c0_6 = arith.constant 0 : index
    %21 = vector.load %arg2[%c0_5, %c0_6] : memref<1x32xf32, #tpu.memory_space<vmem>>, vector<1x32xf32>
    %22 = vector.broadcast %21 : vector<1x32xf32> to vector<2x32xf32>
    %23 = arith.mulf %20, %22 : vector<2x32xf32>
    %c0_7 = arith.constant 0 : index
    %c0_8 = arith.constant 0 : index
    %24 = vector.load %arg3[%c0_7, %c0_8] : memref<1x32xf32, #tpu.memory_space<vmem>>, vector<1x32xf32>
    %25 = vector.broadcast %24 : vector<1x32xf32> to vector<2x32xf32>
    %26 = arith.addf %23, %25 : vector<2x32xf32>
    %27 = arith.truncf %26 : vector<2x32xf32> to vector<2x32xbf16>
    %c0_9 = arith.constant 0 : index
    %c0_10 = arith.constant 0 : index
    %28 = vector.load %arg4[%c0_9, %c0_10] : memref<32x128xbf16, #tpu.memory_space<vmem>>, vector<32x128xbf16>
    %cst_11 = arith.constant dense<0.000000e+00> : vector<2x128xf32>
    %29 = tpu.matmul %27, %28, %cst_11 {dimension_numbers = #tpu.dot_dimension_numbers<[1], [0], [0], [1], [0, 0, 1, 1], [], []>} : vector<2x32xbf16>, vector<32x128xbf16>, vector<2x128xf32> -> vector<2x128xf32>
    %c0_12 = arith.constant 0 : index
    %c0_13 = arith.constant 0 : index
    %30 = vector.load %arg5[%c0_12, %c0_13] : memref<1x128xf32, #tpu.memory_space<vmem>>, vector<1x128xf32>
    %31 = vector.broadcast %30 : vector<1x128xf32> to vector<2x128xf32>
    %32 = arith.addf %29, %31 : vector<2x128xf32>
    %c0_14 = arith.constant 0 : index
    %c0_15 = arith.constant 0 : index
    %33 = vector.load %arg6[%c0_14, %c0_15] : memref<2x128xf32, #tpu.memory_space<vmem>>, vector<2x128xf32>
    tpu.vector_store %arg6[%c0_14, %c0_15], %32 {strides = array<i32>} : memref<2x128xf32, #tpu.memory_space<vmem>>, vector<2x128xf32>,
    return
  }
  func.func @transform_0(%arg0: i32) -> (i32, i32) {
    %c0_i32 = arith.constant 0 : i32
    %c0_i32_0 = arith.constant 0 : i32
    return %arg0, %c0_i32 : i32, i32
  }
  func.func @transform_1(%arg0: i32) -> (i32, i32) {
    %c0_i32 = arith.constant 0 : i32
    %c0_i32_0 = arith.constant 0 : i32
    %c0_i32_1 = arith.constant 0 : i32
    return %c0_i32, %c0_i32_0 : i32, i32
  }
  func.func @transform_2(%arg0: i32) -> (i32, i32) {
    %c0_i32 = arith.constant 0 : i32
    %c0_i32_0 = arith.constant 0 : i32
    %c0_i32_1 = arith.constant 0 : i32
    return %c0_i32, %c0_i32_0 : i32, i32
  }
  func.func @transform_3(%arg0: i32) -> (i32, i32) {
    %c0_i32 = arith.constant 0 : i32
    %c0_i32_0 = arith.constant 0 : i32
    %c0_i32_1 = arith.constant 0 : i32
    return %c0_i32, %c0_i32_0 : i32, i32
  }
  func.func @transform_4(%arg0: i32) -> (i32, i32) {
    %c0_i32 = arith.constant 0 : i32
    %c0_i32_0 = arith.constant 0 : i32
    %c0_i32_1 = arith.constant 0 : i32
    return %c0_i32, %c0_i32_0 : i32, i32
  }
  func.func @transform_5(%arg0: i32) -> (i32, i32) {
    %c0_i32 = arith.constant 0 : i32
    %c0_i32_0 = arith.constant 0 : i32
    return %arg0, %c0_i32 : i32, i32
  }
}

module attributes {stable_mosaic.version = 11 : i64} {
  func.func @_linear_onepass_kernel(%arg0: i32, %arg1: memref<2x64xbf16, #tpu.memory_space<vmem>>, %arg2: memref<64x32xbf16, #tpu.memory_space<vmem>>, %arg3: memref<1x32xf32, #tpu.memory_space<vmem>>, %arg4: memref<2x32xf32, #tpu.memory_space<vmem>>) attributes {dimension_semantics = [#tpu.dimension_semantics<parallel>], iteration_bounds = array<i64: 1>, scalar_prefetch = 0 : i64, scratch_operands = 0 : i64, tpu.core_type = #tpu.core_type<tc>, window_params = [{transform_indices = @transform_0, window_bounds = array<i64: 2, 64>}, {pipeline_mode = #tpu.pipeline_mode<synchronous>, transform_indices = @transform_1, window_bounds = array<i64: 64, 32>}, {pipeline_mode = #tpu.pipeline_mode<synchronous>, transform_indices = @transform_2, window_bounds = array<i64: 1, 32>}, {transform_indices = @transform_3, window_bounds = array<i64: 2, 32>}]} {
    %c0 = arith.constant 0 : index
    %c0_0 = arith.constant 0 : index
    %0 = vector.load %arg1[%c0, %c0_0] : memref<2x64xbf16, #tpu.memory_space<vmem>>, vector<2x64xbf16>
    %c0_1 = arith.constant 0 : index
    %c0_2 = arith.constant 0 : index
    %1 = vector.load %arg2[%c0_1, %c0_2] : memref<64x32xbf16, #tpu.memory_space<vmem>>, vector<64x32xbf16>
    %cst = arith.constant dense<0.000000e+00> : vector<2x32xf32>
    %2 = tpu.matmul %0, %1, %cst {dimension_numbers = #tpu.dot_dimension_numbers<[1], [0], [0], [1], [0, 0, 1, 1], [], []>} : vector<2x64xbf16>, vector<64x32xbf16>, vector<2x32xf32> -> vector<2x32xf32>
    %c0_3 = arith.constant 0 : index
    %c0_4 = arith.constant 0 : index
    %3 = vector.load %arg3[%c0_3, %c0_4] : memref<1x32xf32, #tpu.memory_space<vmem>>, vector<1x32xf32>
    %4 = vector.broadcast %3 : vector<1x32xf32> to vector<2x32xf32>
    %5 = arith.addf %2, %4 : vector<2x32xf32>
    %c0_5 = arith.constant 0 : index
    %c0_6 = arith.constant 0 : index
    %6 = vector.load %arg4[%c0_5, %c0_6] : memref<2x32xf32, #tpu.memory_space<vmem>>, vector<2x32xf32>
    tpu.vector_store %arg4[%c0_5, %c0_6], %5 {strides = array<i32>} : memref<2x32xf32, #tpu.memory_space<vmem>>, vector<2x32xf32>,
    return
  }
  func.func @transform_0(%arg0: i32) -> (i32, i32) {
    %c0_i32 = arith.constant 0 : i32
    %c0_i32_0 = arith.constant 0 : i32
    return %arg0, %c0_i32 : i32, i32
  }
  func.func @transform_1(%arg0: i32) -> (i32, i32) {
    %c0_i32 = arith.constant 0 : i32
    %c0_i32_0 = arith.constant 0 : i32
    %c0_i32_1 = arith.constant 0 : i32
    return %c0_i32, %c0_i32_0 : i32, i32
  }
  func.func @transform_2(%arg0: i32) -> (i32, i32) {
    %c0_i32 = arith.constant 0 : i32
    %c0_i32_0 = arith.constant 0 : i32
    %c0_i32_1 = arith.constant 0 : i32
    return %c0_i32, %c0_i32_0 : i32, i32
  }
  func.func @transform_3(%arg0: i32) -> (i32, i32) {
    %c0_i32 = arith.constant 0 : i32
    %c0_i32_0 = arith.constant 0 : i32
    return %arg0, %c0_i32 : i32, i32
  }
}

module attributes {stable_mosaic.version = 11 : i64} {
  func.func @_layernorm_linear_kernel(%arg0: i32, %arg1: memref<2x32xf32, #tpu.memory_space<vmem>>, %arg2: memref<1x32xf32, #tpu.memory_space<vmem>>, %arg3: memref<1x32xf32, #tpu.memory_space<vmem>>, %arg4: memref<32x1xbf16, #tpu.memory_space<vmem>>, %arg5: memref<1x1xf32, #tpu.memory_space<vmem>>, %arg6: memref<2x1xf32, #tpu.memory_space<vmem>>) attributes {dimension_semantics = [#tpu.dimension_semantics<parallel>], iteration_bounds = array<i64: 1>, scalar_prefetch = 0 : i64, scratch_operands = 0 : i64, tpu.core_type = #tpu.core_type<tc>, window_params = [{transform_indices = @transform_0, window_bounds = array<i64: 2, 32>}, {pipeline_mode = #tpu.pipeline_mode<synchronous>, transform_indices = @transform_1, window_bounds = array<i64: 1, 32>}, {pipeline_mode = #tpu.pipeline_mode<synchronous>, transform_indices = @transform_2, window_bounds = array<i64: 1, 32>}, {pipeline_mode = #tpu.pipeline_mode<synchronous>, transform_indices = @transform_3, window_bounds = array<i64: 32, 1>}, {pipeline_mode = #tpu.pipeline_mode<synchronous>, transform_indices = @transform_4, window_bounds = array<i64: 1, 1>}, {transform_indices = @transform_5, window_bounds = array<i64: 2, 1>}]} {
    %c0 = arith.constant 0 : index
    %c0_0 = arith.constant 0 : index
    %0 = vector.load %arg1[%c0, %c0_0] : memref<2x32xf32, #tpu.memory_space<vmem>>, vector<2x32xf32>
    %cst = arith.constant dense<0.000000e+00> : vector<2xf32>
    %1 = vector.multi_reduction <add>, %0, %cst [1] : vector<2x32xf32> to vector<2xf32>
    %2 = vector.shape_cast %1 : vector<2xf32> to vector<2x1xf32>
    %cst_1 = arith.constant 3.200000e+01 : f32
    %3 = vector.broadcast %cst_1 : f32 to vector<2x1xf32>
    %4 = arith.divf %2, %3 : vector<2x1xf32>
    %5 = vector.broadcast %4 : vector<2x1xf32> to vector<2x32xf32>
    %6 = arith.subf %0, %5 : vector<2x32xf32>
    %7 = vector.broadcast %4 : vector<2x1xf32> to vector<2x32xf32>
    %8 = arith.subf %0, %7 : vector<2x32xf32>
    %9 = arith.mulf %6, %8 : vector<2x32xf32>
    %cst_2 = arith.constant dense<0.000000e+00> : vector<2xf32>
    %10 = vector.multi_reduction <add>, %9, %cst_2 [1] : vector<2x32xf32> to vector<2xf32>
    %11 = vector.shape_cast %10 : vector<2xf32> to vector<2x1xf32>
    %cst_3 = arith.constant 3.200000e+01 : f32
    %12 = vector.broadcast %cst_3 : f32 to vector<2x1xf32>
    %13 = arith.divf %11, %12 : vector<2x1xf32>
    %14 = vector.broadcast %4 : vector<2x1xf32> to vector<2x32xf32>
    %15 = arith.subf %0, %14 : vector<2x32xf32>
    %cst_4 = arith.constant 9.99999974E-6 : f32
    %16 = vector.broadcast %cst_4 : f32 to vector<2x1xf32>
    %17 = arith.addf %13, %16 : vector<2x1xf32>
    %18 = math.rsqrt %17 : vector<2x1xf32>
    %19 = vector.broadcast %18 : vector<2x1xf32> to vector<2x32xf32>
    %20 = arith.mulf %15, %19 : vector<2x32xf32>
    %c0_5 = arith.constant 0 : index
    %c0_6 = arith.constant 0 : index
    %21 = vector.load %arg2[%c0_5, %c0_6] : memref<1x32xf32, #tpu.memory_space<vmem>>, vector<1x32xf32>
    %22 = vector.broadcast %21 : vector<1x32xf32> to vector<2x32xf32>
    %23 = arith.mulf %20, %22 : vector<2x32xf32>
    %c0_7 = arith.constant 0 : index
    %c0_8 = arith.constant 0 : index
    %24 = vector.load %arg3[%c0_7, %c0_8] : memref<1x32xf32, #tpu.memory_space<vmem>>, vector<1x32xf32>
    %25 = vector.broadcast %24 : vector<1x32xf32> to vector<2x32xf32>
    %26 = arith.addf %23, %25 : vector<2x32xf32>
    %27 = arith.truncf %26 : vector<2x32xf32> to vector<2x32xbf16>
    %c0_9 = arith.constant 0 : index
    %c0_10 = arith.constant 0 : index
    %28 = vector.load %arg4[%c0_9, %c0_10] : memref<32x1xbf16, #tpu.memory_space<vmem>>, vector<32x1xbf16>
    %cst_11 = arith.constant dense<0.000000e+00> : vector<2x1xf32>
    %29 = tpu.matmul %27, %28, %cst_11 {dimension_numbers = #tpu.dot_dimension_numbers<[1], [0], [0], [1], [0, 0, 1, 1], [], []>} : vector<2x32xbf16>, vector<32x1xbf16>, vector<2x1xf32> -> vector<2x1xf32>
    %c0_12 = arith.constant 0 : index
    %c0_13 = arith.constant 0 : index
    %30 = vector.load %arg5[%c0_12, %c0_13] : memref<1x1xf32, #tpu.memory_space<vmem>>, vector<1x1xf32>
    %31 = vector.broadcast %30 : vector<1x1xf32> to vector<2x1xf32>
    %32 = arith.addf %29, %31 : vector<2x1xf32>
    %c0_14 = arith.constant 0 : index
    %c0_15 = arith.constant 0 : index
    %33 = vector.load %arg6[%c0_14, %c0_15] : memref<2x1xf32, #tpu.memory_space<vmem>>, vector<2x1xf32>
    tpu.vector_store %arg6[%c0_14, %c0_15], %32 {strides = array<i32>} : memref<2x1xf32, #tpu.memory_space<vmem>>, vector<2x1xf32>,
    return
  }
  func.func @transform_0(%arg0: i32) -> (i32, i32) {
    %c0_i32 = arith.constant 0 : i32
    %c0_i32_0 = arith.constant 0 : i32
    return %arg0, %c0_i32 : i32, i32
  }
  func.func @transform_1(%arg0: i32) -> (i32, i32) {
    %c0_i32 = arith.constant 0 : i32
    %c0_i32_0 = arith.constant 0 : i32
    %c0_i32_1 = arith.constant 0 : i32
    return %c0_i32, %c0_i32_0 : i32, i32
  }
  func.func @transform_2(%arg0: i32) -> (i32, i32) {
    %c0_i32 = arith.constant 0 : i32
    %c0_i32_0 = arith.constant 0 : i32
    %c0_i32_1 = arith.constant 0 : i32
    return %c0_i32, %c0_i32_0 : i32, i32
  }
  func.func @transform_3(%arg0: i32) -> (i32, i32) {
    %c0_i32 = arith.constant 0 : i32
    %c0_i32_0 = arith.constant 0 : i32
    %c0_i32_1 = arith.constant 0 : i32
    return %c0_i32, %c0_i32_0 : i32, i32
  }
  func.func @transform_4(%arg0: i32) -> (i32, i32) {
    %c0_i32 = arith.constant 0 : i32
    %c0_i32_0 = arith.constant 0 : i32
    %c0_i32_1 = arith.constant 0 : i32
    return %c0_i32, %c0_i32_0 : i32, i32
  }
  func.func @transform_5(%arg0: i32) -> (i32, i32) {
    %c0_i32 = arith.constant 0 : i32
    %c0_i32_0 = arith.constant 0 : i32
    return %arg0, %c0_i32 : i32, i32
  }
}

</mosaic_0001>

<llo_original>
// kernel: cross_mamba_both_forward.15
$region0: #{cross_mamba_both_forward.15}
  #allocation0 [shape = 'u32[]', space=smem, size = 0x4, offset = 0x4, fixed_abs, tag = 'smem constant byte address 0x4 - core index']
  #allocation1 [shape = 'u32[144,128]{1,0:T(1,128)}', space=vmem, size = 0x12000, scoped, tag = 'internal scratch']
  %s0 = inlined_call_operand.vmem [shape: bf16[20,64], index: 0, kind: input, shape index: {}]
  %s1 = inlined_call_operand.vmem [shape: bf16[64,32], index: 1, kind: input, shape index: {}]
  %s2 = inlined_call_operand.vmem [shape: f32[1,32], index: 2, kind: input, shape index: {}]
  %s3 = inlined_call_operand.vmem [shape: f32[20,32], index: 3, kind: output, shape index: {}]
  %s4 = sld [smem:[#allocation0]]
  $region22: #{cross_mamba_both_forward.15} parent=0
    _
  %s6 = ssub.s32 1, %s4
  %s7 = scalar_select 0, %s6, %s4
  // Predicated region
  $region2: #{cross_mamba_both_forward.15} parent=0 // pred_check
    _
  $region3: #{cross_mamba_both_forward.15} parent=0 // pred_check_branch
    %9 = sbr.rel (0) target = $region5
  $region4: #{cross_mamba_both_forward.15} parent=0 // pred_region
    _
  $region5: #{cross_mamba_both_forward.15} parent=0 // pred_fallthru
    _
  // Predicated region
  $region6: #{cross_mamba_both_forward.15} parent=0 // pred_check
    _
  $region7: #{cross_mamba_both_forward.15} parent=0 // pred_check_branch
    %11 = sbr.rel (0) target = $region9
  $region8: #{cross_mamba_both_forward.15} parent=0 // pred_region
    _
  $region9: #{cross_mamba_both_forward.15} parent=0 // pred_fallthru
    _
  // Predicated region
  $region10: #{cross_mamba_both_forward.15} parent=0 // pred_check
    _
  $region11: #{cross_mamba_both_forward.15} parent=0 // pred_check_branch
    %13 = sbr.rel (0) target = $region13
  $region12: #{cross_mamba_both_forward.15} parent=0 // pred_region
    _
  $region13: #{cross_mamba_both_forward.15} parent=0 // pred_fallthru
    _
  %v15 = vld [vmem:[%s0] sm:$0xf]
  %v16 = vld [vmem:[%s0 + $0x4] sm:$0xf]
  %v17 = vld [vmem:[%s0 + $0x8] sm:$0x3]
  %v18 = vld [vmem:[%s1] sm:$0xf]
  %v19 = vld [vmem:[%s1 + $0x4] sm:$0xf]
  %v20 = vld [vmem:[%s1 + $0x8] sm:$0xf]
  %v21 = vld [vmem:[%s1 + $0xc] sm:$0xf]
  %v22 = vld [vmem:[%s1 + $0x10] sm:$0xf]
  %v23 = vld [vmem:[%s1 + $0x14] sm:$0xf]
  %v24 = vld [vmem:[%s1 + $0x18] sm:$0xf]
  %v25 = vld [vmem:[%s1 + $0x1c] sm:$0xf]
  %v26 = vld [vmem:[%s2] sm:$0x1]
  %v28 = vlaneseq
  %v29 = vshrl.u32 %v28, 7
  %v30 = vsub.s32 0, %v29
  %v31 = vrot.slane %v26, %v30
  %v36 = vunpack.c.l.b16 %v15
  %v37 = vunpack.c.l.b16 %v16
  %v38 = vunpack.c.l.b16 %v17
  %v39 = vpack.c.b16 %v37, %v36
  %v40 = vpack.c.b16 %v38, %v38
  %v49 = vunpack.c.l.b16 %v18
  %v50 = vunpack.c.l.b16 %v19
  %v51 = vunpack.c.l.b16 %v20
  %v52 = vunpack.c.l.b16 %v21
  %v53 = vunpack.c.l.b16 %v22
  %v54 = vunpack.c.l.b16 %v23
  %v55 = vunpack.c.l.b16 %v24
  %v56 = vunpack.c.l.b16 %v25
  %v57 = vpack.c.b16 %v50, %v49
  %v58 = vpack.c.b16 %v52, %v51
  %v59 = vpack.c.b16 %v54, %v53
  %v60 = vpack.c.b16 %v56, %v55
  %vm65 = vcmask 523264
  %v67 = vsel %vm65, %v39, 0
  %v70 = vsel %vm65, %v40, 0
  %72 = vmatprep.subr.bf16.mxu0 0
  %73 = vmatpush1.bf16.msra.mxu0 %v57
  %74 = vmatprep.subr.bf16.mxu0 0
  %75 = vmatpush1.bf16.msra.mxu0 %v58
  %76 = vmatprep.subr.bf16.mxu0 0
  %77 = vmatpush1.bf16.msra.mxu0 %v59
  %78 = vmatprep.subr.bf16.mxu0 0
  %79 = vmatpush1.bf16.msra.mxu0 %v60
  %80 = vmatprep.subr.bf16.mxu0 0
  %81 = vmatpush1.bf16.msra.mxu0 0
  %82 = vmatprep.subr.bf16.mxu0 0
  %83 = vmatpush1.bf16.msra.mxu0 0
  %84 = vmatprep.subr.bf16.mxu0 0
  %85 = vmatpush1.bf16.msra.mxu0 0
  %86 = vmatprep.subr.bf16.mxu0 0
  %87 = vmatpush1.bf16.msra.mxu0 0
  %88 = vmatprep.subr.bf16.mxu0 0
  %89 = vmatpush1.bf16.msra.mxu0 0
  %90 = vmatprep.subr.bf16.mxu0 0
  %91 = vmatpush1.bf16.msra.mxu0 0
  %92 = vmatprep.subr.bf16.mxu0 0
  %93 = vmatpush1.bf16.msra.mxu0 0
  %94 = vmatprep.subr.bf16.mxu0 0
  %95 = vmatpush1.bf16.msra.mxu0 0
  %96 = vmatprep.subr.bf16.mxu0 0
  %97 = vmatpush1.bf16.msra.mxu0 0
  %98 = vmatprep.subr.bf16.mxu0 0
  %99 = vmatpush1.bf16.msra.mxu0 0
  %100 = vmatprep.subr.bf16.mxu0 0
  %101 = vmatpush1.bf16.msra.mxu0 0
  %102 = vmatprep.subr.bf16.mxu0 0
  %103 = vmatpush1.bf16.msra.mxu0 0
  %104 = vmatprep.mubr.bf16.mxu0 0
  %105 = vmatmul.mubr.bf16.gmra.mrb[0].mxu0 %v67
  %v106 = vpop.f32.mrb[0].mxu0
  %v107 = vadd.f32 %v31, %v106
  %v108 = vpop.f32.mrb[0].mxu0
  %v109 = vpop.f32.mrb[0].mxu0
  %v110 = vadd.f32 %v31, %v109
  %v111 = vpop.f32.mrb[0].mxu0
  %112 = vmatprep.mubr.bf16.mxu0 0
  %113 = vmatmul.mubr.bf16.gmra.mrb[0].mxu0 %v70
  %v114 = vpop.f32.mrb[0].mxu0
  %v115 = vadd.f32 %v31, %v114
  %v116 = vpop.f32.mrb[0].mxu0
  %v117 = vpop.f32.mrb[0].mxu0
  %v118 = vpop.f32.mrb[0].mxu0
  %119 = vdwg.mxu0
  %vm120 = vcmask 261120
  %121 = vst.msk [vmem:[%s3] sm:$0xff] %vm120, %v107
  %122 = vst.msk [vmem:[%s3 + $0x8] sm:$0xff] %vm120, %v110
  %vm123 = vcmask 257024
  %124 = vst.msk [vmem:[%s3 + $0x10] sm:$0xf] %vm123, %v115
  // Predicated region
  $region14: #{cross_mamba_both_forward.15} parent=0 // pred_check
    _
  $region15: #{cross_mamba_both_forward.15} parent=0 // pred_check_branch
    %126 = sbr.rel (0) target = $region17
  $region16: #{cross_mamba_both_forward.15} parent=0 // pred_region
    _
  $region17: #{cross_mamba_both_forward.15} parent=0 // pred_fallthru
    _
  // Predicated region
  $region18: #{cross_mamba_both_forward.15} parent=0 // pred_check
    _
  $region19: #{cross_mamba_both_forward.15} parent=0 // pred_check_branch
    %128 = sbr.rel (0) target = $region21
  $region20: #{cross_mamba_both_forward.15} parent=0 // pred_region
    _
  $region21: #{cross_mamba_both_forward.15} parent=0 // pred_fallthru
    _

// kernel: cross_mamba_both_forward.13
$region0: #{cross_mamba_both_forward.13}
  #allocation0 [shape = 'u32[]', space=smem, size = 0x4, offset = 0x4, fixed_abs, tag = 'smem constant byte address 0x4 - core index']
  #allocation1 [shape = 'u32[144,128]{1,0:T(1,128)}', space=vmem, size = 0x12000, scoped, tag = 'internal scratch']
  %s0 = inlined_call_operand.vmem [shape: f32[20,32], index: 0, kind: input, shape index: {}]
  %s1 = inlined_call_operand.vmem [shape: f32[1,32], index: 1, kind: input, shape index: {}]
  %s2 = inlined_call_operand.vmem [shape: bf16[32,128], index: 2, kind: input, shape index: {}]
  %s3 = inlined_call_operand.vmem [shape: bf16[20,128], index: 3, kind: output, shape index: {}]
  %s4 = sld [smem:[#allocation0]]
  $region22: #{cross_mamba_both_forward.13} parent=0
    _
  %s6 = ssub.s32 1, %s4
  %s7 = scalar_select 0, %s6, %s4
  // Predicated region
  $region2: #{cross_mamba_both_forward.13} parent=0 // pred_check
    _
  $region3: #{cross_mamba_both_forward.13} parent=0 // pred_check_branch
    %9 = sbr.rel (0) target = $region5
  $region4: #{cross_mamba_both_forward.13} parent=0 // pred_region
    _
  $region5: #{cross_mamba_both_forward.13} parent=0 // pred_fallthru
    _
  // Predicated region
  $region6: #{cross_mamba_both_forward.13} parent=0 // pred_check
    _
  $region7: #{cross_mamba_both_forward.13} parent=0 // pred_check_branch
    %11 = sbr.rel (0) target = $region9
  $region8: #{cross_mamba_both_forward.13} parent=0 // pred_region
    _
  $region9: #{cross_mamba_both_forward.13} parent=0 // pred_fallthru
    _
  // Predicated region
  $region10: #{cross_mamba_both_forward.13} parent=0 // pred_check
    _
  $region11: #{cross_mamba_both_forward.13} parent=0 // pred_check_branch
    %13 = sbr.rel (0) target = $region13
  $region12: #{cross_mamba_both_forward.13} parent=0 // pred_region
    _
  $region13: #{cross_mamba_both_forward.13} parent=0 // pred_fallthru
    _
  %v15 = vld [vmem:[%s0] sm:$0xff]
  %v16 = vld [vmem:[%s0 + $0x8] sm:$0xff]
  %v17 = vld [vmem:[%s0 + $0x10] sm:$0xf]
  %v18 = vmul.f32 %v15, %v15
  %v19 = vmul.f32 %v16, %v16
  %v20 = vmul.f32 %v17, %v17
  %vm21 = vcmask 261120
  %v22 = vsel %vm21, %v18, 0.0
  %23 = vadd.xlane.f32.xlu0 %v22
  %v24 = vpop.xlane.xlu0 %23
  %v25 = vsel %vm21, %v19, 0.0
  %26 = vadd.xlane.f32.xlu0 %v25
  %v27 = vpop.xlane.xlu0 %26
  %vm28 = vcmask 257024
  %v29 = vsel %vm28, %v20, 0.0
  %30 = vadd.xlane.f32.xlu0 %v29
  %v31 = vpop.xlane.xlu0 %30
  %v32 = vrcp.pop 32.0
  %v33 = vmul.f32 %v24, %v32
  %v34 = vmul.f32 %v27, %v32
  %v35 = vmul.f32 %v31, %v32
  %v36 = vadd.f32 %v33, 1e-05
  %v37 = vadd.f32 %v34, 1e-05
  %v38 = vadd.f32 %v35, 1e-05
  %v39 = vrsqrt.pop %v36
  %v40 = vrsqrt.pop %v37
  %v41 = vrsqrt.pop %v38
  %v42 = vmul.f32 %v15, %v39
  %v43 = vmul.f32 %v16, %v40
  %v44 = vmul.f32 %v17, %v41
  %v45 = vld [vmem:[%s1] sm:$0x1]
  %v47 = vlaneseq
  %v48 = vshrl.u32 %v47, 7
  %v49 = vsub.s32 0, %v48
  %v50 = vrot.slane %v45, %v49
  %v52 = vmul.f32 %v42, %v50
  %v53 = vmul.f32 %v43, %v50
  %v54 = vmul.f32 %v44, %v50
  %v55 = vpack.c.bf16 %v53, %v52
  %v56 = vpack.c.bf16 %v54, %v54
  %v57 = vld [vmem:[%s2] sm:$0xf]
  %v58 = vld [vmem:[%s2 + $0x4] sm:$0xf]
  %v59 = vld [vmem:[%s2 + $0x8] sm:$0xf]
  %v60 = vld [vmem:[%s2 + $0xc] sm:$0xf]
  %v65 = vunpack.c.l.b16 %v57
  %v66 = vunpack.c.l.b16 %v58
  %v67 = vunpack.c.l.b16 %v59
  %v68 = vunpack.c.l.b16 %v60
  %v69 = vpack.c.b16 %v66, %v65
  %v70 = vpack.c.b16 %v68, %v67
  %v74 = vsel %vm21, %v55, 0
  %v77 = vsel %vm21, %v56, 0
  %79 = vmatprep.subr.bf16.mxu0 0
  %80 = vmatpush1.bf16.msra.mxu0 %v69
  %81 = vmatprep.subr.bf16.mxu0 0
  %82 = vmatpush1.bf16.msra.mxu0 %v70
  %83 = vmatprep.subr.bf16.mxu0 0
  %84 = vmatpush1.bf16.msra.mxu0 0
  %85 = vmatprep.subr.bf16.mxu0 0
  %86 = vmatpush1.bf16.msra.mxu0 0
  %87 = vmatprep.subr.bf16.mxu0 0
  %88 = vmatpush1.bf16.msra.mxu0 0
  %89 = vmatprep.subr.bf16.mxu0 0
  %90 = vmatpush1.bf16.msra.mxu0 0
  %91 = vmatprep.subr.bf16.mxu0 0
  %92 = vmatpush1.bf16.msra.mxu0 0
  %93 = vmatprep.subr.bf16.mxu0 0
  %94 = vmatpush1.bf16.msra.mxu0 0
  %95 = vmatprep.subr.bf16.mxu0 0
  %96 = vmatpush1.bf16.msra.mxu0 0
  %97 = vmatprep.subr.bf16.mxu0 0
  %98 = vmatpush1.bf16.msra.mxu0 0
  %99 = vmatprep.subr.bf16.mxu0 0
  %100 = vmatpush1.bf16.msra.mxu0 0
  %101 = vmatprep.subr.bf16.mxu0 0
  %102 = vmatpush1.bf16.msra.mxu0 0
  %103 = vmatprep.subr.bf16.mxu0 0
  %104 = vmatpush1.bf16.msra.mxu0 0
  %105 = vmatprep.subr.bf16.mxu0 0
  %106 = vmatpush1.bf16.msra.mxu0 0
  %107 = vmatprep.subr.bf16.mxu0 0
  %108 = vmatpush1.bf16.msra.mxu0 0
  %109 = vmatprep.subr.bf16.mxu0 0
  %110 = vmatpush1.bf16.msra.mxu0 0
  %111 = vmatprep.mubr.bf16.mxu0 0
  %112 = vmatmul.mubr.bf16.gmra.mrb[0].mxu0 %v74
  %v113 = vpop.f32.mrb[0].mxu0
  %v114 = vadd.f32 0.0, %v113
  %v115 = vpop.f32.mrb[0].mxu0
  %v116 = vpop.f32.mrb[0].mxu0
  %v117 = vadd.f32 0.0, %v116
  %v118 = vpop.f32.mrb[0].mxu0
  %119 = vmatprep.mubr.bf16.mxu0 0
  %120 = vmatmul.mubr.bf16.gmra.mrb[0].mxu0 %v77
  %v121 = vpop.f32.mrb[0].mxu0
  %v122 = vadd.f32 0.0, %v121
  %v123 = vpop.f32.mrb[0].mxu0
  %v124 = vpop.f32.mrb[0].mxu0
  %v125 = vpop.f32.mrb[0].mxu0
  %126 = vdwg.mxu0
  %v127 = vpack.c.bf16 %v117, %v114
  %v128 = vpack.c.bf16 %v122, %v122
  %v131 = vunpack.c.l.b16 %v127
  %v132 = vunpack.c.h.b16 %v127
  %v133 = vunpack.c.l.b16 %v128
  %v134 = vpack.c.b16 %v131, %v131
  %v135 = vpack.c.b16 %v132, %v132
  %v136 = vpack.c.b16 %v133, %v133
  %140 = vst [vmem:[%s3] sm:$0xf] %v134
  %141 = vst [vmem:[%s3 + $0x4] sm:$0xf] %v135
  %142 = vst [vmem:[%s3 + $0x8] sm:$0x3] %v136
  // Predicated region
  $region14: #{cross_mamba_both_forward.13} parent=0 // pred_check
    _
  $region15: #{cross_mamba_both_forward.13} parent=0 // pred_check_branch
    %144 = sbr.rel (0) target = $region17
  $region16: #{cross_mamba_both_forward.13} parent=0 // pred_region
    _
  $region17: #{cross_mamba_both_forward.13} parent=0 // pred_fallthru
    _
  // Predicated region
  $region18: #{cross_mamba_both_forward.13} parent=0 // pred_check
    _
  $region19: #{cross_mamba_both_forward.13} parent=0 // pred_check_branch
    %146 = sbr.rel (0) target = $region21
  $region20: #{cross_mamba_both_forward.13} parent=0 // pred_region
    _
  $region21: #{cross_mamba_both_forward.13} parent=0 // pred_fallthru
    _

// kernel: cross_mamba_both_forward.19
$region0: #{cross_mamba_both_forward.19}
  #allocation0 [shape = 'u32[]', space=smem, size = 0x4, offset = 0x4, fixed_abs, tag = 'smem constant byte address 0x4 - core index']
  #allocation1 [shape = 'u32[144,128]{1,0:T(1,128)}', space=vmem, size = 0x12000, scoped, tag = 'internal scratch']
  %s0 = inlined_call_operand.vmem [shape: bf16[2,32], index: 0, kind: input, shape index: {}]
  %s1 = inlined_call_operand.vmem [shape: bf16[32,32], index: 1, kind: input, shape index: {}]
  %s2 = inlined_call_operand.vmem [shape: f32[1,32], index: 2, kind: input, shape index: {}]
  %s3 = inlined_call_operand.vmem [shape: f32[2,32], index: 3, kind: output, shape index: {}]
  %s4 = sld [smem:[#allocation0]]
  $region22: #{cross_mamba_both_forward.19} parent=0
    _
  %s6 = ssub.s32 1, %s4
  %s7 = scalar_select 0, %s6, %s4
  // Predicated region
  $region2: #{cross_mamba_both_forward.19} parent=0 // pred_check
    _
  $region3: #{cross_mamba_both_forward.19} parent=0 // pred_check_branch
    %9 = sbr.rel (0) target = $region5
  $region4: #{cross_mamba_both_forward.19} parent=0 // pred_region
    _
  $region5: #{cross_mamba_both_forward.19} parent=0 // pred_fallthru
    _
  // Predicated region
  $region6: #{cross_mamba_both_forward.19} parent=0 // pred_check
    _
  $region7: #{cross_mamba_both_forward.19} parent=0 // pred_check_branch
    %11 = sbr.rel (0) target = $region9
  $region8: #{cross_mamba_both_forward.19} parent=0 // pred_region
    _
  $region9: #{cross_mamba_both_forward.19} parent=0 // pred_fallthru
    _
  // Predicated region
  $region10: #{cross_mamba_both_forward.19} parent=0 // pred_check
    _
  $region11: #{cross_mamba_both_forward.19} parent=0 // pred_check_branch
    %13 = sbr.rel (0) target = $region13
  $region12: #{cross_mamba_both_forward.19} parent=0 // pred_region
    _
  $region13: #{cross_mamba_both_forward.19} parent=0 // pred_fallthru
    _
  %v15 = vld [vmem:[%s0] sm:$0x1]
  %v16 = vld [vmem:[%s1] sm:$0xf]
  %v17 = vld [vmem:[%s1 + $0x4] sm:$0xf]
  %v18 = vld [vmem:[%s1 + $0x8] sm:$0xf]
  %v19 = vld [vmem:[%s1 + $0xc] sm:$0xf]
  %v20 = vld [vmem:[%s2] sm:$0x1]
  %v22 = vlaneseq
  %v23 = vshrl.u32 %v22, 7
  %v24 = vsub.s32 0, %v23
  %v25 = vrot.slane %v20, %v24
  %v31 = vunpack.c.l.b16 %v16
  %v32 = vunpack.c.l.b16 %v17
  %v33 = vunpack.c.l.b16 %v18
  %v34 = vunpack.c.l.b16 %v19
  %v35 = vpack.c.b16 %v32, %v31
  %v36 = vpack.c.b16 %v34, %v33
  %vm39 = vcmask 261120
  %v41 = vsel %vm39, %v15, 0
  %43 = vmatprep.subr.bf16.mxu0 0
  %44 = vmatpush1.bf16.msra.mxu0 %v35
  %45 = vmatprep.subr.bf16.mxu0 0
  %46 = vmatpush1.bf16.msra.mxu0 %v36
  %47 = vmatprep.subr.bf16.mxu0 0
  %48 = vmatpush1.bf16.msra.mxu0 0
  %49 = vmatprep.subr.bf16.mxu0 0
  %50 = vmatpush1.bf16.msra.mxu0 0
  %51 = vmatprep.subr.bf16.mxu0 0
  %52 = vmatpush1.bf16.msra.mxu0 0
  %53 = vmatprep.subr.bf16.mxu0 0
  %54 = vmatpush1.bf16.msra.mxu0 0
  %55 = vmatprep.subr.bf16.mxu0 0
  %56 = vmatpush1.bf16.msra.mxu0 0
  %57 = vmatprep.subr.bf16.mxu0 0
  %58 = vmatpush1.bf16.msra.mxu0 0
  %59 = vmatprep.subr.bf16.mxu0 0
  %60 = vmatpush1.bf16.msra.mxu0 0
  %61 = vmatprep.subr.bf16.mxu0 0
  %62 = vmatpush1.bf16.msra.mxu0 0
  %63 = vmatprep.subr.bf16.mxu0 0
  %64 = vmatpush1.bf16.msra.mxu0 0
  %65 = vmatprep.subr.bf16.mxu0 0
  %66 = vmatpush1.bf16.msra.mxu0 0
  %67 = vmatprep.subr.bf16.mxu0 0
  %68 = vmatpush1.bf16.msra.mxu0 0
  %69 = vmatprep.subr.bf16.mxu0 0
  %70 = vmatpush1.bf16.msra.mxu0 0
  %71 = vmatprep.subr.bf16.mxu0 0
  %72 = vmatpush1.bf16.msra.mxu0 0
  %73 = vmatprep.subr.bf16.mxu0 0
  %74 = vmatpush1.bf16.msra.mxu0 0
  %75 = vmatprep.mubr.bf16.mxu0 0
  %76 = vmatmul.mubr.bf16.gmra.mrb[0].mxu0 %v41
  %v77 = vpop.f32.mrb[0].mxu0
  %v78 = vadd.f32 %v25, %v77
  %v79 = vpop.f32.mrb[0].mxu0
  %v80 = vpop.f32.mrb[0].mxu0
  %v81 = vpop.f32.mrb[0].mxu0
  %82 = vdwg.mxu0
  %vm83 = vcmask 254976
  %84 = vst.msk [vmem:[%s3] sm:$0x3] %vm83, %v78
  // Predicated region
  $region14: #{cross_mamba_both_forward.19} parent=0 // pred_check
    _
  $region15: #{cross_mamba_both_forward.19} parent=0 // pred_check_branch
    %86 = sbr.rel (0) target = $region17
  $region16: #{cross_mamba_both_forward.19} parent=0 // pred_region
    _
  $region17: #{cross_mamba_both_forward.19} parent=0 // pred_fallthru
    _
  // Predicated region
  $region18: #{cross_mamba_both_forward.19} parent=0 // pred_check
    _
  $region19: #{cross_mamba_both_forward.19} parent=0 // pred_check_branch
    %88 = sbr.rel (0) target = $region21
  $region20: #{cross_mamba_both_forward.19} parent=0 // pred_region
    _
  $region21: #{cross_mamba_both_forward.19} parent=0 // pred_fallthru
    _

// kernel: cross_mamba_both_forward.14
$region0: #{cross_mamba_both_forward.14}
  #allocation0 [shape = 'u32[]', space=smem, size = 0x4, offset = 0x4, fixed_abs, tag = 'smem constant byte address 0x4 - core index']
  #allocation1 [shape = 'u32[144,128]{1,0:T(1,128)}', space=vmem, size = 0x12000, scoped, tag = 'internal scratch']
  #allocation2 [shape = 'f32[13,64]{1,0:T(8,128)}', space=vmem, size = 0x2000, scoped, tag = 'scratch operand']
  %s0 = inlined_call_operand.vmem [shape: bf16[2,10,128], index: 0, kind: input, shape index: {}]
  %s1 = inlined_call_operand.vmem [shape: f32[4,64], index: 1, kind: input, shape index: {}]
  %s2 = inlined_call_operand.vmem [shape: f32[1,64], index: 2, kind: input, shape index: {}]
  %s3 = inlined_call_operand.vmem [shape: bf16[64,2], index: 3, kind: input, shape index: {}]
  %s4 = inlined_call_operand.vmem [shape: bf16[32,64], index: 4, kind: input, shape index: {}]
  %s5 = inlined_call_operand.vmem [shape: f32[2,64], index: 5, kind: input, shape index: {}]
  %s6 = inlined_call_operand.vmem [shape: f32[1,64], index: 6, kind: input, shape index: {}]
  %s7 = inlined_call_operand.vmem [shape: f32[16,64], index: 7, kind: input, shape index: {}]
  %s8 = inlined_call_operand.vmem [shape: f32[1,64], index: 8, kind: input, shape index: {}]
  %s9 = inlined_call_operand.vmem [shape: bf16[2,10,64], index: 9, kind: output, shape index: {}]
  %s10 = sld [smem:[#allocation0]]
  $region69: #{cross_mamba_both_forward.14} parent=0
    _
  %s12 = ssub.s32 1, %s10
  %s13 = scalar_select 0, %s12, %s10
  loop: start=0, step=1, limit=4
  $region2: #{cross_mamba_both_forward.14} parent=0 // loop_pre_header
    _
  $region3: #{cross_mamba_both_forward.14} parent=0 // loop_header
    %s15 = sphi 0, %s19
    %p16 = scmp.ge.s32.totalorder %s15, 4
    %s25 = sphi 0, %s27
    %s28 = sphi 0, %s25
    %s29 = sphi 0, %s28
    %s45 = sphi 0, %s29
    %s49 = sphi 0, %s49
    %s51 = sphi 0, %s49
    %s52 = sphi 0, %s51
    %s66 = sphi 0, %s52
    %s70 = sphi 0, %s70
    %s72 = sphi 0, %s70
    %s73 = sphi 0, %s72
    %s87 = sphi 0, %s73
    %s91 = sphi 0, %s91
    %s93 = sphi 0, %s91
    %s94 = sphi 0, %s93
    %s108 = sphi 0, %s94
    %s112 = sphi 0, %s112
    %s114 = sphi 0, %s112
    %s115 = sphi 0, %s114
    %s129 = sphi 0, %s115
    %s133 = sphi 0, %s133
    %s135 = sphi 0, %s133
    %s136 = sphi 0, %s135
    %s150 = sphi 0, %s136
    %s154 = sphi 0, %s154
    %s156 = sphi 0, %s154
    %s157 = sphi 0, %s156
    %s171 = sphi 0, %s157
    %s175 = sphi 0, %s175
    %s177 = sphi 0, %s175
    %s178 = sphi 0, %s177
    %s192 = sphi 0, %s178
    %s196 = sphi 0, %s196
    %s198 = sphi 0, %s196
    %s199 = sphi 0, %s198
    %s213 = sphi 0, %s199
    %s219 = sphi 0, %s221
    %s222 = sphi 0, %s219
    %s223 = sphi 0, %s222
    %s239 = sphi 0, %s223
  $region4: #{cross_mamba_both_forward.14} parent=0 // loop_header_branch
    %18 = sbr.rel (%p16) target = $region8
  $region5: #{cross_mamba_both_forward.14} parent=0 // loop_body
    %s20 = ssub.s32 %s15, 1
    %s21 = ssub.s32 %s15, 2
    %s22 = sadd.s32 %s15, 1
    %s23 = ssub.s32 %s15, %s22
    %p24 = scmp.eq.s32.totalorder %s23, 0
    %s26 = sadd.s32 %s25, 1
    %s27 = scalar_select %p24, %s25, %s26
    %p30 = pneg %p24
    %p31 = scmp.eq.s32.totalorder %s15, 1
    %p32 = por %p30, %p31
    %p33 = scmp.ne.s32.totalorder %s25, %s28
    %p34 = scmp.eq.s32.totalorder %s15, 0
    %p35 = por %p33, %p34
    %p36 = scmp.ne.s32.totalorder %s25, %s28
    %p37 = scmp.eq.s32.totalorder %s20, 1
    %p38 = por %p36, %p37
    %p39 = scmp.ne.s32.totalorder %s28, %s29
    %p40 = scmp.eq.s32.totalorder %s20, 0
    %p41 = por %p39, %p40
    %p42 = scmp.ne.s32.totalorder %s28, %s29
    %p43 = scmp.eq.s32.totalorder %s21, 1
    %p44 = por %p42, %p43
    %p46 = scmp.ne.s32.totalorder %s29, %s45
    %p47 = scmp.eq.s32.totalorder %s21, 0
    %p48 = por %p46, %p47
    %s50 = sadd.s32 %s49, 1
    %p53 = scmp.eq.s32.totalorder %s15, 1
    %p54 = scmp.ne.s32.totalorder %s49, %s51
    %p55 = scmp.eq.s32.totalorder %s15, 0
    %p56 = por %p54, %p55
    %p57 = scmp.ne.s32.totalorder %s49, %s51
    %p58 = scmp.eq.s32.totalorder %s20, 1
    %p59 = por %p57, %p58
    %p60 = scmp.ne.s32.totalorder %s51, %s52
    %p61 = scmp.eq.s32.totalorder %s20, 0
    %p62 = por %p60, %p61
    %p63 = scmp.ne.s32.totalorder %s51, %s52
    %p64 = scmp.eq.s32.totalorder %s21, 1
    %p65 = por %p63, %p64
    %p67 = scmp.ne.s32.totalorder %s52, %s66
    %p68 = scmp.eq.s32.totalorder %s21, 0
    %p69 = por %p67, %p68
    %s71 = sadd.s32 %s70, 1
    %p74 = scmp.eq.s32.totalorder %s15, 1
    %p75 = scmp.ne.s32.totalorder %s70, %s72
    %p76 = scmp.eq.s32.totalorder %s15, 0
    %p77 = por %p75, %p76
    %p78 = scmp.ne.s32.totalorder %s70, %s72
    %p79 = scmp.eq.s32.totalorder %s20, 1
    %p80 = por %p78, %p79
    %p81 = scmp.ne.s32.totalorder %s72, %s73
    %p82 = scmp.eq.s32.totalorder %s20, 0
    %p83 = por %p81, %p82
    %p84 = scmp.ne.s32.totalorder %s72, %s73
    %p85 = scmp.eq.s32.totalorder %s21, 1
    %p86 = por %p84, %p85
    %p88 = scmp.ne.s32.totalorder %s73, %s87
    %p89 = scmp.eq.s32.totalorder %s21, 0
    %p90 = por %p88, %p89
    %s92 = sadd.s32 %s91, 1
    %p95 = scmp.eq.s32.totalorder %s15, 1
    %p96 = scmp.ne.s32.totalorder %s91, %s93
    %p97 = scmp.eq.s32.totalorder %s15, 0
    %p98 = por %p96, %p97
    %p99 = scmp.ne.s32.totalorder %s91, %s93
    %p100 = scmp.eq.s32.totalorder %s20, 1
    %p101 = por %p99, %p100
    %p102 = scmp.ne.s32.totalorder %s93, %s94
    %p103 = scmp.eq.s32.totalorder %s20, 0
    %p104 = por %p102, %p103
    %p105 = scmp.ne.s32.totalorder %s93, %s94
    %p106 = scmp.eq.s32.totalorder %s21, 1
    %p107 = por %p105, %p106
    %p109 = scmp.ne.s32.totalorder %s94, %s108
    %p110 = scmp.eq.s32.totalorder %s21, 0
    %p111 = por %p109, %p110
    %s113 = sadd.s32 %s112, 1
    %p116 = scmp.eq.s32.totalorder %s15, 1
    %p117 = scmp.ne.s32.totalorder %s112, %s114
    %p118 = scmp.eq.s32.totalorder %s15, 0
    %p119 = por %p117, %p118
    %p120 = scmp.ne.s32.totalorder %s112, %s114
    %p121 = scmp.eq.s32.totalorder %s20, 1
    %p122 = por %p120, %p121
    %p123 = scmp.ne.s32.totalorder %s114, %s115
    %p124 = scmp.eq.s32.totalorder %s20, 0
    %p125 = por %p123, %p124
    %p126 = scmp.ne.s32.totalorder %s114, %s115
    %p127 = scmp.eq.s32.totalorder %s21, 1
    %p128 = por %p126, %p127
    %p130 = scmp.ne.s32.totalorder %s115, %s129
    %p131 = scmp.eq.s32.totalorder %s21, 0
    %p132 = por %p130, %p131
    %s134 = sadd.s32 %s133, 1
    %p137 = scmp.eq.s32.totalorder %s15, 1
    %p138 = scmp.ne.s32.totalorder %s133, %s135
    %p139 = scmp.eq.s32.totalorder %s15, 0
    %p140 = por %p138, %p139
    %p141 = scmp.ne.s32.totalorder %s133, %s135
    %p142 = scmp.eq.s32.totalorder %s20, 1
    %p143 = por %p141, %p142
    %p144 = scmp.ne.s32.totalorder %s135, %s136
    %p145 = scmp.eq.s32.totalorder %s20, 0
    %p146 = por %p144, %p145
    %p147 = scmp.ne.s32.totalorder %s135, %s136
    %p148 = scmp.eq.s32.totalorder %s21, 1
    %p149 = por %p147, %p148
    %p151 = scmp.ne.s32.totalorder %s136, %s150
    %p152 = scmp.eq.s32.totalorder %s21, 0
    %p153 = por %p151, %p152
    %s155 = sadd.s32 %s154, 1
    %p158 = scmp.eq.s32.totalorder %s15, 1
    %p159 = scmp.ne.s32.totalorder %s154, %s156
    %p160 = scmp.eq.s32.totalorder %s15, 0
    %p161 = por %p159, %p160
    %p162 = scmp.ne.s32.totalorder %s154, %s156
    %p163 = scmp.eq.s32.totalorder %s20, 1
    %p164 = por %p162, %p163
    %p165 = scmp.ne.s32.totalorder %s156, %s157
    %p166 = scmp.eq.s32.totalorder %s20, 0
    %p167 = por %p165, %p166
    %p168 = scmp.ne.s32.totalorder %s156, %s157
    %p169 = scmp.eq.s32.totalorder %s21, 1
    %p170 = por %p168, %p169
    %p172 = scmp.ne.s32.totalorder %s157, %s171
    %p173 = scmp.eq.s32.totalorder %s21, 0
    %p174 = por %p172, %p173
    %s176 = sadd.s32 %s175, 1
    %p179 = scmp.eq.s32.totalorder %s15, 1
    %p180 = scmp.ne.s32.totalorder %s175, %s177
    %p181 = scmp.eq.s32.totalorder %s15, 0
    %p182 = por %p180, %p181
    %p183 = scmp.ne.s32.totalorder %s175, %s177
    %p184 = scmp.eq.s32.totalorder %s20, 1
    %p185 = por %p183, %p184
    %p186 = scmp.ne.s32.totalorder %s177, %s178
    %p187 = scmp.eq.s32.totalorder %s20, 0
    %p188 = por %p186, %p187
    %p189 = scmp.ne.s32.totalorder %s177, %s178
    %p190 = scmp.eq.s32.totalorder %s21, 1
    %p191 = por %p189, %p190
    %p193 = scmp.ne.s32.totalorder %s178, %s192
    %p194 = scmp.eq.s32.totalorder %s21, 0
    %p195 = por %p193, %p194
    %s197 = sadd.s32 %s196, 1
    %p200 = scmp.eq.s32.totalorder %s15, 1
    %p201 = scmp.ne.s32.totalorder %s196, %s198
    %p202 = scmp.eq.s32.totalorder %s15, 0
    %p203 = por %p201, %p202
    %p204 = scmp.ne.s32.totalorder %s196, %s198
    %p205 = scmp.eq.s32.totalorder %s20, 1
    %p206 = por %p204, %p205
    %p207 = scmp.ne.s32.totalorder %s198, %s199
    %p208 = scmp.eq.s32.totalorder %s20, 0
    %p209 = por %p207, %p208
    %p210 = scmp.ne.s32.totalorder %s198, %s199
    %p211 = scmp.eq.s32.totalorder %s21, 1
    %p212 = por %p210, %p211
    %p214 = scmp.ne.s32.totalorder %s199, %s213
    %p215 = scmp.eq.s32.totalorder %s21, 0
    %p216 = por %p214, %p215
    %s217 = ssub.s32 %s15, %s22
    %p218 = scmp.eq.s32.totalorder %s217, 0
    %s220 = sadd.s32 %s219, 1
    %s221 = scalar_select %p218, %s219, %s220
    %p224 = pneg %p218
    %p225 = scmp.eq.s32.totalorder %s15, 1
    %p226 = por %p224, %p225
    %p227 = scmp.ne.s32.totalorder %s219, %s222
    %p228 = scmp.eq.s32.totalorder %s15, 0
    %p229 = por %p227, %p228
    %p230 = scmp.ne.s32.totalorder %s219, %s222
    %p231 = scmp.eq.s32.totalorder %s20, 1
    %p232 = por %p230, %p231
    %p233 = scmp.ne.s32.totalorder %s222, %s223
    %p234 = scmp.eq.s32.totalorder %s20, 0
    %p235 = por %p233, %p234
    %p236 = scmp.ne.s32.totalorder %s222, %s223
    %p237 = scmp.eq.s32.totalorder %s21, 1
    %p238 = por %p236, %p237
    %p240 = scmp.ne.s32.totalorder %s223, %s239
    %p241 = scmp.eq.s32.totalorder %s21, 0
    %p242 = por %p240, %p241
    %p243 = scmp.le.s32.totalorder 1, %s15
    %p244 = scmp.lt.s32.totalorder %s15, 3
    %p245 = pnand %p243, %p244
    %p246 = pneg %p245
    // Predicated region
    $region9: #{cross_mamba_both_forward.14} parent=5 // pred_check
      _
    $region10: #{cross_mamba_both_forward.14} parent=5 // pred_check_branch
      %248 = sbr.rel (%p245) target = $region12
    $region11: #{cross_mamba_both_forward.14} parent=5 // pred_region
      %s249 = ssub.s32 %s15, 1
      // Predicated region
      $region13: #{cross_mamba_both_forward.14} parent=11 // pred_check
        %p250 = pneg %p62
      $region14: #{cross_mamba_both_forward.14} parent=11 // pred_check_branch
        %252 = sbr.rel (%p250) target = $region16
      $region15: #{cross_mamba_both_forward.14} parent=11 // pred_region
        _
      $region16: #{cross_mamba_both_forward.14} parent=11 // pred_fallthru
        _
      // Predicated region
      $region17: #{cross_mamba_both_forward.14} parent=11 // pred_check
        %p253 = pneg %p83
      $region18: #{cross_mamba_both_forward.14} parent=11 // pred_check_branch
        %255 = sbr.rel (%p253) target = $region20
      $region19: #{cross_mamba_both_forward.14} parent=11 // pred_region
        _
      $region20: #{cross_mamba_both_forward.14} parent=11 // pred_fallthru
        _
      // Predicated region
      $region21: #{cross_mamba_both_forward.14} parent=11 // pred_check
        %p256 = pneg %p104
      $region22: #{cross_mamba_both_forward.14} parent=11 // pred_check_branch
        %258 = sbr.rel (%p256) target = $region24
      $region23: #{cross_mamba_both_forward.14} parent=11 // pred_region
        _
      $region24: #{cross_mamba_both_forward.14} parent=11 // pred_fallthru
        _
      // Predicated region
      $region25: #{cross_mamba_both_forward.14} parent=11 // pred_check
        %p259 = pneg %p125
      $region26: #{cross_mamba_both_forward.14} parent=11 // pred_check_branch
        %261 = sbr.rel (%p259) target = $region28
      $region27: #{cross_mamba_both_forward.14} parent=11 // pred_region
        _
      $region28: #{cross_mamba_both_forward.14} parent=11 // pred_fallthru
        _
      // Predicated region
      $region29: #{cross_mamba_both_forward.14} parent=11 // pred_check
        %p262 = pneg %p146
      $region30: #{cross_mamba_both_forward.14} parent=11 // pred_check_branch
        %264 = sbr.rel (%p262) target = $region32
      $region31: #{cross_mamba_both_forward.14} parent=11 // pred_region
        _
      $region32: #{cross_mamba_both_forward.14} parent=11 // pred_fallthru
        _
      // Predicated region
      $region33: #{cross_mamba_both_forward.14} parent=11 // pred_check
        %p265 = pneg %p167
      $region34: #{cross_mamba_both_forward.14} parent=11 // pred_check_branch
        %267 = sbr.rel (%p265) target = $region36
      $region35: #{cross_mamba_both_forward.14} parent=11 // pred_region
        _
      $region36: #{cross_mamba_both_forward.14} parent=11 // pred_fallthru
        _
      // Predicated region
      $region37: #{cross_mamba_both_forward.14} parent=11 // pred_check
        %p268 = pneg %p188
      $region38: #{cross_mamba_both_forward.14} parent=11 // pred_check_branch
        %270 = sbr.rel (%p268) target = $region40
      $region39: #{cross_mamba_both_forward.14} parent=11 // pred_region
        _
      $region40: #{cross_mamba_both_forward.14} parent=11 // pred_fallthru
        _
      // Predicated region
      $region41: #{cross_mamba_both_forward.14} parent=11 // pred_check
        %p271 = pneg %p209
      $region42: #{cross_mamba_both_forward.14} parent=11 // pred_check_branch
        %273 = sbr.rel (%p271) target = $region44
      $region43: #{cross_mamba_both_forward.14} parent=11 // pred_region
        _
      $region44: #{cross_mamba_both_forward.14} parent=11 // pred_fallthru
        _
    $region12: #{cross_mamba_both_forward.14} parent=5 // pred_fallthru
      _
    %p274 = scmp.lt.s32.totalorder %s15, 2
    // Predicated region
    $region45: #{cross_mamba_both_forward.14} parent=5 // pred_check
      %p275 = pneg %p274
    $region46: #{cross_mamba_both_forward.14} parent=5 // pred_check_branch
      %277 = sbr.rel (%p275) target = $region48
    $region47: #{cross_mamba_both_forward.14} parent=5 // pred_region
      // Predicated region
      $region49: #{cross_mamba_both_forward.14} parent=47 // pred_check
        %p278 = pneg %p35
      $region50: #{cross_mamba_both_forward.14} parent=47 // pred_check_branch
        %280 = sbr.rel (%p278) target = $region52
      $region51: #{cross_mamba_both_forward.14} parent=47 // pred_region
        %p281 = scmp.lt.s32.totalorder %s15, 1
        %s282 = scalar_select %p281, %s15, 1
        %s283 = smul.addr %s282, 2
        %s284 = smul.addr %s283, 4
        %s285 = scalar_lea.vmem %s0, %s284
      $region52: #{cross_mamba_both_forward.14} parent=47 // pred_fallthru
        _
    $region48: #{cross_mamba_both_forward.14} parent=5 // pred_fallthru
      _
    %p286 = scmp.le.s32.totalorder 1, %s15
    %p287 = scmp.lt.s32.totalorder %s15, 3
    %p288 = pnand %p286, %p287
    %p289 = pneg %p288
    // Predicated region
    $region53: #{cross_mamba_both_forward.14} parent=5 // pred_check
      _
    $region54: #{cross_mamba_both_forward.14} parent=5 // pred_check_branch
      %291 = sbr.rel (%p288) target = $region56
    $region55: #{cross_mamba_both_forward.14} parent=5 // pred_region
      %s292 = ssub.s32 %s15, 1
      %p293 = scmp.lt.s32.totalorder %s20, 1
      %s294 = scalar_select %p293, %s20, 1
      %s295 = smul.addr %s294, 2
      %s296 = smul.addr %s295, 4
      %s297 = scalar_lea.vmem %s0, %s296
      %p298 = pneg %p41
      %p299 = pneg %p38
      %p300 = pneg %p62
      %p301 = pneg %p59
      %p302 = pneg %p83
      %p303 = pneg %p80
      %p304 = pneg %p104
      %p305 = pneg %p101
      %p306 = pneg %p125
      %p307 = pneg %p122
      %p308 = pneg %p146
      %p309 = pneg %p143
      %p310 = pneg %p167
      %p311 = pneg %p164
      %p312 = pneg %p188
      %p313 = pneg %p185
      %p314 = pneg %p209
      %p315 = pneg %p206
      %p316 = pneg %p235
      %p317 = pneg %p232
      %p318 = scmp.lt.s32.totalorder %s20, 1
      %s319 = scalar_select %p318, %s20, 1
      %s320 = smul.addr %s319, 2
      %s321 = smul.addr %s320, 4
      %s322 = scalar_lea.vmem %s9, %s321
      %p323 = scmp.lt.s32.totalorder %s20, 1
      %s324 = scalar_select %p323, %s20, 1
      %s325 = smul.addr %s324, 2
      %s326 = smul.addr %s325, 4
      %s327 = scalar_lea.vmem %s0, %s326
      %p328 = scmp.lt.s32.totalorder %s20, 1
      %s329 = scalar_select %p328, %s20, 1
      %s330 = smul.addr %s329, 2
      %s331 = smul.addr %s330, 4
      %s332 = scalar_lea.vmem %s9, %s331
      %v334 = vld [vmem:[%s327] sm:$0xf]
      %v335 = vld [vmem:[%s327 + $0x4] sm:$0x1]
      %v336 = vunpack.c.l.bf16 %v334
      %v337 = vunpack.c.l.bf16 %v335
      %vm338 = vcmask 518144
      %339 = vst.msk [vmem:[#allocation2] sm:$0x7] %vm338, 0.0
      %vm340 = vcmask 523264
      %341 = vst.msk [vmem:[#allocation2 + $0x3] sm:$0xff] %vm340, %v336
      %vm342 = vcmask 517120
      %343 = vst.msk [vmem:[#allocation2 + $0xb] sm:$0x3] %vm342, %v337
      %v344 = vld [vmem:[%s2] sm:$0x1]
      %v346 = vlaneseq
      %v347 = vshrl.u32 %v346, 7
      %v348 = vsub.s32 0, %v347
      %v349 = vrot.slane %v344, %v348
      %v351 = vadd.f32 %v349, 0.0
      %v352 = vld [vmem:[%s1] sm:$0x1]
      %v353 = vld [vmem:[#allocation2] sm:$0xff]
      %v354 = vld [vmem:[#allocation2 + $0x8] sm:$0x3]
      %v355 = vlaneseq
      %v356 = vshrl.u32 %v355, 7
      %v357 = vsub.s32 0, %v356
      %v358 = vrot.slane %v352, %v357
      %v359 = vmul.f32 %v358, %v353
      %v360 = vmul.f32 %v358, %v354
      %v361 = vadd.f32 %v351, %v359
      %v362 = vadd.f32 %v351, %v360
      %v363 = vld [vmem:[%s1 + $0x1] sm:$0x1]
      %v364 = vld [vmem:[#allocation2 + $0x1] sm:$0xff]
      %v365 = vld [vmem:[#allocation2 + $0x9] sm:$0x3]
      %v366 = vlaneseq
      %v367 = vshrl.u32 %v366, 7
      %v368 = vsub.s32 0, %v367
      %v369 = vrot.slane %v363, %v368
      %v370 = vmul.f32 %v369, %v364
      %v371 = vmul.f32 %v369, %v365
      %v372 = vadd.f32 %v361, %v370
      %v373 = vadd.f32 %v362, %v371
      %v374 = vld [vmem:[%s1 + $0x2] sm:$0x1]
      %v375 = vld [vmem:[#allocation2 + $0x2] sm:$0xff]
      %v376 = vld [vmem:[#allocation2 + $0xa] sm:$0x3]
      %v377 = vlaneseq
      %v378 = vshrl.u32 %v377, 7
      %v379 = vsub.s32 0, %v378
      %v380 = vrot.slane %v374, %v379
      %v381 = vmul.f32 %v380, %v375
      %v382 = vmul.f32 %v380, %v376
      %v383 = vadd.f32 %v372, %v381
      %v384 = vadd.f32 %v373, %v382
      %v385 = vld [vmem:[%s1 + $0x3] sm:$0x1]
      %v386 = vld [vmem:[#allocation2 + $0x3] sm:$0xff]
      %v387 = vld [vmem:[#allocation2 + $0xb] sm:$0x3]
      %v388 = vlaneseq
      %v389 = vshrl.u32 %v388, 7
      %v390 = vsub.s32 0, %v389
      %v391 = vrot.slane %v385, %v390
      %v392 = vmul.f32 %v391, %v386
      %v393 = vmul.f32 %v391, %v387
      %v394 = vadd.f32 %v383, %v392
      %v395 = vadd.f32 %v384, %v393
      %v396 = vsub.f32 0.0, %v394
      %v397 = vsub.f32 0.0, %v395
      %v398 = vmul.f32 %v396, 1.442695
      %v399 = vpow.pop %v398
      %v400 = vmul.f32 %v397, 1.442695
      %v401 = vpow.pop %v400
      %v402 = vadd.f32 %v399, 1.0
      %v403 = vadd.f32 %v401, 1.0
      %v404 = vrcp.pop %v402
      %v405 = vmul.f32 1.0, %v404
      %v406 = vrcp.pop %v403
      %v407 = vmul.f32 1.0, %v406
      %v408 = vmul.f32 %v394, %v405
      %v409 = vmul.f32 %v395, %v407
      %v410 = vpack.c.bf16 %v409, %v408
      %v411 = vld [vmem:[%s3] sm:$0xf]
      %v412 = vld [vmem:[%s3 + $0x4] sm:$0xf]
      %v413 = vld [vmem:[%s3 + $0x8] sm:$0xf]
      %v414 = vld [vmem:[%s3 + $0xc] sm:$0xf]
      %v415 = vld [vmem:[%s3 + $0x10] sm:$0xf]
      %v416 = vld [vmem:[%s3 + $0x14] sm:$0xf]
      %v417 = vld [vmem:[%s3 + $0x18] sm:$0xf]
      %v418 = vld [vmem:[%s3 + $0x1c] sm:$0xf]
      %v427 = vunpack.c.l.b16 %v411
      %v428 = vunpack.c.l.b16 %v412
      %v429 = vunpack.c.l.b16 %v413
      %v430 = vunpack.c.l.b16 %v414
      %v431 = vunpack.c.l.b16 %v415
      %v432 = vunpack.c.l.b16 %v416
      %v433 = vunpack.c.l.b16 %v417
      %v434 = vunpack.c.l.b16 %v418
      %v435 = vpack.c.b16 %v428, %v427
      %v436 = vpack.c.b16 %v430, %v429
      %v437 = vpack.c.b16 %v432, %v431
      %v438 = vpack.c.b16 %v434, %v433
      %v444 = vsel %vm340, %v410, 0
      %446 = vmatprep.subr.bf16.mxu0 0
      %447 = vmatpush1.bf16.msra.mxu0 %v435
      %448 = vmatprep.subr.bf16.mxu0 0
      %449 = vmatpush1.bf16.msra.mxu0 %v436
      %450 = vmatprep.subr.bf16.mxu0 0
      %451 = vmatpush1.bf16.msra.mxu0 %v437
      %452 = vmatprep.subr.bf16.mxu0 0
      %453 = vmatpush1.bf16.msra.mxu0 %v438
      %454 = vmatprep.subr.bf16.mxu0 0
      %455 = vmatpush1.bf16.msra.mxu0 0
      %456 = vmatprep.subr.bf16.mxu0 0
      %457 = vmatpush1.bf16.msra.mxu0 0
      %458 = vmatprep.subr.bf16.mxu0 0
      %459 = vmatpush1.bf16.msra.mxu0 0
      %460 = vmatprep.subr.bf16.mxu0 0
      %461 = vmatpush1.bf16.msra.mxu0 0
      %462 = vmatprep.subr.bf16.mxu0 0
      %463 = vmatpush1.bf16.msra.mxu0 0
      %464 = vmatprep.subr.bf16.mxu0 0
      %465 = vmatpush1.bf16.msra.mxu0 0
      %466 = vmatprep.subr.bf16.mxu0 0
      %467 = vmatpush1.bf16.msra.mxu0 0
      %468 = vmatprep.subr.bf16.mxu0 0
      %469 = vmatpush1.bf16.msra.mxu0 0
      %470 = vmatprep.subr.bf16.mxu0 0
      %471 = vmatpush1.bf16.msra.mxu0 0
      %472 = vmatprep.subr.bf16.mxu0 0
      %473 = vmatpush1.bf16.msra.mxu0 0
      %474 = vmatprep.subr.bf16.mxu0 0
      %475 = vmatpush1.bf16.msra.mxu0 0
      %476 = vmatprep.subr.bf16.mxu0 0
      %477 = vmatpush1.bf16.msra.mxu0 0
      %478 = vmatprep.mubr.bf16.mxu0 0
      %479 = vmatmul.mubr.bf16.gmra.mrb[0].mxu0 %v444
      %v480 = vpop.f32.mrb[0].mxu0
      %v481 = vadd.f32 0.0, %v480
      %v482 = vpop.f32.mrb[0].mxu0
      %v483 = vpop.f32.mrb[0].mxu0
      %v484 = vadd.f32 0.0, %v483
      %v485 = vpop.f32.mrb[0].mxu0
      %486 = vdwg.mxu0
      %v487 = vld [vmem:[%s5] sm:$0x3]
      %v488 = vld [vmem:[%s6] sm:$0x1]
      %v490 = vlaneseq
      %v491 = vshrl.u32 %v490, 7
      %v492 = vsub.s32 0, %v491
      %v493 = vrot.slane %v488, %v492
      %vm495 = vcmask 15360
      %v497 = vsel %vm495, %v481, 0
      %v500 = vsel %vm495, %v484, 0
      %vm502 = vcmask 1041408
      %v504 = vsel %vm502, %v487, 0
      %506 = vmatprep.subr.mxu0 0.0
      %507 = vmatpush1.msra.mxu0 %v504
      %508 = vmatprep.subr.mxu0 0.0
      %509 = vmatpush1.msra.mxu0 0.0
      %510 = vmatprep.subr.mxu0 0.0
      %511 = vmatpush1.msra.mxu0 0.0
      %512 = vmatprep.subr.mxu0 0.0
      %513 = vmatpush1.msra.mxu0 0.0
      %514 = vmatprep.subr.mxu0 0.0
      %515 = vmatpush1.msra.mxu0 0.0
      %516 = vmatprep.subr.mxu0 0.0
      %517 = vmatpush1.msra.mxu0 0.0
      %518 = vmatprep.subr.mxu0 0.0
      %519 = vmatpush1.msra.mxu0 0.0
      %520 = vmatprep.subr.mxu0 0.0
      %521 = vmatpush1.msra.mxu0 0.0
      %522 = vmatprep.subr.mxu0 0.0
      %523 = vmatpush1.msra.mxu0 0.0
      %524 = vmatprep.subr.mxu0 0.0
      %525 = vmatpush1.msra.mxu0 0.0
      %526 = vmatprep.subr.mxu0 0.0
      %527 = vmatpush1.msra.mxu0 0.0
      %528 = vmatprep.subr.mxu0 0.0
      %529 = vmatpush1.msra.mxu0 0.0
      %530 = vmatprep.subr.mxu0 0.0
      %531 = vmatpush1.msra.mxu0 0.0
      %532 = vmatprep.subr.mxu0 0.0
      %533 = vmatpush1.msra.mxu0 0.0
      %534 = vmatprep.subr.mxu0 0.0
      %535 = vmatpush1.msra.mxu0 0.0
      %536 = vmatprep.subr.mxu0 0.0
      %537 = vmatpush1.msra.mxu0 0.0
      %538 = vmatprep.subr.mxu0 0.0
      %539 = vmatpush1.msra.mxu0 0.0
      %540 = vmatprep.subr.mxu0 0.0
      %541 = vmatpush1.msra.mxu0 0.0
      %542 = vmatprep.subr.mxu0 0.0
      %543 = vmatpush1.msra.mxu0 0.0
      %544 = vmatprep.subr.mxu0 0.0
      %545 = vmatpush1.msra.mxu0 0.0
      %546 = vmatprep.subr.mxu0 0.0
      %547 = vmatpush1.msra.mxu0 0.0
      %548 = vmatprep.subr.mxu0 0.0
      %549 = vmatpush1.msra.mxu0 0.0
      %550 = vmatprep.subr.mxu0 0.0
      %551 = vmatpush1.msra.mxu0 0.0
      %552 = vmatprep.subr.mxu0 0.0
      %553 = vmatpush1.msra.mxu0 0.0
      %554 = vmatprep.subr.mxu0 0.0
      %555 = vmatpush1.msra.mxu0 0.0
      %556 = vmatprep.subr.mxu0 0.0
      %557 = vmatpush1.msra.mxu0 0.0
      %558 = vmatprep.subr.mxu0 0.0
      %559 = vmatpush1.msra.mxu0 0.0
      %560 = vmatprep.subr.mxu0 0.0
      %561 = vmatpush1.msra.mxu0 0.0
      %562 = vmatprep.subr.mxu0 0.0
      %563 = vmatpush1.msra.mxu0 0.0
      %564 = vmatprep.subr.mxu0 0.0
      %565 = vmatpush1.msra.mxu0 0.0
      %566 = vmatprep.subr.mxu0 0.0
      %567 = vmatpush1.msra.mxu0 0.0
      %568 = vmatprep.subr.mxu0 0.0
      %569 = vmatpush1.msra.mxu0 0.0
      %570 = vmatprep.mubr.f32.mxu0 0.0
      %571 = vmatmul.mubr.f32.gmra.mrb[0].mxu0 %v497
      %v572 = vpop.f32.mrb[0].mxu0
      %v573 = vadd.f32 %v493, %v572
      %v574 = vpop.f32.mrb[0].mxu0
      %575 = vmatprep.mubr.f32.mxu0 0.0
      %576 = vmatmul.mubr.f32.gmra.mrb[0].mxu0 %v500
      %v577 = vpop.f32.mrb[0].mxu0
      %v578 = vadd.f32 %v493, %v577
      %v579 = vpop.f32.mrb[0].mxu0
      %580 = vdwg.mxu0
      %v581 = vmax.f32 %v573, 0.0
      %v582 = vmax.f32 %v578, 0.0
      %v583 = vand.u32 2147483647, %v573
      %v584 = vand.u32 2147483647, %v578
      %v585 = vsub.f32 0.0, %v583
      %v586 = vsub.f32 0.0, %v584
      %v587 = vmul.f32 %v585, 1.442695
      %v588 = vpow.pop %v587
      %v589 = vmul.f32 %v586, 1.442695
      %v590 = vpow.pop %v589
      %v591 = vadd.f32 %v588, 1.0
      %v592 = vadd.f32 %v590, 1.0
      %v593 = vlog2.pop %v591
      %v594 = vmul.f32 %v593, 0.6931472
      %v595 = vlog2.pop %v592
      %v596 = vmul.f32 %v595, 0.6931472
      %v597 = vadd.f32 %v581, %v594
      %v598 = vadd.f32 %v582, %v596
      %v599 = vmul.f32 %v597, %v408
      %v600 = vmul.f32 %v598, %v409
      %v601 = vld [vmem:[%s4] sm:$0xf]
      %v602 = vld [vmem:[%s4 + $0x4] sm:$0xf]
      %v603 = vld [vmem:[%s4 + $0x8] sm:$0xf]
      %v604 = vld [vmem:[%s4 + $0xc] sm:$0xf]
      %v609 = vunpack.c.l.b16 %v601
      %v610 = vunpack.c.l.b16 %v602
      %v611 = vunpack.c.l.b16 %v603
      %v612 = vunpack.c.l.b16 %v604
      %v613 = vpack.c.b16 %v610, %v609
      %v614 = vpack.c.b16 %v612, %v611
      %v616 = vsel %vm340, %v613, 0
      %v619 = vsel %vm340, %v614, 0
      %621 = vmatprep.subr.bf16.mxu0 0
      %622 = vmatpush1.bf16.xpose.msra.mxu0 %v444
      %623 = vmatprep.subr.bf16.mxu0 0
      %624 = vmatpush1.bf16.xpose.msra.mxu0 0
      %625 = vmatprep.subr.bf16.mxu0 0
      %626 = vmatpush1.bf16.xpose.msra.mxu0 0
      %627 = vmatprep.subr.bf16.mxu0 0
      %628 = vmatpush1.bf16.xpose.msra.mxu0 0
      %629 = vmatprep.subr.bf16.mxu0 0
      %630 = vmatpush1.bf16.xpose.msra.mxu0 0
      %631 = vmatprep.subr.bf16.mxu0 0
      %632 = vmatpush1.bf16.xpose.msra.mxu0 0
      %633 = vmatprep.subr.bf16.mxu0 0
      %634 = vmatpush1.bf16.xpose.msra.mxu0 0
      %635 = vmatprep.subr.bf16.mxu0 0
      %636 = vmatpush1.bf16.xpose.msra.mxu0 0
      %637 = vmatprep.subr.bf16.mxu0 0
      %638 = vmatpush1.bf16.xpose.msra.mxu0 0
      %639 = vmatprep.subr.bf16.mxu0 0
      %640 = vmatpush1.bf16.xpose.msra.mxu0 0
      %641 = vmatprep.subr.bf16.mxu0 0
      %642 = vmatpush1.bf16.xpose.msra.mxu0 0
      %643 = vmatprep.subr.bf16.mxu0 0
      %644 = vmatpush1.bf16.xpose.msra.mxu0 0
      %645 = vmatprep.subr.bf16.mxu0 0
      %646 = vmatpush1.bf16.xpose.msra.mxu0 0
      %647 = vmatprep.subr.bf16.mxu0 0
      %648 = vmatpush1.bf16.xpose.msra.mxu0 0
      %649 = vmatprep.subr.bf16.mxu0 0
      %650 = vmatpush1.bf16.xpose.msra.mxu0 0
      %651 = vmatprep.subr.bf16.mxu0 0
      %652 = vmatpush1.bf16.xpose.msra.mxu0 0
      %653 = vmatprep.mubr.bf16.mxu0 0
      %654 = vmatmul.mubr.bf16.gmra.mrb[0].mxu0 %v616
      %v655 = vpop.f32.mrb[0].mxu0
      %v656 = vadd.f32 0.0, %v655
      %v657 = vpop.f32.mrb[0].mxu0
      %v658 = vpop.f32.mrb[0].mxu0
      %v659 = vadd.f32 0.0, %v658
      %v660 = vpop.f32.mrb[0].mxu0
      %661 = vmatprep.mubr.bf16.mxu0 0
      %662 = vmatmul.mubr.bf16.gmra.mrb[0].mxu0 %v619
      %v663 = vpop.f32.mrb[0].mxu0
      %v664 = vadd.f32 0.0, %v663
      %v665 = vpop.f32.mrb[0].mxu0
      %v666 = vpop.f32.mrb[0].mxu0
      %v667 = vadd.f32 0.0, %v666
      %v668 = vpop.f32.mrb[0].mxu0
      %669 = vdwg.mxu0
      %v670 = vld [vmem:[%s7] sm:$0xff]
      %v671 = vld [vmem:[%s7 + $0x8] sm:$0xff]
      %v672 = vlaneseq
      %v673 = vshrl.u32 %v672, 7
      %v674 = vsub.s32 0, %v673
      %v675 = vrot.slane %v597, %v674
      %v676 = vmul.f32 %v675, %v670
      %v677 = vmul.f32 %v675, %v671
      %v678 = vmul.f32 %v676, 1.442695
      %v679 = vpow.pop %v678
      %v680 = vmul.f32 %v677, 1.442695
      %v681 = vpow.pop %v680
      %v682 = vmul.f32 %v679, 0.0
      %v683 = vmul.f32 %v681, 0.0
      %685 = vset.pattern.permute.xlu0 0
      %686 = vperm.xlu0 %685, %v656
      %v687 = vpop.permute.xlu0 %686
      %690 = vset.pattern.permute.xlu0 0
      %691 = vperm.xlu0 %690, %v659
      %v692 = vpop.permute.xlu0 %691
      %v694 = vlaneseq
      %v695 = vshrl.u32 %v694, 7
      %v696 = vsub.s32 0, %v695
      %v697 = vrot.slane %v599, %v696
      %v698 = vmul.f32 %v687, %v697
      %v699 = vmul.f32 %v692, %v697
      %v700 = vadd.f32 %v682, %v698
      %v701 = vadd.f32 %v683, %v699
      %703 = vset.pattern.permute.xlu0 0
      %704 = vperm.xlu0 %703, %v664
      %v705 = vpop.permute.xlu0 %704
      %708 = vset.pattern.permute.xlu0 0
      %709 = vperm.xlu0 %708, %v667
      %v710 = vpop.permute.xlu0 %709
      %v712 = vmul.f32 %v705, %v700
      %v713 = vmul.f32 %v710, %v701
      %v714 = vsel %vm340, %v712, 0.0
      %v715 = vsel %vm340, %v713, 0.0
      %v716 = vadd.f32 %v714, %v715
      %v717 = vrot.slane %v716, 4
      %v718 = vadd.f32 %v716, %v717
      %v719 = vrot.slane %v718, 2
      %v720 = vadd.f32 %v718, %v719
      %v721 = vrot.slane %v720, 1
      %v722 = vadd.f32 %v720, %v721
      %v723 = vlaneseq
      %v724 = vshrl.u32 %v723, 7
      %v725 = vsub.s32 1, %v724
      %v726 = vrot.slane %v597, %v725
      %v727 = vmul.f32 %v726, %v670
      %v728 = vmul.f32 %v726, %v671
      %v729 = vmul.f32 %v727, 1.442695
      %v730 = vpow.pop %v729
      %v731 = vmul.f32 %v728, 1.442695
      %v732 = vpow.pop %v731
      %v733 = vmul.f32 %v730, %v700
      %v734 = vmul.f32 %v732, %v701
      %735 = vset.pattern.permute.xlu0 1
      %736 = vperm.xlu0 %735, %v656
      %v737 = vpop.permute.xlu0 %736
      %739 = vset.pattern.permute.xlu0 1
      %740 = vperm.xlu0 %739, %v659
      %v741 = vpop.permute.xlu0 %740
      %v743 = vlaneseq
      %v744 = vshrl.u32 %v743, 7
      %v745 = vsub.s32 1, %v744
      %v746 = vrot.slane %v599, %v745
      %v747 = vmul.f32 %v737, %v746
      %v748 = vmul.f32 %v741, %v746
      %v749 = vadd.f32 %v733, %v747
      %v750 = vadd.f32 %v734, %v748
      %751 = vset.pattern.permute.xlu0 1
      %752 = vperm.xlu0 %751, %v664
      %v753 = vpop.permute.xlu0 %752
      %755 = vset.pattern.permute.xlu0 1
      %756 = vperm.xlu0 %755, %v667
      %v757 = vpop.permute.xlu0 %756
      %v759 = vmul.f32 %v753, %v749
      %v760 = vmul.f32 %v757, %v750
      %v761 = vsel %vm340, %v759, 0.0
      %v762 = vsel %vm340, %v760, 0.0
      %v763 = vadd.f32 %v761, %v762
      %v764 = vrot.slane %v763, 4
      %v765 = vadd.f32 %v763, %v764
      %v766 = vrot.slane %v765, 2
      %v767 = vadd.f32 %v765, %v766
      %v768 = vrot.slane %v767, 1
      %v769 = vadd.f32 %v767, %v768
      %v770 = vlaneseq
      %v771 = vshrl.u32 %v770, 7
      %v772 = vsub.s32 2, %v771
      %v773 = vrot.slane %v597, %v772
      %v774 = vmul.f32 %v773, %v670
      %v775 = vmul.f32 %v773, %v671
      %v776 = vmul.f32 %v774, 1.442695
      %v777 = vpow.pop %v776
      %v778 = vmul.f32 %v775, 1.442695
      %v779 = vpow.pop %v778
      %v780 = vmul.f32 %v777, %v749
      %v781 = vmul.f32 %v779, %v750
      %782 = vset.pattern.permute.xlu0 2
      %783 = vperm.xlu0 %782, %v656
      %v784 = vpop.permute.xlu0 %783
      %786 = vset.pattern.permute.xlu0 2
      %787 = vperm.xlu0 %786, %v659
      %v788 = vpop.permute.xlu0 %787
      %v790 = vlaneseq
      %v791 = vshrl.u32 %v790, 7
      %v792 = vsub.s32 2, %v791
      %v793 = vrot.slane %v599, %v792
      %v794 = vmul.f32 %v784, %v793
      %v795 = vmul.f32 %v788, %v793
      %v796 = vadd.f32 %v780, %v794
      %v797 = vadd.f32 %v781, %v795
      %798 = vset.pattern.permute.xlu0 2
      %799 = vperm.xlu0 %798, %v664
      %v800 = vpop.permute.xlu0 %799
      %802 = vset.pattern.permute.xlu0 2
      %803 = vperm.xlu0 %802, %v667
      %v804 = vpop.permute.xlu0 %803
      %v806 = vmul.f32 %v800, %v796
      %v807 = vmul.f32 %v804, %v797
      %v808 = vsel %vm340, %v806, 0.0
      %v809 = vsel %vm340, %v807, 0.0
      %v810 = vadd.f32 %v808, %v809
      %v811 = vrot.slane %v810, 4
      %v812 = vadd.f32 %v810, %v811
      %v813 = vrot.slane %v812, 2
      %v814 = vadd.f32 %v812, %v813
      %v815 = vrot.slane %v814, 1
      %v816 = vadd.f32 %v814, %v815
      %v817 = vlaneseq
      %v818 = vshrl.u32 %v817, 7
      %v819 = vsub.s32 3, %v818
      %v820 = vrot.slane %v597, %v819
      %v821 = vmul.f32 %v820, %v670
      %v822 = vmul.f32 %v820, %v671
      %v823 = vmul.f32 %v821, 1.442695
      %v824 = vpow.pop %v823
      %v825 = vmul.f32 %v822, 1.442695
      %v826 = vpow.pop %v825
      %v827 = vmul.f32 %v824, %v796
      %v828 = vmul.f32 %v826, %v797
      %829 = vset.pattern.permute.xlu0 3
      %830 = vperm.xlu0 %829, %v656
      %v831 = vpop.permute.xlu0 %830
      %833 = vset.pattern.permute.xlu0 3
      %834 = vperm.xlu0 %833, %v659
      %v835 = vpop.permute.xlu0 %834
      %v837 = vlaneseq
      %v838 = vshrl.u32 %v837, 7
      %v839 = vsub.s32 3, %v838
      %v840 = vrot.slane %v599, %v839
      %v841 = vmul.f32 %v831, %v840
      %v842 = vmul.f32 %v835, %v840
      %v843 = vadd.f32 %v827, %v841
      %v844 = vadd.f32 %v828, %v842
      %845 = vset.pattern.permute.xlu0 3
      %846 = vperm.xlu0 %845, %v664
      %v847 = vpop.permute.xlu0 %846
      %849 = vset.pattern.permute.xlu0 3
      %850 = vperm.xlu0 %849, %v667
      %v851 = vpop.permute.xlu0 %850
      %v853 = vmul.f32 %v847, %v843
      %v854 = vmul.f32 %v851, %v844
      %v855 = vsel %vm340, %v853, 0.0
      %v856 = vsel %vm340, %v854, 0.0
      %v857 = vadd.f32 %v855, %v856
      %v858 = vrot.slane %v857, 4
      %v859 = vadd.f32 %v857, %v858
      %v860 = vrot.slane %v859, 2
      %v861 = vadd.f32 %v859, %v860
      %v862 = vrot.slane %v861, 1
      %v863 = vadd.f32 %v861, %v862
      %v864 = vlaneseq
      %v865 = vshrl.u32 %v864, 7
      %v866 = vsub.s32 4, %v865
      %v867 = vrot.slane %v597, %v866
      %v868 = vmul.f32 %v867, %v670
      %v869 = vmul.f32 %v867, %v671
      %v870 = vmul.f32 %v868, 1.442695
      %v871 = vpow.pop %v870
      %v872 = vmul.f32 %v869, 1.442695
      %v873 = vpow.pop %v872
      %v874 = vmul.f32 %v871, %v843
      %v875 = vmul.f32 %v873, %v844
      %876 = vset.pattern.permute.xlu0 4
      %877 = vperm.xlu0 %876, %v656
      %v878 = vpop.permute.xlu0 %877
      %880 = vset.pattern.permute.xlu0 4
      %881 = vperm.xlu0 %880, %v659
      %v882 = vpop.permute.xlu0 %881
      %v884 = vlaneseq
      %v885 = vshrl.u32 %v884, 7
      %v886 = vsub.s32 4, %v885
      %v887 = vrot.slane %v599, %v886
      %v888 = vmul.f32 %v878, %v887
      %v889 = vmul.f32 %v882, %v887
      %v890 = vadd.f32 %v874, %v888
      %v891 = vadd.f32 %v875, %v889
      %892 = vset.pattern.permute.xlu0 4
      %893 = vperm.xlu0 %892, %v664
      %v894 = vpop.permute.xlu0 %893
      %896 = vset.pattern.permute.xlu0 4
      %897 = vperm.xlu0 %896, %v667
      %v898 = vpop.permute.xlu0 %897
      %v900 = vmul.f32 %v894, %v890
      %v901 = vmul.f32 %v898, %v891
      %v902 = vsel %vm340, %v900, 0.0
      %v903 = vsel %vm340, %v901, 0.0
      %v904 = vadd.f32 %v902, %v903
      %v905 = vrot.slane %v904, 4
      %v906 = vadd.f32 %v904, %v905
      %v907 = vrot.slane %v906, 2
      %v908 = vadd.f32 %v906, %v907
      %v909 = vrot.slane %v908, 1
      %v910 = vadd.f32 %v908, %v909
      %v911 = vlaneseq
      %v912 = vshrl.u32 %v911, 7
      %v913 = vsub.s32 5, %v912
      %v914 = vrot.slane %v597, %v913
      %v915 = vmul.f32 %v914, %v670
      %v916 = vmul.f32 %v914, %v671
      %v917 = vmul.f32 %v915, 1.442695
      %v918 = vpow.pop %v917
      %v919 = vmul.f32 %v916, 1.442695
      %v920 = vpow.pop %v919
      %v921 = vmul.f32 %v918, %v890
      %v922 = vmul.f32 %v920, %v891
      %923 = vset.pattern.permute.xlu0 5
      %924 = vperm.xlu0 %923, %v656
      %v925 = vpop.permute.xlu0 %924
      %927 = vset.pattern.permute.xlu0 5
      %928 = vperm.xlu0 %927, %v659
      %v929 = vpop.permute.xlu0 %928
      %v931 = vlaneseq
      %v932 = vshrl.u32 %v931, 7
      %v933 = vsub.s32 5, %v932
      %v934 = vrot.slane %v599, %v933
      %v935 = vmul.f32 %v925, %v934
      %v936 = vmul.f32 %v929, %v934
      %v937 = vadd.f32 %v921, %v935
      %v938 = vadd.f32 %v922, %v936
      %939 = vset.pattern.permute.xlu0 5
      %940 = vperm.xlu0 %939, %v664
      %v941 = vpop.permute.xlu0 %940
      %943 = vset.pattern.permute.xlu0 5
      %944 = vperm.xlu0 %943, %v667
      %v945 = vpop.permute.xlu0 %944
      %v947 = vmul.f32 %v941, %v937
      %v948 = vmul.f32 %v945, %v938
      %v949 = vsel %vm340, %v947, 0.0
      %v950 = vsel %vm340, %v948, 0.0
      %v951 = vadd.f32 %v949, %v950
      %v952 = vrot.slane %v951, 4
      %v953 = vadd.f32 %v951, %v952
      %v954 = vrot.slane %v953, 2
      %v955 = vadd.f32 %v953, %v954
      %v956 = vrot.slane %v955, 1
      %v957 = vadd.f32 %v955, %v956
      %v958 = vlaneseq
      %v959 = vshrl.u32 %v958, 7
      %v960 = vsub.s32 6, %v959
      %v961 = vrot.slane %v597, %v960
      %v962 = vmul.f32 %v961, %v670
      %v963 = vmul.f32 %v961, %v671
      %v964 = vmul.f32 %v962, 1.442695
      %v965 = vpow.pop %v964
      %v966 = vmul.f32 %v963, 1.442695
      %v967 = vpow.pop %v966
      %v968 = vmul.f32 %v965, %v937
      %v969 = vmul.f32 %v967, %v938
      %970 = vset.pattern.permute.xlu0 6
      %971 = vperm.xlu0 %970, %v656
      %v972 = vpop.permute.xlu0 %971
      %974 = vset.pattern.permute.xlu0 6
      %975 = vperm.xlu0 %974, %v659
      %v976 = vpop.permute.xlu0 %975
      %v978 = vlaneseq
      %v979 = vshrl.u32 %v978, 7
      %v980 = vsub.s32 6, %v979
      %v981 = vrot.slane %v599, %v980
      %v982 = vmul.f32 %v972, %v981
      %v983 = vmul.f32 %v976, %v981
      %v984 = vadd.f32 %v968, %v982
      %v985 = vadd.f32 %v969, %v983
      %986 = vset.pattern.permute.xlu0 6
      %987 = vperm.xlu0 %986, %v664
      %v988 = vpop.permute.xlu0 %987
      %990 = vset.pattern.permute.xlu0 6
      %991 = vperm.xlu0 %990, %v667
      %v992 = vpop.permute.xlu0 %991
      %v994 = vmul.f32 %v988, %v984
      %v995 = vmul.f32 %v992, %v985
      %v996 = vsel %vm340, %v994, 0.0
      %v997 = vsel %vm340, %v995, 0.0
      %v998 = vadd.f32 %v996, %v997
      %v999 = vrot.slane %v998, 4
      %v1000 = vadd.f32 %v998, %v999
      %v1001 = vrot.slane %v1000, 2
      %v1002 = vadd.f32 %v1000, %v1001
      %v1003 = vrot.slane %v1002, 1
      %v1004 = vadd.f32 %v1002, %v1003
      %v1005 = vlaneseq
      %v1006 = vshrl.u32 %v1005, 7
      %v1007 = vsub.s32 7, %v1006
      %v1008 = vrot.slane %v597, %v1007
      %v1009 = vmul.f32 %v1008, %v670
      %v1010 = vmul.f32 %v1008, %v671
      %v1011 = vmul.f32 %v1009, 1.442695
      %v1012 = vpow.pop %v1011
      %v1013 = vmul.f32 %v1010, 1.442695
      %v1014 = vpow.pop %v1013
      %v1015 = vmul.f32 %v1012, %v984
      %v1016 = vmul.f32 %v1014, %v985
      %1017 = vset.pattern.permute.xlu0 7
      %1018 = vperm.xlu0 %1017, %v656
      %v1019 = vpop.permute.xlu0 %1018
      %1021 = vset.pattern.permute.xlu0 7
      %1022 = vperm.xlu0 %1021, %v659
      %v1023 = vpop.permute.xlu0 %1022
      %v1025 = vlaneseq
      %v1026 = vshrl.u32 %v1025, 7
      %v1027 = vsub.s32 7, %v1026
      %v1028 = vrot.slane %v599, %v1027
      %v1029 = vmul.f32 %v1019, %v1028
      %v1030 = vmul.f32 %v1023, %v1028
      %v1031 = vadd.f32 %v1015, %v1029
      %v1032 = vadd.f32 %v1016, %v1030
      %1033 = vset.pattern.permute.xlu0 7
      %1034 = vperm.xlu0 %1033, %v664
      %v1035 = vpop.permute.xlu0 %1034
      %1037 = vset.pattern.permute.xlu0 7
      %1038 = vperm.xlu0 %1037, %v667
      %v1039 = vpop.permute.xlu0 %1038
      %v1041 = vmul.f32 %v1035, %v1031
      %v1042 = vmul.f32 %v1039, %v1032
      %v1043 = vsel %vm340, %v1041, 0.0
      %v1044 = vsel %vm340, %v1042, 0.0
      %v1045 = vadd.f32 %v1043, %v1044
      %v1046 = vrot.slane %v1045, 4
      %v1047 = vadd.f32 %v1045, %v1046
      %v1048 = vrot.slane %v1047, 2
      %v1049 = vadd.f32 %v1047, %v1048
      %v1050 = vrot.slane %v1049, 1
      %v1051 = vadd.f32 %v1049, %v1050
      %v1052 = vlaneseq
      %v1053 = vshrl.u32 %v1052, 7
      %v1054 = vsub.s32 0, %v1053
      %v1055 = vrot.slane %v598, %v1054
      %v1056 = vmul.f32 %v1055, %v670
      %v1057 = vmul.f32 %v1055, %v671
      %v1058 = vmul.f32 %v1056, 1.442695
      %v1059 = vpow.pop %v1058
      %v1060 = vmul.f32 %v1057, 1.442695
      %v1061 = vpow.pop %v1060
      %v1062 = vmul.f32 %v1059, %v1031
      %v1063 = vmul.f32 %v1061, %v1032
      %1064 = vset.pattern.permute.xlu0 8
      %1065 = vperm.xlu0 %1064, %v656
      %v1066 = vpop.permute.xlu0 %1065
      %1068 = vset.pattern.permute.xlu0 8
      %1069 = vperm.xlu0 %1068, %v659
      %v1070 = vpop.permute.xlu0 %1069
      %v1072 = vlaneseq
      %v1073 = vshrl.u32 %v1072, 7
      %v1074 = vsub.s32 0, %v1073
      %v1075 = vrot.slane %v600, %v1074
      %v1076 = vmul.f32 %v1066, %v1075
      %v1077 = vmul.f32 %v1070, %v1075
      %v1078 = vadd.f32 %v1062, %v1076
      %v1079 = vadd.f32 %v1063, %v1077
      %1080 = vset.pattern.permute.xlu0 8
      %1081 = vperm.xlu0 %1080, %v664
      %v1082 = vpop.permute.xlu0 %1081
      %1084 = vset.pattern.permute.xlu0 8
      %1085 = vperm.xlu0 %1084, %v667
      %v1086 = vpop.permute.xlu0 %1085
      %v1088 = vmul.f32 %v1082, %v1078
      %v1089 = vmul.f32 %v1086, %v1079
      %v1090 = vsel %vm340, %v1088, 0.0
      %v1091 = vsel %vm340, %v1089, 0.0
      %v1092 = vadd.f32 %v1090, %v1091
      %v1093 = vrot.slane %v1092, 4
      %v1094 = vadd.f32 %v1092, %v1093
      %v1095 = vrot.slane %v1094, 2
      %v1096 = vadd.f32 %v1094, %v1095
      %v1097 = vrot.slane %v1096, 1
      %v1098 = vadd.f32 %v1096, %v1097
      %v1099 = vlaneseq
      %v1100 = vshrl.u32 %v1099, 7
      %v1101 = vsub.s32 1, %v1100
      %v1102 = vrot.slane %v598, %v1101
      %v1103 = vmul.f32 %v1102, %v670
      %v1104 = vmul.f32 %v1102, %v671
      %v1105 = vmul.f32 %v1103, 1.442695
      %v1106 = vpow.pop %v1105
      %v1107 = vmul.f32 %v1104, 1.442695
      %v1108 = vpow.pop %v1107
      %v1109 = vmul.f32 %v1106, %v1078
      %v1110 = vmul.f32 %v1108, %v1079
      %1111 = vset.pattern.permute.xlu0 9
      %1112 = vperm.xlu0 %1111, %v656
      %v1113 = vpop.permute.xlu0 %1112
      %1115 = vset.pattern.permute.xlu0 9
      %1116 = vperm.xlu0 %1115, %v659
      %v1117 = vpop.permute.xlu0 %1116
      %v1119 = vlaneseq
      %v1120 = vshrl.u32 %v1119, 7
      %v1121 = vsub.s32 1, %v1120
      %v1122 = vrot.slane %v600, %v1121
      %v1123 = vmul.f32 %v1113, %v1122
      %v1124 = vmul.f32 %v1117, %v1122
      %v1125 = vadd.f32 %v1109, %v1123
      %v1126 = vadd.f32 %v1110, %v1124
      %1127 = vset.pattern.permute.xlu0 9
      %1128 = vperm.xlu0 %1127, %v664
      %v1129 = vpop.permute.xlu0 %1128
      %1131 = vset.pattern.permute.xlu0 9
      %1132 = vperm.xlu0 %1131, %v667
      %v1133 = vpop.permute.xlu0 %1132
      %v1135 = vmul.f32 %v1129, %v1125
      %v1136 = vmul.f32 %v1133, %v1126
      %v1137 = vsel %vm340, %v1135, 0.0
      %v1138 = vsel %vm340, %v1136, 0.0
      %v1139 = vadd.f32 %v1137, %v1138
      %v1140 = vrot.slane %v1139, 4
      %v1141 = vadd.f32 %v1139, %v1140
      %v1142 = vrot.slane %v1141, 2
      %v1143 = vadd.f32 %v1141, %v1142
      %v1144 = vrot.slane %v1143, 1
      %v1145 = vadd.f32 %v1143, %v1144
      %vm1146 = vcmask 1040384
      %v1147 = vsel %vm1146, %v722, %v769
      %v1148 = vsel %vm502, %v1147, %v816
      %vm1149 = vcmask 1042432
      %v1150 = vsel %vm1149, %v1148, %v863
      %vm1151 = vcmask 1043456
      %v1152 = vsel %vm1151, %v1150, %v910
      %vm1153 = vcmask 1044480
      %v1154 = vsel %vm1153, %v1152, %v957
      %vm1155 = vcmask 1045504
      %v1156 = vsel %vm1155, %v1154, %v1004
      %vm1157 = vcmask 1046528
      %v1158 = vsel %vm1157, %v1156, %v1051
      %v1159 = vsel %vm1146, %v1098, %v1145
      %v1160 = vld [vmem:[%s8] sm:$0x1]
      %v1162 = vlaneseq
      %v1163 = vshrl.u32 %v1162, 7
      %v1164 = vsub.s32 0, %v1163
      %v1165 = vrot.slane %v1160, %v1164
      %v1167 = vmul.f32 %v1165, %v408
      %v1168 = vmul.f32 %v1165, %v409
      %v1169 = vadd.f32 %v1158, %v1167
      %v1170 = vadd.f32 %v1159, %v1168
      %v1171 = vsub.f32 0.0, %v336
      %v1172 = vsub.f32 0.0, %v337
      %v1173 = vmul.f32 %v1171, 1.442695
      %v1174 = vpow.pop %v1173
      %v1175 = vmul.f32 %v1172, 1.442695
      %v1176 = vpow.pop %v1175
      %v1177 = vadd.f32 %v1174, 1.0
      %v1178 = vadd.f32 %v1176, 1.0
      %v1179 = vrcp.pop %v1177
      %v1180 = vmul.f32 1.0, %v1179
      %v1181 = vrcp.pop %v1178
      %v1182 = vmul.f32 1.0, %v1181
      %v1183 = vmul.f32 %v336, %v1180
      %v1184 = vmul.f32 %v337, %v1182
      %1187 = vrot.lane.b32.xlu0 %v1183, 64
      %v1188 = vpop.permute.xlu0 %1187
      %1189 = vrot.lane.b32.xlu0 %v1184, 64
      %v1190 = vpop.permute.xlu0 %1189
      %v1193 = vmul.f32 %v1169, %v1188
      %v1194 = vmul.f32 %v1170, %v1190
      %v1195 = vpack.c.bf16 %v1194, %v1193
      %v1197 = vunpack.c.l.b16 %v1195
      %v1198 = vunpack.c.h.b16 %v1195
      %v1199 = vpack.c.b16 %v1197, %v1197
      %v1200 = vpack.c.b16 %v1198, %v1198
      %vm1203 = vcmask 519168
      %1204 = vst.msk [vmem:[%s332] sm:$0xf] %vm1203, %v1199
      %vm1205 = vcmask 516096
      %1206 = vst.msk [vmem:[%s332 + $0x4] sm:$0x1] %vm1205, %v1200
      %p1207 = scmp.lt.s32.totalorder %s20, 1
      %s1208 = scalar_select %p1207, %s20, 1
      %s1209 = smul.addr %s1208, 2
      %s1210 = smul.addr %s1209, 4
      %s1211 = scalar_lea.vmem %s9, %s1210
      // Predicated region
      $region57: #{cross_mamba_both_forward.14} parent=55 // pred_check
        %p1212 = pneg %p232
      $region58: #{cross_mamba_both_forward.14} parent=55 // pred_check_branch
        %1214 = sbr.rel (%p1212) target = $region60
      $region59: #{cross_mamba_both_forward.14} parent=55 // pred_region
        _
      $region60: #{cross_mamba_both_forward.14} parent=55 // pred_fallthru
        _
    $region56: #{cross_mamba_both_forward.14} parent=5 // pred_fallthru
      _
    %p1215 = scmp.le.s32.totalorder 2, %s15
    // Predicated region
    $region61: #{cross_mamba_both_forward.14} parent=5 // pred_check
      %p1216 = pneg %p1215
    $region62: #{cross_mamba_both_forward.14} parent=5 // pred_check_branch
      %1218 = sbr.rel (%p1216) target = $region64
    $region63: #{cross_mamba_both_forward.14} parent=5 // pred_region
      %s1219 = ssub.s32 %s15, 2
      // Predicated region
      $region65: #{cross_mamba_both_forward.14} parent=63 // pred_check
        %p1220 = pneg %p238
      $region66: #{cross_mamba_both_forward.14} parent=63 // pred_check_branch
        %1222 = sbr.rel (%p1220) target = $region68
      $region67: #{cross_mamba_both_forward.14} parent=63 // pred_region
        %p1223 = scmp.lt.s32.totalorder %s21, 1
        %s1224 = scalar_select %p1223, %s21, 1
        %s1225 = smul.addr %s1224, 2
        %s1226 = smul.addr %s1225, 4
        %s1227 = scalar_lea.vmem %s9, %s1226
      $region68: #{cross_mamba_both_forward.14} parent=63 // pred_fallthru
        _
    $region64: #{cross_mamba_both_forward.14} parent=5 // pred_fallthru
      _
  $region6: #{cross_mamba_both_forward.14} parent=0 // loop_footer
    %s19 = sadd.s32 1, %s15
  $region7: #{cross_mamba_both_forward.14} parent=0 // loop_footer_branch
    %14 = sbr.rel target = $region3
  $region8: #{cross_mamba_both_forward.14} parent=0 // loop_exit
    _

// kernel: cross_mamba_both_forward.21
$region0: #{cross_mamba_both_forward.21}
  #allocation0 [shape = 'u32[]', space=smem, size = 0x4, offset = 0x4, fixed_abs, tag = 'smem constant byte address 0x4 - core index']
  #allocation1 [shape = 'u32[144,128]{1,0:T(1,128)}', space=vmem, size = 0x12000, scoped, tag = 'internal scratch']
  %s0 = inlined_call_operand.vmem [shape: f32[2,1,32], index: 0, kind: input, shape index: {}]
  %s1 = inlined_call_operand.vmem [shape: f32[2,8,64], index: 1, kind: input, shape index: {}]
  %s2 = inlined_call_operand.vmem [shape: f32[32,4], index: 2, kind: input, shape index: {}]
  %s3 = inlined_call_operand.vmem [shape: f32[4,32], index: 3, kind: input, shape index: {}]
  %s4 = inlined_call_operand.vmem [shape: f32[2,1,32], index: 4, kind: output, shape index: {}]
  %s5 = sld [smem:[#allocation0]]
  $region49: #{cross_mamba_both_forward.21} parent=0
    _
  %s7 = ssub.s32 1, %s5
  %s8 = scalar_select 0, %s7, %s5
  loop: start=0, step=1, limit=4
  $region2: #{cross_mamba_both_forward.21} parent=0 // loop_pre_header
    _
  $region3: #{cross_mamba_both_forward.21} parent=0 // loop_header
    %s10 = sphi 0, %s14
    %p11 = scmp.ge.s32.totalorder %s10, 4
    %s20 = sphi 0, %s22
    %s23 = sphi 0, %s20
    %s24 = sphi 0, %s23
    %s40 = sphi 0, %s24
    %s46 = sphi 0, %s48
    %s49 = sphi 0, %s46
    %s50 = sphi 0, %s49
    %s66 = sphi 0, %s50
    %s70 = sphi 0, %s70
    %s72 = sphi 0, %s70
    %s73 = sphi 0, %s72
    %s87 = sphi 0, %s73
    %s91 = sphi 0, %s91
    %s93 = sphi 0, %s91
    %s94 = sphi 0, %s93
    %s108 = sphi 0, %s94
    %s114 = sphi 0, %s116
    %s117 = sphi 0, %s114
    %s118 = sphi 0, %s117
    %s134 = sphi 0, %s118
  $region4: #{cross_mamba_both_forward.21} parent=0 // loop_header_branch
    %13 = sbr.rel (%p11) target = $region8
  $region5: #{cross_mamba_both_forward.21} parent=0 // loop_body
    %s15 = ssub.s32 %s10, 1
    %s16 = ssub.s32 %s10, 2
    %s17 = sadd.s32 %s10, 1
    %s18 = ssub.s32 %s10, %s17
    %p19 = scmp.eq.s32.totalorder %s18, 0
    %s21 = sadd.s32 %s20, 1
    %s22 = scalar_select %p19, %s20, %s21
    %p25 = pneg %p19
    %p26 = scmp.eq.s32.totalorder %s10, 1
    %p27 = por %p25, %p26
    %p28 = scmp.ne.s32.totalorder %s20, %s23
    %p29 = scmp.eq.s32.totalorder %s10, 0
    %p30 = por %p28, %p29
    %p31 = scmp.ne.s32.totalorder %s20, %s23
    %p32 = scmp.eq.s32.totalorder %s15, 1
    %p33 = por %p31, %p32
    %p34 = scmp.ne.s32.totalorder %s23, %s24
    %p35 = scmp.eq.s32.totalorder %s15, 0
    %p36 = por %p34, %p35
    %p37 = scmp.ne.s32.totalorder %s23, %s24
    %p38 = scmp.eq.s32.totalorder %s16, 1
    %p39 = por %p37, %p38
    %p41 = scmp.ne.s32.totalorder %s24, %s40
    %p42 = scmp.eq.s32.totalorder %s16, 0
    %p43 = por %p41, %p42
    %s44 = ssub.s32 %s10, %s17
    %p45 = scmp.eq.s32.totalorder %s44, 0
    %s47 = sadd.s32 %s46, 1
    %s48 = scalar_select %p45, %s46, %s47
    %p51 = pneg %p45
    %p52 = scmp.eq.s32.totalorder %s10, 1
    %p53 = por %p51, %p52
    %p54 = scmp.ne.s32.totalorder %s46, %s49
    %p55 = scmp.eq.s32.totalorder %s10, 0
    %p56 = por %p54, %p55
    %p57 = scmp.ne.s32.totalorder %s46, %s49
    %p58 = scmp.eq.s32.totalorder %s15, 1
    %p59 = por %p57, %p58
    %p60 = scmp.ne.s32.totalorder %s49, %s50
    %p61 = scmp.eq.s32.totalorder %s15, 0
    %p62 = por %p60, %p61
    %p63 = scmp.ne.s32.totalorder %s49, %s50
    %p64 = scmp.eq.s32.totalorder %s16, 1
    %p65 = por %p63, %p64
    %p67 = scmp.ne.s32.totalorder %s50, %s66
    %p68 = scmp.eq.s32.totalorder %s16, 0
    %p69 = por %p67, %p68
    %s71 = sadd.s32 %s70, 1
    %p74 = scmp.eq.s32.totalorder %s10, 1
    %p75 = scmp.ne.s32.totalorder %s70, %s72
    %p76 = scmp.eq.s32.totalorder %s10, 0
    %p77 = por %p75, %p76
    %p78 = scmp.ne.s32.totalorder %s70, %s72
    %p79 = scmp.eq.s32.totalorder %s15, 1
    %p80 = por %p78, %p79
    %p81 = scmp.ne.s32.totalorder %s72, %s73
    %p82 = scmp.eq.s32.totalorder %s15, 0
    %p83 = por %p81, %p82
    %p84 = scmp.ne.s32.totalorder %s72, %s73
    %p85 = scmp.eq.s32.totalorder %s16, 1
    %p86 = por %p84, %p85
    %p88 = scmp.ne.s32.totalorder %s73, %s87
    %p89 = scmp.eq.s32.totalorder %s16, 0
    %p90 = por %p88, %p89
    %s92 = sadd.s32 %s91, 1
    %p95 = scmp.eq.s32.totalorder %s10, 1
    %p96 = scmp.ne.s32.totalorder %s91, %s93
    %p97 = scmp.eq.s32.totalorder %s10, 0
    %p98 = por %p96, %p97
    %p99 = scmp.ne.s32.totalorder %s91, %s93
    %p100 = scmp.eq.s32.totalorder %s15, 1
    %p101 = por %p99, %p100
    %p102 = scmp.ne.s32.totalorder %s93, %s94
    %p103 = scmp.eq.s32.totalorder %s15, 0
    %p104 = por %p102, %p103
    %p105 = scmp.ne.s32.totalorder %s93, %s94
    %p106 = scmp.eq.s32.totalorder %s16, 1
    %p107 = por %p105, %p106
    %p109 = scmp.ne.s32.totalorder %s94, %s108
    %p110 = scmp.eq.s32.totalorder %s16, 0
    %p111 = por %p109, %p110
    %s112 = ssub.s32 %s10, %s17
    %p113 = scmp.eq.s32.totalorder %s112, 0
    %s115 = sadd.s32 %s114, 1
    %s116 = scalar_select %p113, %s114, %s115
    %p119 = pneg %p113
    %p120 = scmp.eq.s32.totalorder %s10, 1
    %p121 = por %p119, %p120
    %p122 = scmp.ne.s32.totalorder %s114, %s117
    %p123 = scmp.eq.s32.totalorder %s10, 0
    %p124 = por %p122, %p123
    %p125 = scmp.ne.s32.totalorder %s114, %s117
    %p126 = scmp.eq.s32.totalorder %s15, 1
    %p127 = por %p125, %p126
    %p128 = scmp.ne.s32.totalorder %s117, %s118
    %p129 = scmp.eq.s32.totalorder %s15, 0
    %p130 = por %p128, %p129
    %p131 = scmp.ne.s32.totalorder %s117, %s118
    %p132 = scmp.eq.s32.totalorder %s16, 1
    %p133 = por %p131, %p132
    %p135 = scmp.ne.s32.totalorder %s118, %s134
    %p136 = scmp.eq.s32.totalorder %s16, 0
    %p137 = por %p135, %p136
    %p138 = scmp.le.s32.totalorder 1, %s10
    %p139 = scmp.lt.s32.totalorder %s10, 3
    %p140 = pnand %p138, %p139
    %p141 = pneg %p140
    // Predicated region
    $region9: #{cross_mamba_both_forward.21} parent=5 // pred_check
      _
    $region10: #{cross_mamba_both_forward.21} parent=5 // pred_check_branch
      %143 = sbr.rel (%p140) target = $region12
    $region11: #{cross_mamba_both_forward.21} parent=5 // pred_region
      %s144 = ssub.s32 %s10, 1
      // Predicated region
      $region13: #{cross_mamba_both_forward.21} parent=11 // pred_check
        %p145 = pneg %p83
      $region14: #{cross_mamba_both_forward.21} parent=11 // pred_check_branch
        %147 = sbr.rel (%p145) target = $region16
      $region15: #{cross_mamba_both_forward.21} parent=11 // pred_region
        _
      $region16: #{cross_mamba_both_forward.21} parent=11 // pred_fallthru
        _
      // Predicated region
      $region17: #{cross_mamba_both_forward.21} parent=11 // pred_check
        %p148 = pneg %p104
      $region18: #{cross_mamba_both_forward.21} parent=11 // pred_check_branch
        %150 = sbr.rel (%p148) target = $region20
      $region19: #{cross_mamba_both_forward.21} parent=11 // pred_region
        _
      $region20: #{cross_mamba_both_forward.21} parent=11 // pred_fallthru
        _
    $region12: #{cross_mamba_both_forward.21} parent=5 // pred_fallthru
      _
    %p151 = scmp.lt.s32.totalorder %s10, 2
    // Predicated region
    $region21: #{cross_mamba_both_forward.21} parent=5 // pred_check
      %p152 = pneg %p151
    $region22: #{cross_mamba_both_forward.21} parent=5 // pred_check_branch
      %154 = sbr.rel (%p152) target = $region24
    $region23: #{cross_mamba_both_forward.21} parent=5 // pred_region
      // Predicated region
      $region25: #{cross_mamba_both_forward.21} parent=23 // pred_check
        %p155 = pneg %p30
      $region26: #{cross_mamba_both_forward.21} parent=23 // pred_check_branch
        %157 = sbr.rel (%p155) target = $region28
      $region27: #{cross_mamba_both_forward.21} parent=23 // pred_region
        %p158 = scmp.lt.s32.totalorder %s10, 1
        %s159 = scalar_select %p158, %s10, 1
        %s160 = scalar_lea.vmem %s0, %s159
      $region28: #{cross_mamba_both_forward.21} parent=23 // pred_fallthru
        _
      // Predicated region
      $region29: #{cross_mamba_both_forward.21} parent=23 // pred_check
        %p161 = pneg %p56
      $region30: #{cross_mamba_both_forward.21} parent=23 // pred_check_branch
        %163 = sbr.rel (%p161) target = $region32
      $region31: #{cross_mamba_both_forward.21} parent=23 // pred_region
        %p164 = scmp.lt.s32.totalorder %s10, 1
        %s165 = scalar_select %p164, %s10, 1
        %s166 = smul.addr %s165, 8
        %s167 = scalar_lea.vmem %s1, %s166
      $region32: #{cross_mamba_both_forward.21} parent=23 // pred_fallthru
        _
    $region24: #{cross_mamba_both_forward.21} parent=5 // pred_fallthru
      _
    %p168 = scmp.le.s32.totalorder 1, %s10
    %p169 = scmp.lt.s32.totalorder %s10, 3
    %p170 = pnand %p168, %p169
    %p171 = pneg %p170
    // Predicated region
    $region33: #{cross_mamba_both_forward.21} parent=5 // pred_check
      _
    $region34: #{cross_mamba_both_forward.21} parent=5 // pred_check_branch
      %173 = sbr.rel (%p170) target = $region36
    $region35: #{cross_mamba_both_forward.21} parent=5 // pred_region
      %s174 = ssub.s32 %s10, 1
      %p175 = scmp.lt.s32.totalorder %s15, 1
      %s176 = scalar_select %p175, %s15, 1
      %s177 = scalar_lea.vmem %s0, %s176
      %p178 = pneg %p36
      %p179 = pneg %p33
      %p180 = scmp.lt.s32.totalorder %s15, 1
      %s181 = scalar_select %p180, %s15, 1
      %s182 = smul.addr %s181, 8
      %s183 = scalar_lea.vmem %s1, %s182
      %p184 = pneg %p62
      %p185 = pneg %p59
      %p186 = pneg %p83
      %p187 = pneg %p80
      %p188 = pneg %p104
      %p189 = pneg %p101
      %p190 = pneg %p130
      %p191 = pneg %p127
      %p192 = scmp.lt.s32.totalorder %s15, 1
      %s193 = scalar_select %p192, %s15, 1
      %s194 = scalar_lea.vmem %s4, %s193
      %p195 = scmp.lt.s32.totalorder %s15, 1
      %s196 = scalar_select %p195, %s15, 1
      %s197 = scalar_lea.vmem %s0, %s196
      %p198 = scmp.lt.s32.totalorder %s15, 1
      %s199 = scalar_select %p198, %s15, 1
      %s200 = smul.addr %s199, 8
      %s201 = scalar_lea.vmem %s1, %s200
      %p202 = scmp.lt.s32.totalorder %s15, 1
      %s203 = scalar_select %p202, %s15, 1
      %s204 = scalar_lea.vmem %s4, %s203
      %v205 = vld [vmem:[%s197] sm:$0x1]
      %v206 = vld [vmem:[%s201] sm:$0xff]
      %v208 = vlaneseq
      %v209 = vshrl.u32 %v208, 7
      %v210 = vsub.s32 0, %v209
      %v211 = vrot.slane %v205, %v210
      %v213 = vmul.f32 %v206, %v211
      %v214 = vld [vmem:[%s2] sm:$0xff]
      %v215 = vld [vmem:[%s2 + $0x8] sm:$0xff]
      %v216 = vld [vmem:[%s2 + $0x10] sm:$0xff]
      %v217 = vld [vmem:[%s2 + $0x18] sm:$0xff]
      %vm218 = vcmask 261120
      %v220 = vsel %vm218, %v213, 0
      %222 = vmatprep.subr.mxu0 0.0
      %223 = vmatpush1.msra.mxu0 %v214
      %224 = vmatprep.subr.mxu0 0.0
      %225 = vmatpush1.msra.mxu0 %v215
      %226 = vmatprep.subr.mxu0 0.0
      %227 = vmatpush1.msra.mxu0 %v216
      %228 = vmatprep.subr.mxu0 0.0
      %229 = vmatpush1.msra.mxu0 %v217
      %230 = vmatprep.subr.mxu0 0.0
      %231 = vmatpush1.msra.mxu0 0.0
      %232 = vmatprep.subr.mxu0 0.0
      %233 = vmatpush1.msra.mxu0 0.0
      %234 = vmatprep.subr.mxu0 0.0
      %235 = vmatpush1.msra.mxu0 0.0
      %236 = vmatprep.subr.mxu0 0.0
      %237 = vmatpush1.msra.mxu0 0.0
      %238 = vmatprep.subr.mxu0 0.0
      %239 = vmatpush1.msra.mxu0 0.0
      %240 = vmatprep.subr.mxu0 0.0
      %241 = vmatpush1.msra.mxu0 0.0
      %242 = vmatprep.subr.mxu0 0.0
      %243 = vmatpush1.msra.mxu0 0.0
      %244 = vmatprep.subr.mxu0 0.0
      %245 = vmatpush1.msra.mxu0 0.0
      %246 = vmatprep.subr.mxu0 0.0
      %247 = vmatpush1.msra.mxu0 0.0
      %248 = vmatprep.subr.mxu0 0.0
      %249 = vmatpush1.msra.mxu0 0.0
      %250 = vmatprep.subr.mxu0 0.0
      %251 = vmatpush1.msra.mxu0 0.0
      %252 = vmatprep.subr.mxu0 0.0
      %253 = vmatpush1.msra.mxu0 0.0
      %254 = vmatprep.subr.mxu0 0.0
      %255 = vmatpush1.msra.mxu0 0.0
      %256 = vmatprep.subr.mxu0 0.0
      %257 = vmatpush1.msra.mxu0 0.0
      %258 = vmatprep.subr.mxu0 0.0
      %259 = vmatpush1.msra.mxu0 0.0
      %260 = vmatprep.subr.mxu0 0.0
      %261 = vmatpush1.msra.mxu0 0.0
      %262 = vmatprep.subr.mxu0 0.0
      %263 = vmatpush1.msra.mxu0 0.0
      %264 = vmatprep.subr.mxu0 0.0
      %265 = vmatpush1.msra.mxu0 0.0
      %266 = vmatprep.subr.mxu0 0.0
      %267 = vmatpush1.msra.mxu0 0.0
      %268 = vmatprep.subr.mxu0 0.0
      %269 = vmatpush1.msra.mxu0 0.0
      %270 = vmatprep.subr.mxu0 0.0
      %271 = vmatpush1.msra.mxu0 0.0
      %272 = vmatprep.subr.mxu0 0.0
      %273 = vmatpush1.msra.mxu0 0.0
      %274 = vmatprep.subr.mxu0 0.0
      %275 = vmatpush1.msra.mxu0 0.0
      %276 = vmatprep.subr.mxu0 0.0
      %277 = vmatpush1.msra.mxu0 0.0
      %278 = vmatprep.subr.mxu0 0.0
      %279 = vmatpush1.msra.mxu0 0.0
      %280 = vmatprep.subr.mxu0 0.0
      %281 = vmatpush1.msra.mxu0 0.0
      %282 = vmatprep.subr.mxu0 0.0
      %283 = vmatpush1.msra.mxu0 0.0
      %284 = vmatprep.subr.mxu0 0.0
      %285 = vmatpush1.msra.mxu0 0.0
      %286 = vmatprep.mubr.f32.mxu0 0.0
      %287 = vmatmul.mubr.f32.gmra.mrb[0].mxu0 %v220
      %v288 = vpop.f32.mrb[0].mxu0
      %v289 = vadd.f32 0.0, %v288
      %v290 = vpop.f32.mrb[0].mxu0
      %291 = vdwg.mxu0
      %v292 = vmul.f32 %v289, 0.35355338
      %vm293 = vcmask 31744
      %v294 = vsel %vm293, %v292, -inf
      %v295 = vrot.slane %v294, 4
      %v296 = vmax.f32 %v294, %v295
      %v297 = vrot.slane %v296, 2
      %v298 = vmax.f32 %v296, %v297
      %v299 = vrot.slane %v298, 1
      %v300 = vmax.f32 %v298, %v299
      %v301 = vsub.f32 %v292, %v300
      %v302 = vmul.f32 %v301, 1.442695
      %v303 = vpow.pop %v302
      %v304 = vsel %vm293, %v303, 0.0
      %v305 = vrot.slane %v304, 4
      %v306 = vadd.f32 %v304, %v305
      %v307 = vrot.slane %v306, 2
      %v308 = vadd.f32 %v306, %v307
      %v309 = vrot.slane %v308, 1
      %v310 = vadd.f32 %v308, %v309
      %v311 = vrcp.pop %v310
      %v312 = vmul.f32 %v303, %v311
      %v313 = vld [vmem:[%s3] sm:$0xf]
      %v315 = vsel %vm293, %v312, 0
      %vm317 = vcmask 1043456
      %v319 = vsel %vm317, %v313, 0
      %321 = vmatprep.subr.mxu0 0.0
      %322 = vmatpush1.msra.mxu0 %v319
      %323 = vmatprep.subr.mxu0 0.0
      %324 = vmatpush1.msra.mxu0 0.0
      %325 = vmatprep.subr.mxu0 0.0
      %326 = vmatpush1.msra.mxu0 0.0
      %327 = vmatprep.subr.mxu0 0.0
      %328 = vmatpush1.msra.mxu0 0.0
      %329 = vmatprep.subr.mxu0 0.0
      %330 = vmatpush1.msra.mxu0 0.0
      %331 = vmatprep.subr.mxu0 0.0
      %332 = vmatpush1.msra.mxu0 0.0
      %333 = vmatprep.subr.mxu0 0.0
      %334 = vmatpush1.msra.mxu0 0.0
      %335 = vmatprep.subr.mxu0 0.0
      %336 = vmatpush1.msra.mxu0 0.0
      %337 = vmatprep.subr.mxu0 0.0
      %338 = vmatpush1.msra.mxu0 0.0
      %339 = vmatprep.subr.mxu0 0.0
      %340 = vmatpush1.msra.mxu0 0.0
      %341 = vmatprep.subr.mxu0 0.0
      %342 = vmatpush1.msra.mxu0 0.0
      %343 = vmatprep.subr.mxu0 0.0
      %344 = vmatpush1.msra.mxu0 0.0
      %345 = vmatprep.subr.mxu0 0.0
      %346 = vmatpush1.msra.mxu0 0.0
      %347 = vmatprep.subr.mxu0 0.0
      %348 = vmatpush1.msra.mxu0 0.0
      %349 = vmatprep.subr.mxu0 0.0
      %350 = vmatpush1.msra.mxu0 0.0
      %351 = vmatprep.subr.mxu0 0.0
      %352 = vmatpush1.msra.mxu0 0.0
      %353 = vmatprep.subr.mxu0 0.0
      %354 = vmatpush1.msra.mxu0 0.0
      %355 = vmatprep.subr.mxu0 0.0
      %356 = vmatpush1.msra.mxu0 0.0
      %357 = vmatprep.subr.mxu0 0.0
      %358 = vmatpush1.msra.mxu0 0.0
      %359 = vmatprep.subr.mxu0 0.0
      %360 = vmatpush1.msra.mxu0 0.0
      %361 = vmatprep.subr.mxu0 0.0
      %362 = vmatpush1.msra.mxu0 0.0
      %363 = vmatprep.subr.mxu0 0.0
      %364 = vmatpush1.msra.mxu0 0.0
      %365 = vmatprep.subr.mxu0 0.0
      %366 = vmatpush1.msra.mxu0 0.0
      %367 = vmatprep.subr.mxu0 0.0
      %368 = vmatpush1.msra.mxu0 0.0
      %369 = vmatprep.subr.mxu0 0.0
      %370 = vmatpush1.msra.mxu0 0.0
      %371 = vmatprep.subr.mxu0 0.0
      %372 = vmatpush1.msra.mxu0 0.0
      %373 = vmatprep.subr.mxu0 0.0
      %374 = vmatpush1.msra.mxu0 0.0
      %375 = vmatprep.subr.mxu0 0.0
      %376 = vmatpush1.msra.mxu0 0.0
      %377 = vmatprep.subr.mxu0 0.0
      %378 = vmatpush1.msra.mxu0 0.0
      %379 = vmatprep.subr.mxu0 0.0
      %380 = vmatpush1.msra.mxu0 0.0
      %381 = vmatprep.subr.mxu0 0.0
      %382 = vmatpush1.msra.mxu0 0.0
      %383 = vmatprep.subr.mxu0 0.0
      %384 = vmatpush1.msra.mxu0 0.0
      %385 = vmatprep.mubr.f32.mxu0 0.0
      %386 = vmatmul.mubr.f32.gmra.mrb[0].mxu0 %v315
      %v387 = vpop.f32.mrb[0].mxu0
      %v388 = vadd.f32 0.0, %v387
      %v389 = vpop.f32.mrb[0].mxu0
      %390 = vdwg.mxu0
      %392 = vrot.lane.b32.xlu0 %v206, 96
      %v393 = vpop.permute.xlu0 %392
      %v395 = vmul.f32 %v388, %v393
      %v396 = vsel %vm218, %v395, 0.0
      %v397 = vrot.slane %v396, 4
      %v398 = vadd.f32 %v396, %v397
      %v399 = vrot.slane %v398, 2
      %v400 = vadd.f32 %v398, %v399
      %v401 = vrot.slane %v400, 1
      %v402 = vadd.f32 %v400, %v401
      %vm403 = vcmask 253952
      %404 = vst.msk [vmem:[%s204] sm:$0x1] %vm403, %v402
      %p405 = scmp.lt.s32.totalorder %s15, 1
      %s406 = scalar_select %p405, %s15, 1
      %s407 = scalar_lea.vmem %s4, %s406
      // Predicated region
      $region37: #{cross_mamba_both_forward.21} parent=35 // pred_check
        %p408 = pneg %p127
      $region38: #{cross_mamba_both_forward.21} parent=35 // pred_check_branch
        %410 = sbr.rel (%p408) target = $region40
      $region39: #{cross_mamba_both_forward.21} parent=35 // pred_region
        _
      $region40: #{cross_mamba_both_forward.21} parent=35 // pred_fallthru
        _
    $region36: #{cross_mamba_both_forward.21} parent=5 // pred_fallthru
      _
    %p411 = scmp.le.s32.totalorder 2, %s10
    // Predicated region
    $region41: #{cross_mamba_both_forward.21} parent=5 // pred_check
      %p412 = pneg %p411
    $region42: #{cross_mamba_both_forward.21} parent=5 // pred_check_branch
      %414 = sbr.rel (%p412) target = $region44
    $region43: #{cross_mamba_both_forward.21} parent=5 // pred_region
      %s415 = ssub.s32 %s10, 2
      // Predicated region
      $region45: #{cross_mamba_both_forward.21} parent=43 // pred_check
        %p416 = pneg %p133
      $region46: #{cross_mamba_both_forward.21} parent=43 // pred_check_branch
        %418 = sbr.rel (%p416) target = $region48
      $region47: #{cross_mamba_both_forward.21} parent=43 // pred_region
        %p419 = scmp.lt.s32.totalorder %s16, 1
        %s420 = scalar_select %p419, %s16, 1
        %s421 = scalar_lea.vmem %s4, %s420
      $region48: #{cross_mamba_both_forward.21} parent=43 // pred_fallthru
        _
    $region44: #{cross_mamba_both_forward.21} parent=5 // pred_fallthru
      _
  $region6: #{cross_mamba_both_forward.21} parent=0 // loop_footer
    %s14 = sadd.s32 1, %s10
  $region7: #{cross_mamba_both_forward.21} parent=0 // loop_footer_branch
    %9 = sbr.rel target = $region3
  $region8: #{cross_mamba_both_forward.21} parent=0 // loop_exit
    _

// kernel: cross_mamba_both_forward.23
$region0: #{cross_mamba_both_forward.23}
  #allocation0 [shape = 'u32[]', space=smem, size = 0x4, offset = 0x4, fixed_abs, tag = 'smem constant byte address 0x4 - core index']
  #allocation1 [shape = 'u32[144,128]{1,0:T(1,128)}', space=vmem, size = 0x12000, scoped, tag = 'internal scratch']
  %s0 = inlined_call_operand.vmem [shape: f32[2,32], index: 0, kind: input, shape index: {}]
  %s1 = inlined_call_operand.vmem [shape: f32[1,32], index: 1, kind: input, shape index: {}]
  %s2 = inlined_call_operand.vmem [shape: f32[1,32], index: 2, kind: input, shape index: {}]
  %s3 = inlined_call_operand.vmem [shape: bf16[32,128], index: 3, kind: input, shape index: {}]
  %s4 = inlined_call_operand.vmem [shape: f32[1,128], index: 4, kind: input, shape index: {}]
  %s5 = inlined_call_operand.vmem [shape: f32[2,128], index: 5, kind: output, shape index: {}]
  %s6 = sld [smem:[#allocation0]]
  $region30: #{cross_mamba_both_forward.23} parent=0
    _
  %s8 = ssub.s32 1, %s6
  %s9 = scalar_select 0, %s8, %s6
  // Predicated region
  $region2: #{cross_mamba_both_forward.23} parent=0 // pred_check
    _
  $region3: #{cross_mamba_both_forward.23} parent=0 // pred_check_branch
    %11 = sbr.rel (0) target = $region5
  $region4: #{cross_mamba_both_forward.23} parent=0 // pred_region
    _
  $region5: #{cross_mamba_both_forward.23} parent=0 // pred_fallthru
    _
  // Predicated region
  $region6: #{cross_mamba_both_forward.23} parent=0 // pred_check
    _
  $region7: #{cross_mamba_both_forward.23} parent=0 // pred_check_branch
    %13 = sbr.rel (0) target = $region9
  $region8: #{cross_mamba_both_forward.23} parent=0 // pred_region
    _
  $region9: #{cross_mamba_both_forward.23} parent=0 // pred_fallthru
    _
  // Predicated region
  $region10: #{cross_mamba_both_forward.23} parent=0 // pred_check
    _
  $region11: #{cross_mamba_both_forward.23} parent=0 // pred_check_branch
    %15 = sbr.rel (0) target = $region13
  $region12: #{cross_mamba_both_forward.23} parent=0 // pred_region
    _
  $region13: #{cross_mamba_both_forward.23} parent=0 // pred_fallthru
    _
  // Predicated region
  $region14: #{cross_mamba_both_forward.23} parent=0 // pred_check
    _
  $region15: #{cross_mamba_both_forward.23} parent=0 // pred_check_branch
    %17 = sbr.rel (0) target = $region17
  $region16: #{cross_mamba_both_forward.23} parent=0 // pred_region
    _
  $region17: #{cross_mamba_both_forward.23} parent=0 // pred_fallthru
    _
  // Predicated region
  $region18: #{cross_mamba_both_forward.23} parent=0 // pred_check
    _
  $region19: #{cross_mamba_both_forward.23} parent=0 // pred_check_branch
    %19 = sbr.rel (0) target = $region21
  $region20: #{cross_mamba_both_forward.23} parent=0 // pred_region
    _
  $region21: #{cross_mamba_both_forward.23} parent=0 // pred_fallthru
    _
  %v21 = vld [vmem:[%s0] sm:$0x3]
  %vm22 = vcmask 254976
  %v23 = vsel %vm22, %v21, 0.0
  %24 = vadd.xlane.f32.xlu0 %v23
  %v25 = vpop.xlane.xlu0 %24
  %v26 = vrcp.pop 32.0
  %v27 = vmul.f32 %v25, %v26
  %v28 = vsub.f32 %v21, %v27
  %v29 = vmul.f32 %v28, %v28
  %v30 = vsel %vm22, %v29, 0.0
  %31 = vadd.xlane.f32.xlu0 %v30
  %v32 = vpop.xlane.xlu0 %31
  %v33 = vmul.f32 %v32, %v26
  %v34 = vadd.f32 %v33, 1e-05
  %v35 = vrsqrt.pop %v34
  %v36 = vmul.f32 %v28, %v35
  %v37 = vld [vmem:[%s1] sm:$0x1]
  %v39 = vlaneseq
  %v40 = vshrl.u32 %v39, 7
  %v41 = vsub.s32 0, %v40
  %v42 = vrot.slane %v37, %v41
  %v44 = vmul.f32 %v36, %v42
  %v45 = vld [vmem:[%s2] sm:$0x1]
  %v47 = vlaneseq
  %v48 = vshrl.u32 %v47, 7
  %v49 = vsub.s32 0, %v48
  %v50 = vrot.slane %v45, %v49
  %v52 = vadd.f32 %v44, %v50
  %v53 = vpack.c.bf16 %v52, %v52
  %v54 = vld [vmem:[%s3] sm:$0xf]
  %v55 = vld [vmem:[%s3 + $0x4] sm:$0xf]
  %v56 = vld [vmem:[%s3 + $0x8] sm:$0xf]
  %v57 = vld [vmem:[%s3 + $0xc] sm:$0xf]
  %v58 = vld [vmem:[%s4] sm:$0x1]
  %v60 = vlaneseq
  %v61 = vshrl.u32 %v60, 7
  %v62 = vsub.s32 0, %v61
  %v63 = vrot.slane %v58, %v62
  %v69 = vunpack.c.l.b16 %v54
  %v70 = vunpack.c.l.b16 %v55
  %v71 = vunpack.c.l.b16 %v56
  %v72 = vunpack.c.l.b16 %v57
  %v73 = vpack.c.b16 %v70, %v69
  %v74 = vpack.c.b16 %v72, %v71
  %vm77 = vcmask 261120
  %v79 = vsel %vm77, %v53, 0
  %81 = vmatprep.subr.bf16.mxu0 0
  %82 = vmatpush1.bf16.msra.mxu0 %v73
  %83 = vmatprep.subr.bf16.mxu0 0
  %84 = vmatpush1.bf16.msra.mxu0 %v74
  %85 = vmatprep.subr.bf16.mxu0 0
  %86 = vmatpush1.bf16.msra.mxu0 0
  %87 = vmatprep.subr.bf16.mxu0 0
  %88 = vmatpush1.bf16.msra.mxu0 0
  %89 = vmatprep.subr.bf16.mxu0 0
  %90 = vmatpush1.bf16.msra.mxu0 0
  %91 = vmatprep.subr.bf16.mxu0 0
  %92 = vmatpush1.bf16.msra.mxu0 0
  %93 = vmatprep.subr.bf16.mxu0 0
  %94 = vmatpush1.bf16.msra.mxu0 0
  %95 = vmatprep.subr.bf16.mxu0 0
  %96 = vmatpush1.bf16.msra.mxu0 0
  %97 = vmatprep.subr.bf16.mxu0 0
  %98 = vmatpush1.bf16.msra.mxu0 0
  %99 = vmatprep.subr.bf16.mxu0 0
  %100 = vmatpush1.bf16.msra.mxu0 0
  %101 = vmatprep.subr.bf16.mxu0 0
  %102 = vmatpush1.bf16.msra.mxu0 0
  %103 = vmatprep.subr.bf16.mxu0 0
  %104 = vmatpush1.bf16.msra.mxu0 0
  %105 = vmatprep.subr.bf16.mxu0 0
  %106 = vmatpush1.bf16.msra.mxu0 0
  %107 = vmatprep.subr.bf16.mxu0 0
  %108 = vmatpush1.bf16.msra.mxu0 0
  %109 = vmatprep.subr.bf16.mxu0 0
  %110 = vmatpush1.bf16.msra.mxu0 0
  %111 = vmatprep.subr.bf16.mxu0 0
  %112 = vmatpush1.bf16.msra.mxu0 0
  %113 = vmatprep.mubr.bf16.mxu0 0
  %114 = vmatmul.mubr.bf16.gmra.mrb[0].mxu0 %v79
  %v115 = vpop.f32.mrb[0].mxu0
  %v116 = vadd.f32 %v63, %v115
  %v117 = vpop.f32.mrb[0].mxu0
  %v118 = vpop.f32.mrb[0].mxu0
  %v119 = vpop.f32.mrb[0].mxu0
  %120 = vdwg.mxu0
  %121 = vst [vmem:[%s5] sm:$0x3] %v116
  // Predicated region
  $region22: #{cross_mamba_both_forward.23} parent=0 // pred_check
    _
  $region23: #{cross_mamba_both_forward.23} parent=0 // pred_check_branch
    %123 = sbr.rel (0) target = $region25
  $region24: #{cross_mamba_both_forward.23} parent=0 // pred_region
    _
  $region25: #{cross_mamba_both_forward.23} parent=0 // pred_fallthru
    _
  // Predicated region
  $region26: #{cross_mamba_both_forward.23} parent=0 // pred_check
    _
  $region27: #{cross_mamba_both_forward.23} parent=0 // pred_check_branch
    %125 = sbr.rel (0) target = $region29
  $region28: #{cross_mamba_both_forward.23} parent=0 // pred_region
    _
  $region29: #{cross_mamba_both_forward.23} parent=0 // pred_fallthru
    _

// kernel: cross_mamba_both_forward.20
$region0: #{cross_mamba_both_forward.20}
  #allocation0 [shape = 'u32[]', space=smem, size = 0x4, offset = 0x4, fixed_abs, tag = 'smem constant byte address 0x4 - core index']
  #allocation1 [shape = 'u32[144,128]{1,0:T(1,128)}', space=vmem, size = 0x12000, scoped, tag = 'internal scratch']
  %s0 = inlined_call_operand.vmem [shape: bf16[16,256], index: 0, kind: input, shape index: {}]
  %s1 = inlined_call_operand.vmem [shape: bf16[256,64], index: 1, kind: input, shape index: {}]
  %s2 = inlined_call_operand.vmem [shape: f32[1,64], index: 2, kind: input, shape index: {}]
  %s3 = inlined_call_operand.vmem [shape: f32[16,64], index: 3, kind: output, shape index: {}]
  %s4 = sld [smem:[#allocation0]]
  $region22: #{cross_mamba_both_forward.20} parent=0
    _
  %s6 = ssub.s32 1, %s4
  %s7 = scalar_select 0, %s6, %s4
  // Predicated region
  $region2: #{cross_mamba_both_forward.20} parent=0 // pred_check
    _
  $region3: #{cross_mamba_both_forward.20} parent=0 // pred_check_branch
    %9 = sbr.rel (0) target = $region5
  $region4: #{cross_mamba_both_forward.20} parent=0 // pred_region
    _
  $region5: #{cross_mamba_both_forward.20} parent=0 // pred_fallthru
    _
  // Predicated region
  $region6: #{cross_mamba_both_forward.20} parent=0 // pred_check
    _
  $region7: #{cross_mamba_both_forward.20} parent=0 // pred_check_branch
    %11 = sbr.rel (0) target = $region9
  $region8: #{cross_mamba_both_forward.20} parent=0 // pred_region
    _
  $region9: #{cross_mamba_both_forward.20} parent=0 // pred_fallthru
    _
  // Predicated region
  $region10: #{cross_mamba_both_forward.20} parent=0 // pred_check
    _
  $region11: #{cross_mamba_both_forward.20} parent=0 // pred_check_branch
    %13 = sbr.rel (0) target = $region13
  $region12: #{cross_mamba_both_forward.20} parent=0 // pred_region
    _
  $region13: #{cross_mamba_both_forward.20} parent=0 // pred_fallthru
    _
  %v15 = vld [vmem:[%s0] sm:$0xff]
  %v16 = vld [vmem:[%s0 + $0x8] sm:$0xff]
  %v17 = vld [vmem:[%s1] sm:$0xf]
  %v18 = vld [vmem:[%s1 + $0x4] sm:$0xf]
  %v19 = vld [vmem:[%s1 + $0x8] sm:$0xf]
  %v20 = vld [vmem:[%s1 + $0xc] sm:$0xf]
  %v21 = vld [vmem:[%s1 + $0x10] sm:$0xf]
  %v22 = vld [vmem:[%s1 + $0x14] sm:$0xf]
  %v23 = vld [vmem:[%s1 + $0x18] sm:$0xf]
  %v24 = vld [vmem:[%s1 + $0x1c] sm:$0xf]
  %v25 = vld [vmem:[%s1 + $0x20] sm:$0xf]
  %v26 = vld [vmem:[%s1 + $0x24] sm:$0xf]
  %v27 = vld [vmem:[%s1 + $0x28] sm:$0xf]
  %v28 = vld [vmem:[%s1 + $0x2c] sm:$0xf]
  %v29 = vld [vmem:[%s1 + $0x30] sm:$0xf]
  %v30 = vld [vmem:[%s1 + $0x34] sm:$0xf]
  %v31 = vld [vmem:[%s1 + $0x38] sm:$0xf]
  %v32 = vld [vmem:[%s1 + $0x3c] sm:$0xf]
  %v33 = vld [vmem:[%s1 + $0x40] sm:$0xf]
  %v34 = vld [vmem:[%s1 + $0x44] sm:$0xf]
  %v35 = vld [vmem:[%s1 + $0x48] sm:$0xf]
  %v36 = vld [vmem:[%s1 + $0x4c] sm:$0xf]
  %v37 = vld [vmem:[%s1 + $0x50] sm:$0xf]
  %v38 = vld [vmem:[%s1 + $0x54] sm:$0xf]
  %v39 = vld [vmem:[%s1 + $0x58] sm:$0xf]
  %v40 = vld [vmem:[%s1 + $0x5c] sm:$0xf]
  %v41 = vld [vmem:[%s1 + $0x60] sm:$0xf]
  %v42 = vld [vmem:[%s1 + $0x64] sm:$0xf]
  %v43 = vld [vmem:[%s1 + $0x68] sm:$0xf]
  %v44 = vld [vmem:[%s1 + $0x6c] sm:$0xf]
  %v45 = vld [vmem:[%s1 + $0x70] sm:$0xf]
  %v46 = vld [vmem:[%s1 + $0x74] sm:$0xf]
  %v47 = vld [vmem:[%s1 + $0x78] sm:$0xf]
  %v48 = vld [vmem:[%s1 + $0x7c] sm:$0xf]
  %v49 = vld [vmem:[%s2] sm:$0x1]
  %v51 = vlaneseq
  %v52 = vshrl.u32 %v51, 7
  %v53 = vsub.s32 0, %v52
  %v54 = vrot.slane %v49, %v53
  %v58 = vunpack.c.l.b16 %v15
  %v59 = vunpack.c.h.b16 %v15
  %v60 = vunpack.c.l.b16 %v16
  %v61 = vunpack.c.h.b16 %v16
  %v62 = vpack.c.b16 %v60, %v58
  %v63 = vpack.c.b16 %v61, %v59
  %v98 = vunpack.c.l.b16 %v17
  %v99 = vunpack.c.l.b16 %v18
  %v100 = vunpack.c.l.b16 %v19
  %v101 = vunpack.c.l.b16 %v20
  %v102 = vunpack.c.l.b16 %v21
  %v103 = vunpack.c.l.b16 %v22
  %v104 = vunpack.c.l.b16 %v23
  %v105 = vunpack.c.l.b16 %v24
  %v106 = vunpack.c.l.b16 %v25
  %v107 = vunpack.c.l.b16 %v26
  %v108 = vunpack.c.l.b16 %v27
  %v109 = vunpack.c.l.b16 %v28
  %v110 = vunpack.c.l.b16 %v29
  %v111 = vunpack.c.l.b16 %v30
  %v112 = vunpack.c.l.b16 %v31
  %v113 = vunpack.c.l.b16 %v32
  %v114 = vunpack.c.l.b16 %v33
  %v115 = vunpack.c.l.b16 %v34
  %v116 = vunpack.c.l.b16 %v35
  %v117 = vunpack.c.l.b16 %v36
  %v118 = vunpack.c.l.b16 %v37
  %v119 = vunpack.c.l.b16 %v38
  %v120 = vunpack.c.l.b16 %v39
  %v121 = vunpack.c.l.b16 %v40
  %v122 = vunpack.c.l.b16 %v41
  %v123 = vunpack.c.l.b16 %v42
  %v124 = vunpack.c.l.b16 %v43
  %v125 = vunpack.c.l.b16 %v44
  %v126 = vunpack.c.l.b16 %v45
  %v127 = vunpack.c.l.b16 %v46
  %v128 = vunpack.c.l.b16 %v47
  %v129 = vunpack.c.l.b16 %v48
  %v130 = vpack.c.b16 %v99, %v98
  %v131 = vpack.c.b16 %v101, %v100
  %v132 = vpack.c.b16 %v103, %v102
  %v133 = vpack.c.b16 %v105, %v104
  %v134 = vpack.c.b16 %v107, %v106
  %v135 = vpack.c.b16 %v109, %v108
  %v136 = vpack.c.b16 %v111, %v110
  %v137 = vpack.c.b16 %v113, %v112
  %v138 = vpack.c.b16 %v115, %v114
  %v139 = vpack.c.b16 %v117, %v116
  %v140 = vpack.c.b16 %v119, %v118
  %v141 = vpack.c.b16 %v121, %v120
  %v142 = vpack.c.b16 %v123, %v122
  %v143 = vpack.c.b16 %v125, %v124
  %v144 = vpack.c.b16 %v127, %v126
  %v145 = vpack.c.b16 %v129, %v128
  %162 = vmatprep.subr.bf16.mxu0 0
  %163 = vmatpush1.bf16.msra.mxu0 %v130
  %164 = vmatprep.subr.bf16.mxu0 0
  %165 = vmatpush1.bf16.msra.mxu0 %v131
  %166 = vmatprep.subr.bf16.mxu0 0
  %167 = vmatpush1.bf16.msra.mxu0 %v132
  %168 = vmatprep.subr.bf16.mxu0 0
  %169 = vmatpush1.bf16.msra.mxu0 %v133
  %170 = vmatprep.subr.bf16.mxu0 0
  %171 = vmatpush1.bf16.msra.mxu0 %v134
  %172 = vmatprep.subr.bf16.mxu0 0
  %173 = vmatpush1.bf16.msra.mxu0 %v135
  %174 = vmatprep.subr.bf16.mxu0 0
  %175 = vmatpush1.bf16.msra.mxu0 %v136
  %176 = vmatprep.subr.bf16.mxu0 0
  %177 = vmatpush1.bf16.msra.mxu0 %v137
  %178 = vmatprep.subr.bf16.mxu0 0
  %179 = vmatpush1.bf16.msra.mxu0 %v138
  %180 = vmatprep.subr.bf16.mxu0 0
  %181 = vmatpush1.bf16.msra.mxu0 %v139
  %182 = vmatprep.subr.bf16.mxu0 0
  %183 = vmatpush1.bf16.msra.mxu0 %v140
  %184 = vmatprep.subr.bf16.mxu0 0
  %185 = vmatpush1.bf16.msra.mxu0 %v141
  %186 = vmatprep.subr.bf16.mxu0 0
  %187 = vmatpush1.bf16.msra.mxu0 %v142
  %188 = vmatprep.subr.bf16.mxu0 0
  %189 = vmatpush1.bf16.msra.mxu0 %v143
  %190 = vmatprep.subr.bf16.mxu0 0
  %191 = vmatpush1.bf16.msra.mxu0 %v144
  %192 = vmatprep.subr.bf16.mxu0 0
  %193 = vmatpush1.bf16.msra.mxu0 %v145
  %194 = vmatprep.mubr.bf16.mxu0 %v63
  %195 = vmatmul.mubr.bf16.gmra.mrb[0].mxu0 %v62
  %v196 = vpop.f32.mrb[0].mxu0
  %v197 = vadd.f32 %v54, %v196
  %v198 = vpop.f32.mrb[0].mxu0
  %v199 = vpop.f32.mrb[0].mxu0
  %v200 = vadd.f32 %v54, %v199
  %v201 = vpop.f32.mrb[0].mxu0
  %202 = vdwg.mxu0
  %vm203 = vcmask 523264
  %204 = vst.msk [vmem:[%s3] sm:$0xff] %vm203, %v197
  %205 = vst.msk [vmem:[%s3 + $0x8] sm:$0xff] %vm203, %v200
  // Predicated region
  $region14: #{cross_mamba_both_forward.20} parent=0 // pred_check
    _
  $region15: #{cross_mamba_both_forward.20} parent=0 // pred_check_branch
    %207 = sbr.rel (0) target = $region17
  $region16: #{cross_mamba_both_forward.20} parent=0 // pred_region
    _
  $region17: #{cross_mamba_both_forward.20} parent=0 // pred_fallthru
    _
  // Predicated region
  $region18: #{cross_mamba_both_forward.20} parent=0 // pred_check
    _
  $region19: #{cross_mamba_both_forward.20} parent=0 // pred_check_branch
    %209 = sbr.rel (0) target = $region21
  $region20: #{cross_mamba_both_forward.20} parent=0 // pred_region
    _
  $region21: #{cross_mamba_both_forward.20} parent=0 // pred_fallthru
    _

// kernel: cross_mamba_both_forward.24
$region0: #{cross_mamba_both_forward.24}
  #allocation0 [shape = 'u32[]', space=smem, size = 0x4, offset = 0x4, fixed_abs, tag = 'smem constant byte address 0x4 - core index']
  #allocation1 [shape = 'u32[144,128]{1,0:T(1,128)}', space=vmem, size = 0x12000, scoped, tag = 'internal scratch']
  %s0 = inlined_call_operand.vmem [shape: bf16[2,64], index: 0, kind: input, shape index: {}]
  %s1 = inlined_call_operand.vmem [shape: bf16[64,32], index: 1, kind: input, shape index: {}]
  %s2 = inlined_call_operand.vmem [shape: f32[1,32], index: 2, kind: input, shape index: {}]
  %s3 = inlined_call_operand.vmem [shape: f32[2,32], index: 3, kind: output, shape index: {}]
  %s4 = sld [smem:[#allocation0]]
  $region22: #{cross_mamba_both_forward.24} parent=0
    _
  %s6 = ssub.s32 1, %s4
  %s7 = scalar_select 0, %s6, %s4
  // Predicated region
  $region2: #{cross_mamba_both_forward.24} parent=0 // pred_check
    _
  $region3: #{cross_mamba_both_forward.24} parent=0 // pred_check_branch
    %9 = sbr.rel (0) target = $region5
  $region4: #{cross_mamba_both_forward.24} parent=0 // pred_region
    _
  $region5: #{cross_mamba_both_forward.24} parent=0 // pred_fallthru
    _
  // Predicated region
  $region6: #{cross_mamba_both_forward.24} parent=0 // pred_check
    _
  $region7: #{cross_mamba_both_forward.24} parent=0 // pred_check_branch
    %11 = sbr.rel (0) target = $region9
  $region8: #{cross_mamba_both_forward.24} parent=0 // pred_region
    _
  $region9: #{cross_mamba_both_forward.24} parent=0 // pred_fallthru
    _
  // Predicated region
  $region10: #{cross_mamba_both_forward.24} parent=0 // pred_check
    _
  $region11: #{cross_mamba_both_forward.24} parent=0 // pred_check_branch
    %13 = sbr.rel (0) target = $region13
  $region12: #{cross_mamba_both_forward.24} parent=0 // pred_region
    _
  $region13: #{cross_mamba_both_forward.24} parent=0 // pred_fallthru
    _
  %v15 = vld [vmem:[%s0] sm:$0x1]
  %v16 = vld [vmem:[%s1] sm:$0xf]
  %v17 = vld [vmem:[%s1 + $0x4] sm:$0xf]
  %v18 = vld [vmem:[%s1 + $0x8] sm:$0xf]
  %v19 = vld [vmem:[%s1 + $0xc] sm:$0xf]
  %v20 = vld [vmem:[%s1 + $0x10] sm:$0xf]
  %v21 = vld [vmem:[%s1 + $0x14] sm:$0xf]
  %v22 = vld [vmem:[%s1 + $0x18] sm:$0xf]
  %v23 = vld [vmem:[%s1 + $0x1c] sm:$0xf]
  %v24 = vld [vmem:[%s2] sm:$0x1]
  %v26 = vlaneseq
  %v27 = vshrl.u32 %v26, 7
  %v28 = vsub.s32 0, %v27
  %v29 = vrot.slane %v24, %v28
  %v39 = vunpack.c.l.b16 %v16
  %v40 = vunpack.c.l.b16 %v17
  %v41 = vunpack.c.l.b16 %v18
  %v42 = vunpack.c.l.b16 %v19
  %v43 = vunpack.c.l.b16 %v20
  %v44 = vunpack.c.l.b16 %v21
  %v45 = vunpack.c.l.b16 %v22
  %v46 = vunpack.c.l.b16 %v23
  %v47 = vpack.c.b16 %v40, %v39
  %v48 = vpack.c.b16 %v42, %v41
  %v49 = vpack.c.b16 %v44, %v43
  %v50 = vpack.c.b16 %v46, %v45
  %vm55 = vcmask 523264
  %v57 = vsel %vm55, %v15, 0
  %59 = vmatprep.subr.bf16.mxu0 0
  %60 = vmatpush1.bf16.msra.mxu0 %v47
  %61 = vmatprep.subr.bf16.mxu0 0
  %62 = vmatpush1.bf16.msra.mxu0 %v48
  %63 = vmatprep.subr.bf16.mxu0 0
  %64 = vmatpush1.bf16.msra.mxu0 %v49
  %65 = vmatprep.subr.bf16.mxu0 0
  %66 = vmatpush1.bf16.msra.mxu0 %v50
  %67 = vmatprep.subr.bf16.mxu0 0
  %68 = vmatpush1.bf16.msra.mxu0 0
  %69 = vmatprep.subr.bf16.mxu0 0
  %70 = vmatpush1.bf16.msra.mxu0 0
  %71 = vmatprep.subr.bf16.mxu0 0
  %72 = vmatpush1.bf16.msra.mxu0 0
  %73 = vmatprep.subr.bf16.mxu0 0
  %74 = vmatpush1.bf16.msra.mxu0 0
  %75 = vmatprep.subr.bf16.mxu0 0
  %76 = vmatpush1.bf16.msra.mxu0 0
  %77 = vmatprep.subr.bf16.mxu0 0
  %78 = vmatpush1.bf16.msra.mxu0 0
  %79 = vmatprep.subr.bf16.mxu0 0
  %80 = vmatpush1.bf16.msra.mxu0 0
  %81 = vmatprep.subr.bf16.mxu0 0
  %82 = vmatpush1.bf16.msra.mxu0 0
  %83 = vmatprep.subr.bf16.mxu0 0
  %84 = vmatpush1.bf16.msra.mxu0 0
  %85 = vmatprep.subr.bf16.mxu0 0
  %86 = vmatpush1.bf16.msra.mxu0 0
  %87 = vmatprep.subr.bf16.mxu0 0
  %88 = vmatpush1.bf16.msra.mxu0 0
  %89 = vmatprep.subr.bf16.mxu0 0
  %90 = vmatpush1.bf16.msra.mxu0 0
  %91 = vmatprep.mubr.bf16.mxu0 0
  %92 = vmatmul.mubr.bf16.gmra.mrb[0].mxu0 %v57
  %v93 = vpop.f32.mrb[0].mxu0
  %v94 = vadd.f32 %v29, %v93
  %v95 = vpop.f32.mrb[0].mxu0
  %v96 = vpop.f32.mrb[0].mxu0
  %v97 = vpop.f32.mrb[0].mxu0
  %98 = vdwg.mxu0
  %vm99 = vcmask 254976
  %100 = vst.msk [vmem:[%s3] sm:$0x3] %vm99, %v94
  // Predicated region
  $region14: #{cross_mamba_both_forward.24} parent=0 // pred_check
    _
  $region15: #{cross_mamba_both_forward.24} parent=0 // pred_check_branch
    %102 = sbr.rel (0) target = $region17
  $region16: #{cross_mamba_both_forward.24} parent=0 // pred_region
    _
  $region17: #{cross_mamba_both_forward.24} parent=0 // pred_fallthru
    _
  // Predicated region
  $region18: #{cross_mamba_both_forward.24} parent=0 // pred_check
    _
  $region19: #{cross_mamba_both_forward.24} parent=0 // pred_check_branch
    %104 = sbr.rel (0) target = $region21
  $region20: #{cross_mamba_both_forward.24} parent=0 // pred_region
    _
  $region21: #{cross_mamba_both_forward.24} parent=0 // pred_fallthru
    _

// kernel: cross_mamba_both_forward.25
$region0: #{cross_mamba_both_forward.25}
  #allocation0 [shape = 'u32[]', space=smem, size = 0x4, offset = 0x4, fixed_abs, tag = 'smem constant byte address 0x4 - core index']
  #allocation1 [shape = 'u32[144,128]{1,0:T(1,128)}', space=vmem, size = 0x12000, scoped, tag = 'internal scratch']
  #allocation2 [shape = 'f32[1,1]{1,0:T(1,128)S(1)}', space=vmem, size = 0x200, scoped, tag = 'scoped memory for cross_mamba_both_forward.25']
  %s0 = inlined_call_operand.vmem [shape: f32[2,32], index: 0, kind: input, shape index: {}]
  %s1 = inlined_call_operand.vmem [shape: f32[1,32], index: 1, kind: input, shape index: {}]
  %s2 = inlined_call_operand.vmem [shape: f32[1,32], index: 2, kind: input, shape index: {}]
  %s3 = inlined_call_operand.vmem [shape: bf16[32,1], index: 3, kind: input, shape index: {}]
  %s4 = inlined_call_operand.<no memory space> [shape: f32[1,1], index: 4, kind: input, shape index: {}]
  %s5 = inlined_call_operand.vmem [shape: f32[2,1], index: 5, kind: output, shape index: {}]
  %s6 = sld [smem:[#allocation0]]
  $region30: #{cross_mamba_both_forward.25} parent=0
    _
  %s8 = ssub.s32 1, %s6
  %s9 = scalar_select 0, %s8, %s6
  %v10 = vstv %s4
  %11 = vst [vmem:[#allocation2] sm:$0x1] %v10
  // Predicated region
  $region2: #{cross_mamba_both_forward.25} parent=0 // pred_check
    _
  $region3: #{cross_mamba_both_forward.25} parent=0 // pred_check_branch
    %13 = sbr.rel (0) target = $region5
  $region4: #{cross_mamba_both_forward.25} parent=0 // pred_region
    _
  $region5: #{cross_mamba_both_forward.25} parent=0 // pred_fallthru
    _
  // Predicated region
  $region6: #{cross_mamba_both_forward.25} parent=0 // pred_check
    _
  $region7: #{cross_mamba_both_forward.25} parent=0 // pred_check_branch
    %15 = sbr.rel (0) target = $region9
  $region8: #{cross_mamba_both_forward.25} parent=0 // pred_region
    _
  $region9: #{cross_mamba_both_forward.25} parent=0 // pred_fallthru
    _
  // Predicated region
  $region10: #{cross_mamba_both_forward.25} parent=0 // pred_check
    _
  $region11: #{cross_mamba_both_forward.25} parent=0 // pred_check_branch
    %17 = sbr.rel (0) target = $region13
  $region12: #{cross_mamba_both_forward.25} parent=0 // pred_region
    _
  $region13: #{cross_mamba_both_forward.25} parent=0 // pred_fallthru
    _
  // Predicated region
  $region14: #{cross_mamba_both_forward.25} parent=0 // pred_check
    _
  $region15: #{cross_mamba_both_forward.25} parent=0 // pred_check_branch
    %19 = sbr.rel (0) target = $region17
  $region16: #{cross_mamba_both_forward.25} parent=0 // pred_region
    _
  $region17: #{cross_mamba_both_forward.25} parent=0 // pred_fallthru
    _
  // Predicated region
  $region18: #{cross_mamba_both_forward.25} parent=0 // pred_check
    _
  $region19: #{cross_mamba_both_forward.25} parent=0 // pred_check_branch
    %21 = sbr.rel (0) target = $region21
  $region20: #{cross_mamba_both_forward.25} parent=0 // pred_region
    _
  $region21: #{cross_mamba_both_forward.25} parent=0 // pred_fallthru
    _
  %v23 = vld [vmem:[%s0] sm:$0x3]
  %vm24 = vcmask 254976
  %v25 = vsel %vm24, %v23, 0.0
  %26 = vadd.xlane.f32.xlu0 %v25
  %v27 = vpop.xlane.xlu0 %26
  %v28 = vrcp.pop 32.0
  %v29 = vmul.f32 %v27, %v28
  %v30 = vsub.f32 %v23, %v29
  %v31 = vmul.f32 %v30, %v30
  %v32 = vsel %vm24, %v31, 0.0
  %33 = vadd.xlane.f32.xlu0 %v32
  %v34 = vpop.xlane.xlu0 %33
  %v35 = vmul.f32 %v34, %v28
  %v36 = vadd.f32 %v35, 1e-05
  %v37 = vrsqrt.pop %v36
  %v38 = vmul.f32 %v30, %v37
  %v39 = vld [vmem:[%s1] sm:$0x1]
  %v41 = vlaneseq
  %v42 = vshrl.u32 %v41, 7
  %v43 = vsub.s32 0, %v42
  %v44 = vrot.slane %v39, %v43
  %v46 = vmul.f32 %v38, %v44
  %v47 = vld [vmem:[%s2] sm:$0x1]
  %v49 = vlaneseq
  %v50 = vshrl.u32 %v49, 7
  %v51 = vsub.s32 0, %v50
  %v52 = vrot.slane %v47, %v51
  %v54 = vadd.f32 %v46, %v52
  %v55 = vpack.c.bf16 %v54, %v54
  %v56 = vld [vmem:[%s3] sm:$0xf]
  %v57 = vld [vmem:[%s3 + $0x4] sm:$0xf]
  %v58 = vld [vmem:[%s3 + $0x8] sm:$0xf]
  %v59 = vld [vmem:[%s3 + $0xc] sm:$0xf]
  %v60 = vld [vmem:[#allocation2] sm:$0x1]
  %v62 = vlaneseq
  %v63 = vshrl.u32 %v62, 7
  %v64 = vsub.s32 0, %v63
  %v65 = vrot.slane %v60, %v64
  %v71 = vunpack.c.l.b16 %v56
  %v72 = vunpack.c.l.b16 %v57
  %v73 = vunpack.c.l.b16 %v58
  %v74 = vunpack.c.l.b16 %v59
  %v75 = vpack.c.b16 %v72, %v71
  %v76 = vpack.c.b16 %v74, %v73
  %vm79 = vcmask 261120
  %v81 = vsel %vm79, %v55, 0
  %83 = vmatprep.subr.bf16.mxu0 0
  %84 = vmatpush1.bf16.msra.mxu0 %v75
  %85 = vmatprep.subr.bf16.mxu0 0
  %86 = vmatpush1.bf16.msra.mxu0 %v76
  %87 = vmatprep.subr.bf16.mxu0 0
  %88 = vmatpush1.bf16.msra.mxu0 0
  %89 = vmatprep.subr.bf16.mxu0 0
  %90 = vmatpush1.bf16.msra.mxu0 0
  %91 = vmatprep.subr.bf16.mxu0 0
  %92 = vmatpush1.bf16.msra.mxu0 0
  %93 = vmatprep.subr.bf16.mxu0 0
  %94 = vmatpush1.bf16.msra.mxu0 0
  %95 = vmatprep.subr.bf16.mxu0 0
  %96 = vmatpush1.bf16.msra.mxu0 0
  %97 = vmatprep.subr.bf16.mxu0 0
  %98 = vmatpush1.bf16.msra.mxu0 0
  %99 = vmatprep.subr.bf16.mxu0 0
  %100 = vmatpush1.bf16.msra.mxu0 0
  %101 = vmatprep.subr.bf16.mxu0 0
  %102 = vmatpush1.bf16.msra.mxu0 0
  %103 = vmatprep.subr.bf16.mxu0 0
  %104 = vmatpush1.bf16.msra.mxu0 0
  %105 = vmatprep.subr.bf16.mxu0 0
  %106 = vmatpush1.bf16.msra.mxu0 0
  %107 = vmatprep.subr.bf16.mxu0 0
  %108 = vmatpush1.bf16.msra.mxu0 0
  %109 = vmatprep.subr.bf16.mxu0 0
  %110 = vmatpush1.bf16.msra.mxu0 0
  %111 = vmatprep.subr.bf16.mxu0 0
  %112 = vmatpush1.bf16.msra.mxu0 0
  %113 = vmatprep.subr.bf16.mxu0 0
  %114 = vmatpush1.bf16.msra.mxu0 0
  %115 = vmatprep.mubr.bf16.mxu0 0
  %116 = vmatmul.mubr.bf16.gmra.mrb[0].mxu0 %v81
  %v117 = vpop.f32.mrb[0].mxu0
  %v118 = vadd.f32 %v65, %v117
  %v119 = vpop.f32.mrb[0].mxu0
  %v120 = vpop.f32.mrb[0].mxu0
  %v121 = vpop.f32.mrb[0].mxu0
  %122 = vdwg.mxu0
  %vm123 = vcmask 1024
  %124 = vst.msk [vmem:[%s5] sm:$0x3] %vm123, %v118
  // Predicated region
  $region22: #{cross_mamba_both_forward.25} parent=0 // pred_check
    _
  $region23: #{cross_mamba_both_forward.25} parent=0 // pred_check_branch
    %126 = sbr.rel (0) target = $region25
  $region24: #{cross_mamba_both_forward.25} parent=0 // pred_region
    _
  $region25: #{cross_mamba_both_forward.25} parent=0 // pred_fallthru
    _
  // Predicated region
  $region26: #{cross_mamba_both_forward.25} parent=0 // pred_check
    _
  $region27: #{cross_mamba_both_forward.25} parent=0 // pred_check_branch
    %128 = sbr.rel (0) target = $region29
  $region28: #{cross_mamba_both_forward.25} parent=0 // pred_region
    _
  $region29: #{cross_mamba_both_forward.25} parent=0 // pred_fallthru
    _

</llo_original>
